<compile_context>
chip_gen: v7x
topology: tpu7x:2x2x1
jax: 0.10.0
libtpu: 0.0.40
codegen_flags: <defaults>
</compile_context>

<pallas_src>
import jax
import jax.numpy as jnp
import numpy as np
from jax.experimental import pallas as pl
from jax.experimental.pallas import tpu as pltpu

BN_EPS = 1e-5


# ----------------------------------------------------------------------------
# Host-side weight packing.
# Packed gate column order (8 blocks of H lanes):
#   [i_f, i_b, f_f, f_b, g_f, g_b, o_f, o_b]
# so that after activations i/f/g/o of BOTH directions are contiguous (B, 2H)
# slabs matching the lane-packed state  h_cat = [h_fwd | h_bwd].
# ----------------------------------------------------------------------------
def _place(w4, d, H):
    """Scatter the 4 gate blocks of a (rows, 4H) matrix (order i,f,g,o) into
    direction slot d (0=fwd, 1=bwd) of a (rows, 8H) zero matrix."""
    out = jnp.zeros((w4.shape[0], 8 * H), w4.dtype)
    for g in range(4):
        out = out.at[:, (2 * g + d) * H:(2 * g + d + 1) * H].set(
            w4[:, g * H:(g + 1) * H])
    return out


def pack_params(params, H):
    wi0f, wh0f, b0f = params["l0f"]
    wi0b, wh0b, b0b = params["l0b"]
    wi1f, wh1f, b1f = params["l1f"]
    wi1b, wh1b, b1b = params["l1b"]

    # layer 0: augmented input is [x(t) | x(T-1-t)] along features (2F lanes)
    wih0 = jnp.concatenate([_place(wi0f, 0, H), _place(wi0b, 1, H)], axis=0)
    whh0 = jnp.concatenate([_place(wh0f, 0, H), _place(wh0b, 1, H)], axis=0)
    b0 = _place(b0f, 0, H) + _place(b0b, 1, H)

    # layer 1: inputs come from the two time-ordered layer-0 scratches
    #   seq[t]     = [fwd0[t]     | bwd0[T-1-t]]
    #   seq_rev[t] = [fwd0[T-1-t] | bwd0[t]]
    # precomp1[t] = seq[t] @ w1p + seq_rev[t] @ w1q + b1
    A_f, B_f = wi1f[:H], wi1f[H:]   # rows multiplying fwd0 / bwd0 (fwd dir)
    A_b, B_b = wi1b[:H], wi1b[H:]   # rows multiplying fwd0 / bwd0 (bwd dir)
    w1p = jnp.concatenate([_place(A_f, 0, H), _place(B_b, 1, H)], axis=0)
    w1q = jnp.concatenate([_place(A_b, 1, H), _place(B_f, 0, H)], axis=0)
    whh1 = jnp.concatenate([_place(wh1f, 0, H), _place(wh1b, 1, H)], axis=0)
    b1 = _place(b1f, 0, H) + _place(b1b, 1, H)

    return dict(wih0=wih0, whh0=whh0, b0=b0,
                w1p=w1p, w1q=w1q, whh1=whh1, b1=b1)


# ----------------------------------------------------------------------------
# Kernel
# ----------------------------------------------------------------------------
def pair_lstm_kernel(
    xaug_ref,                                   # (T, B, 2F) time-major, [x_t | x_{T-1-t}]
    wih0_ref, whh0_ref, b0_ref,                 # layer-0 packed weights
    w1p_ref, w1q_ref, whh1_ref, b1_ref,         # layer-1 packed weights
    bn_g_ref, bn_b_ref, bn_m_ref, bn_v_ref,     # BatchNorm1d params, each (1, 2H)
    wc1_ref, bc1_ref, wc2_ref, bc2_ref,         # classifier linears
    out_ref,                                    # (B, 1)
    seq_ref, seq_rev_ref, pre_ref,              # scratch: (T,B,2H), (T,B,2H), (T,B,8H)
):
    T, B, _ = xaug_ref.shape
    H8 = whh0_ref.shape[1]
    H2 = H8 // 4
    H = H2 // 2

    def cell(h_cat, c_cat, gates):
        # gates: (B, 8H), blocks [i_f,i_b, f_f,f_b, g_f,g_b, o_f,o_b]
        sig = jax.nn.sigmoid(gates)                     # one full-width EUP pass
        g_cat = jnp.tanh(gates[:, 4 * H:6 * H])
        c_new = sig[:, 2 * H:4 * H] * c_cat + sig[:, 0:2 * H] * g_cat
        h_new = sig[:, 6 * H:8 * H] * jnp.tanh(c_new)
        return h_new, c_new

    h0 = jnp.zeros((B, H2), jnp.float32)
    c0 = jnp.zeros((B, H2), jnp.float32)

    # ---- layer 0: one-shot input projection (bias folded in) ----
    xaug = xaug_ref[...].reshape(T * B, xaug_ref.shape[2])
    pre0 = jnp.dot(xaug, wih0_ref[...],
                   preferred_element_type=jnp.float32) + b0_ref[...]
    pre_ref[...] = pre0.reshape(T, B, H8)

    # ---- layer 0: fused fwd+bwd recurrence (one matmul per step) ----
    whh0 = whh0_ref[...]

    def l0_body(s, carry):
        h, c = carry
        gates = jnp.dot(h, whh0, preferred_element_type=jnp.float32) + pre_ref[s]
        h, c = cell(h, c, gates)
        seq_ref[s] = h                 # [fwd0[s]     | bwd0[T-1-s]]
        seq_rev_ref[T - 1 - s] = h     # => seq_rev[t] = [fwd0[T-1-t] | bwd0[t]]
        return (h, c)

    jax.lax.fori_loop(0, T, l0_body, (h0, c0), unroll=True)

    # ---- layer 1: one-shot input projection from layer-0 outputs ----
    seq_flat = seq_ref[...].reshape(T * B, H2)
    seq_rev_flat = seq_rev_ref[...].reshape(T * B, H2)
    pre1 = (jnp.dot(seq_flat, w1p_ref[...], preferred_element_type=jnp.float32)
            + jnp.dot(seq_rev_flat, w1q_ref[...], preferred_element_type=jnp.float32)
            + b1_ref[...])
    pre_ref[...] = pre1.reshape(T, B, H8)

    # ---- layer 1: fused fwd+bwd recurrence ----
    whh1 = whh1_ref[...]

    def l1_body(s, carry):
        h, c = carry
        gates = jnp.dot(h, whh1, preferred_element_type=jnp.float32) + pre_ref[s]
        return cell(h, c, gates)

    h_final, _ = jax.lax.fori_loop(0, T, l1_body, (h0, c0), unroll=True)
    # h_final = [h_fwd_last_layer | h_bwd_last_layer]  == torch.cat(h_n[-2], h_n[-1])

    # ---- classifier: BatchNorm1d -> Linear -> ReLU -> Linear ----
    # TODO(synk): BatchNorm1d implemented in eval mode (running stats); PyTorch
    # training-mode batch statistics would differ.
    inv_std = jax.lax.rsqrt(bn_v_ref[...] + BN_EPS)
    h_norm = (h_final - bn_m_ref[...]) * inv_std * bn_g_ref[...] + bn_b_ref[...]
    z = jnp.dot(h_norm, wc1_ref[...], preferred_element_type=jnp.float32) + bc1_ref[...]
    z = jnp.maximum(z, 0.0)
    out_ref[...] = jnp.dot(z, wc2_ref[...], preferred_element_type=jnp.float32) + bc2_ref[...]


# ----------------------------------------------------------------------------
# Wrapper
# ----------------------------------------------------------------------------
def pair_lstm_forward(x, params):
    """x: (B, T, 2) float32 -> (B,) logits, matching PairLSTMClassifier.forward."""
    B, T, F = x.shape
    H = params["l0f"][1].shape[0]

    packed = pack_params(params, H)
    x_tm = jnp.transpose(x, (1, 0, 2)).astype(jnp.float32)        # (T, B, F)
    x_aug = jnp.concatenate([x_tm, x_tm[::-1]], axis=-1)          # (T, B, 2F)

    flat = [x_aug,
            packed["wih0"], packed["whh0"], packed["b0"],
            packed["w1p"], packed["w1q"], packed["whh1"], packed["b1"]]
    flat.extend(params["bn"])
    flat.extend(params["cls"])

    out = pl.pallas_call(
        pair_lstm_kernel,
        out_shape=jax.ShapeDtypeStruct((B, 1), jnp.float32),
        in_specs=[pl.BlockSpec(memory_space=pltpu.MemorySpace.VMEM)] * len(flat),
        out_specs=pl.BlockSpec(memory_space=pltpu.MemorySpace.VMEM),
        scratch_shapes=[
            pltpu.VMEM((T, B, 2 * H), jnp.float32),   # layer-0 outputs, fwd time order
            pltpu.VMEM((T, B, 2 * H), jnp.float32),   # layer-0 outputs, reversed order
            pltpu.VMEM((T, B, 8 * H), jnp.float32),   # precomputed gate projections
        ],
    )(*flat)
    return out[:, 0]                                              # torch: out.squeeze(1)


# ----------------------------------------------------------------------------
# Parameter init (natural PyTorch-equivalent layout) + pure-JAX reference
# ----------------------------------------------------------------------------
def init_params(key, input_size=2, H=32, M=32):
    keys = jax.random.split(key, 24)
    ki = iter(keys)
    bound = 1.0 / float(np.sqrt(H))

    def u(k, shape, b=bound):
        return jax.random.uniform(k, shape, jnp.float32, -b, b)

    params = {}
    for layer in (0, 1):
        in_dim = input_size if layer == 0 else 2 * H
        for tag in ("f", "b"):                    # forward / reverse direction
            w_ih = u(next(ki), (4 * H, in_dim))   # torch weight_ih_l{k}[_reverse]
            w_hh = u(next(ki), (4 * H, H))        # torch weight_hh_l{k}[_reverse]
            b_ih = u(next(ki), (4 * H,))
            b_hh = u(next(ki), (4 * H,))
            params[f"l{layer}{tag}"] = (
                jnp.transpose(w_ih),              # (in_dim, 4H)
                jnp.transpose(w_hh),              # (H, 4H)
                (b_ih + b_hh).reshape(1, 4 * H),  # combined bias
            )

    gamma = 1.0 + 0.1 * jax.random.normal(next(ki), (1, 2 * H), jnp.float32)
    beta = 0.1 * jax.random.normal(next(ki), (1, 2 * H), jnp.float32)
    params["bn"] = (gamma, beta,
                    jnp.zeros((1, 2 * H), jnp.float32),
                    jnp.ones((1, 2 * H), jnp.float32))

    b1_bound = 1.0 / float(np.sqrt(2 * H))
    w1 = u(next(ki), (M, 2 * H), b1_bound)
    bb1 = u(next(ki), (M,), b1_bound)
    b2_bound = 1.0 / float(np.sqrt(M))
    w2 = u(next(ki), (1, M), b2_bound)
    bb2 = u(next(ki), (1,), b2_bound)
    params["cls"] = (jnp.transpose(w1), bb1.reshape(1, M),
                     jnp.transpose(w2), bb2.reshape(1, 1))
    return params


def reference_forward(x, params):
    """Pure-JAX reference with identical math (for verification)."""
    B, T, _ = x.shape
    H = params["l0f"][1].shape[0]

    def cell(xt, h, c, wi, wh, b):
        gates = xt @ wi + h @ wh + b
        i_g = jax.nn.sigmoid(gates[:, :H])
        f_g = jax.nn.sigmoid(gates[:, H:2 * H])
        g_g = jnp.tanh(gates[:, 2 * H:3 * H])
        o_g = jax.nn.sigmoid(gates[:, 3 * H:])
        c = f_g * c + i_g * g_g
        h = o_g * jnp.tanh(c)
        return h, c

    def run(seq, p, reverse):
        wi, wh, b = p
        h = jnp.zeros((B, H), jnp.float32)
        c = jnp.zeros((B, H), jnp.float32)
        outs = [None] * T
        steps = range(T - 1, -1, -1) if reverse else range(T)
        for t in steps:
            h, c = cell(seq[:, t, :], h, c, wi, wh, b)
            outs[t] = h
        return jnp.stack(outs, axis=1), h

    seq_f, _ = run(x, params["l0f"], False)
    seq_b, _ = run(x, params["l0b"], True)
    seq1 = jnp.concatenate([seq_f, seq_b], axis=-1)
    _, h_fwd = run(seq1, params["l1f"], False)
    _, h_bwd = run(seq1, params["l1b"], True)
    h_final = jnp.concatenate([h_fwd, h_bwd], axis=-1)

    gamma, beta, mean, var = params["bn"]
    h_norm = (h_final - mean) * jax.lax.rsqrt(var + BN_EPS) * gamma + beta
    w1, bb1, w2, bb2 = params["cls"]
    z = jnp.maximum(h_norm @ w1 + bb1, 0.0)
    out = z @ w2 + bb2
    return out[:, 0]


if __name__ == "__main__":
    B, T, F = 2, 8, 2         # batch, seq_len, pair features (valA_t, valB_t)
    H, M = 32, 32             # lstm_hidden_dim, mlp_hidden_dim (small demo sizes)

    key = jax.random.PRNGKey(0)
    kx, kp = jax.random.split(key)
    x = jax.random.normal(kx, (B, T, F), jnp.float32)
    params = init_params(kp, input_size=F, H=H, M=M)

    out = jax.block_until_ready(pair_lstm_forward(x, params))
    ref = jax.block_until_ready(reference_forward(x, params))

    assert out.shape == (B,)
    np.testing.assert_allclose(np.asarray(out), np.asarray(ref), rtol=1e-4, atol=1e-4)
    print("KERNEL_OK")
</pallas_src>

<mosaic_0001>
module attributes {stable_mosaic.version = 11 : i64} {
  func.func @pair_lstm_kernel(%arg0: memref<8x2x4xf32, #tpu.memory_space<vmem>>, %arg1: memref<4x256xf32, #tpu.memory_space<vmem>>, %arg2: memref<64x256xf32, #tpu.memory_space<vmem>>, %arg3: memref<1x256xf32, #tpu.memory_space<vmem>>, %arg4: memref<64x256xf32, #tpu.memory_space<vmem>>, %arg5: memref<64x256xf32, #tpu.memory_space<vmem>>, %arg6: memref<64x256xf32, #tpu.memory_space<vmem>>, %arg7: memref<1x256xf32, #tpu.memory_space<vmem>>, %arg8: memref<1x64xf32, #tpu.memory_space<vmem>>, %arg9: memref<1x64xf32, #tpu.memory_space<vmem>>, %arg10: memref<1x64xf32, #tpu.memory_space<vmem>>, %arg11: memref<1x64xf32, #tpu.memory_space<vmem>>, %arg12: memref<64x32xf32, #tpu.memory_space<vmem>>, %arg13: memref<1x32xf32, #tpu.memory_space<vmem>>, %arg14: memref<32x1xf32, #tpu.memory_space<vmem>>, %arg15: memref<1x1xf32, #tpu.memory_space<vmem>>, %arg16: memref<2x1xf32, #tpu.memory_space<vmem>>, %arg17: memref<8x2x64xf32, #tpu.memory_space<vmem>>, %arg18: memref<8x2x64xf32, #tpu.memory_space<vmem>>, %arg19: memref<8x2x256xf32, #tpu.memory_space<vmem>>) attributes {dimension_semantics = [], scalar_prefetch = 0 : i64, scratch_operands = 3 : i64, tpu.core_type = #tpu.core_type<tc>} {
    %cst = arith.constant 0.000000e+00 : f32
    %0 = vector.broadcast %cst : f32 to vector<2x64xf32>
    %cst_0 = arith.constant 0.000000e+00 : f32
    %1 = vector.broadcast %cst_0 : f32 to vector<2x64xf32>
    %c0 = arith.constant 0 : index
    %c0_1 = arith.constant 0 : index
    %c0_2 = arith.constant 0 : index
    %2 = vector.load %arg0[%c0, %c0_1, %c0_2] : memref<8x2x4xf32, #tpu.memory_space<vmem>>, vector<8x2x4xf32>
    %3 = vector.shape_cast %2 : vector<8x2x4xf32> to vector<16x4xf32>
    %c0_3 = arith.constant 0 : index
    %c0_4 = arith.constant 0 : index
    %4 = vector.load %arg1[%c0_3, %c0_4] : memref<4x256xf32, #tpu.memory_space<vmem>>, vector<4x256xf32>
    %cst_5 = arith.constant dense<0.000000e+00> : vector<16x256xf32>
    %5 = tpu.matmul %3, %4, %cst_5 {dimension_numbers = #tpu.dot_dimension_numbers<[1], [0], [0], [1], [0, 0, 1, 1], [], []>} : vector<16x4xf32>, vector<4x256xf32>, vector<16x256xf32> -> vector<16x256xf32>
    %c0_6 = arith.constant 0 : index
    %c0_7 = arith.constant 0 : index
    %6 = vector.load %arg3[%c0_6, %c0_7] : memref<1x256xf32, #tpu.memory_space<vmem>>, vector<1x256xf32>
    %7 = vector.broadcast %6 : vector<1x256xf32> to vector<16x256xf32>
    %8 = arith.addf %5, %7 : vector<16x256xf32>
    %9 = vector.shape_cast %8 : vector<16x256xf32> to vector<8x2x256xf32>
    %c0_8 = arith.constant 0 : index
    %c0_9 = arith.constant 0 : index
    %c0_10 = arith.constant 0 : index
    %10 = vector.load %arg19[%c0_8, %c0_9, %c0_10] : memref<8x2x256xf32, #tpu.memory_space<vmem>>, vector<8x2x256xf32>
    tpu.vector_store %arg19[%c0_8, %c0_9, %c0_10], %9 {strides = array<i32>} : memref<8x2x256xf32, #tpu.memory_space<vmem>>, vector<8x2x256xf32>,
    %c0_11 = arith.constant 0 : index
    %c0_12 = arith.constant 0 : index
    %11 = vector.load %arg2[%c0_11, %c0_12] : memref<64x256xf32, #tpu.memory_space<vmem>>, vector<64x256xf32>
    %c0_i32 = arith.constant 0 : i32
    %cst_13 = arith.constant dense<0.000000e+00> : vector<2x256xf32>
    %12 = tpu.matmul %0, %11, %cst_13 {dimension_numbers = #tpu.dot_dimension_numbers<[1], [0], [0], [1], [0, 0, 1, 1], [], []>} : vector<2x64xf32>, vector<64x256xf32>, vector<2x256xf32> -> vector<2x256xf32>
    %13 = arith.index_cast %c0_i32 : i32 to index
    %c0_14 = arith.constant 0 : index
    %c0_15 = arith.constant 0 : index
    %14 = vector.load %arg19[%13, %c0_14, %c0_15] : memref<8x2x256xf32, #tpu.memory_space<vmem>>, vector<1x2x256xf32>
    %15 = vector.shape_cast %14 : vector<1x2x256xf32> to vector<2x256xf32>
    %16 = arith.addf %12, %15 : vector<2x256xf32>
    %17 = arith.negf %16 : vector<2x256xf32>
    %18 = math.exp %17 : vector<2x256xf32>
    %cst_16 = arith.constant 1.000000e+00 : f32
    %19 = vector.broadcast %cst_16 : f32 to vector<2x256xf32>
    %20 = arith.addf %19, %18 : vector<2x256xf32>
    %21 = arith.divf %19, %20 : vector<2x256xf32>
    %22 = vector.extract_strided_slice %16 {offsets = [0, 128], sizes = [2, 64], strides = [1, 1]} : vector<2x256xf32> to vector<2x64xf32>
    %23 = math.tanh %22 : vector<2x64xf32>
    %24 = vector.extract_strided_slice %21 {offsets = [0, 64], sizes = [2, 64], strides = [1, 1]} : vector<2x256xf32> to vector<2x64xf32>
    %25 = arith.mulf %24, %1 : vector<2x64xf32>
    %26 = vector.extract_strided_slice %21 {offsets = [0, 0], sizes = [2, 64], strides = [1, 1]} : vector<2x256xf32> to vector<2x64xf32>
    %27 = arith.mulf %26, %23 : vector<2x64xf32>
    %28 = arith.addf %25, %27 : vector<2x64xf32>
    %29 = vector.extract_strided_slice %21 {offsets = [0, 192], sizes = [2, 64], strides = [1, 1]} : vector<2x256xf32> to vector<2x64xf32>
    %30 = math.tanh %28 : vector<2x64xf32>
    %31 = arith.mulf %29, %30 : vector<2x64xf32>
    %32 = arith.index_cast %c0_i32 : i32 to index
    %c0_17 = arith.constant 0 : index
    %c0_18 = arith.constant 0 : index
    %33 = vector.load %arg17[%32, %c0_17, %c0_18] : memref<8x2x64xf32, #tpu.memory_space<vmem>>, vector<1x2x64xf32>
    %34 = vector.shape_cast %33 : vector<1x2x64xf32> to vector<2x64xf32>
    %35 = vector.shape_cast %31 : vector<2x64xf32> to vector<1x2x64xf32>
    tpu.vector_store %arg17[%32, %c0_17, %c0_18], %35 {strides = array<i32>} : memref<8x2x64xf32, #tpu.memory_space<vmem>>, vector<1x2x64xf32>,
    %c7_i32 = arith.constant 7 : i32
    %36 = arith.subi %c7_i32, %c0_i32 : i32
    %37 = arith.index_cast %36 : i32 to index
    %c0_19 = arith.constant 0 : index
    %c0_20 = arith.constant 0 : index
    %38 = vector.load %arg18[%37, %c0_19, %c0_20] : memref<8x2x64xf32, #tpu.memory_space<vmem>>, vector<1x2x64xf32>
    %39 = vector.shape_cast %38 : vector<1x2x64xf32> to vector<2x64xf32>
    %40 = vector.shape_cast %31 : vector<2x64xf32> to vector<1x2x64xf32>
    tpu.vector_store %arg18[%37, %c0_19, %c0_20], %40 {strides = array<i32>} : memref<8x2x64xf32, #tpu.memory_space<vmem>>, vector<1x2x64xf32>,
    %c1_i32 = arith.constant 1 : i32
    %cst_21 = arith.constant dense<0.000000e+00> : vector<2x256xf32>
    %41 = tpu.matmul %31, %11, %cst_21 {dimension_numbers = #tpu.dot_dimension_numbers<[1], [0], [0], [1], [0, 0, 1, 1], [], []>} : vector<2x64xf32>, vector<64x256xf32>, vector<2x256xf32> -> vector<2x256xf32>
    %42 = arith.index_cast %c1_i32 : i32 to index
    %c0_22 = arith.constant 0 : index
    %c0_23 = arith.constant 0 : index
    %43 = vector.load %arg19[%42, %c0_22, %c0_23] : memref<8x2x256xf32, #tpu.memory_space<vmem>>, vector<1x2x256xf32>
    %44 = vector.shape_cast %43 : vector<1x2x256xf32> to vector<2x256xf32>
    %45 = arith.addf %41, %44 : vector<2x256xf32>
    %46 = arith.negf %45 : vector<2x256xf32>
    %47 = math.exp %46 : vector<2x256xf32>
    %cst_24 = arith.constant 1.000000e+00 : f32
    %48 = vector.broadcast %cst_24 : f32 to vector<2x256xf32>
    %49 = arith.addf %48, %47 : vector<2x256xf32>
    %50 = arith.divf %48, %49 : vector<2x256xf32>
    %51 = vector.extract_strided_slice %45 {offsets = [0, 128], sizes = [2, 64], strides = [1, 1]} : vector<2x256xf32> to vector<2x64xf32>
    %52 = math.tanh %51 : vector<2x64xf32>
    %53 = vector.extract_strided_slice %50 {offsets = [0, 64], sizes = [2, 64], strides = [1, 1]} : vector<2x256xf32> to vector<2x64xf32>
    %54 = arith.mulf %53, %28 : vector<2x64xf32>
    %55 = vector.extract_strided_slice %50 {offsets = [0, 0], sizes = [2, 64], strides = [1, 1]} : vector<2x256xf32> to vector<2x64xf32>
    %56 = arith.mulf %55, %52 : vector<2x64xf32>
    %57 = arith.addf %54, %56 : vector<2x64xf32>
    %58 = vector.extract_strided_slice %50 {offsets = [0, 192], sizes = [2, 64], strides = [1, 1]} : vector<2x256xf32> to vector<2x64xf32>
    %59 = math.tanh %57 : vector<2x64xf32>
    %60 = arith.mulf %58, %59 : vector<2x64xf32>
    %61 = arith.index_cast %c1_i32 : i32 to index
    %c0_25 = arith.constant 0 : index
    %c0_26 = arith.constant 0 : index
    %62 = vector.load %arg17[%61, %c0_25, %c0_26] : memref<8x2x64xf32, #tpu.memory_space<vmem>>, vector<1x2x64xf32>
    %63 = vector.shape_cast %62 : vector<1x2x64xf32> to vector<2x64xf32>
    %64 = vector.shape_cast %60 : vector<2x64xf32> to vector<1x2x64xf32>
    tpu.vector_store %arg17[%61, %c0_25, %c0_26], %64 {strides = array<i32>} : memref<8x2x64xf32, #tpu.memory_space<vmem>>, vector<1x2x64xf32>,
    %c7_i32_27 = arith.constant 7 : i32
    %65 = arith.subi %c7_i32_27, %c1_i32 : i32
    %66 = arith.index_cast %65 : i32 to index
    %c0_28 = arith.constant 0 : index
    %c0_29 = arith.constant 0 : index
    %67 = vector.load %arg18[%66, %c0_28, %c0_29] : memref<8x2x64xf32, #tpu.memory_space<vmem>>, vector<1x2x64xf32>
    %68 = vector.shape_cast %67 : vector<1x2x64xf32> to vector<2x64xf32>
    %69 = vector.shape_cast %60 : vector<2x64xf32> to vector<1x2x64xf32>
    tpu.vector_store %arg18[%66, %c0_28, %c0_29], %69 {strides = array<i32>} : memref<8x2x64xf32, #tpu.memory_space<vmem>>, vector<1x2x64xf32>,
    %c2_i32 = arith.constant 2 : i32
    %cst_30 = arith.constant dense<0.000000e+00> : vector<2x256xf32>
    %70 = tpu.matmul %60, %11, %cst_30 {dimension_numbers = #tpu.dot_dimension_numbers<[1], [0], [0], [1], [0, 0, 1, 1], [], []>} : vector<2x64xf32>, vector<64x256xf32>, vector<2x256xf32> -> vector<2x256xf32>
    %71 = arith.index_cast %c2_i32 : i32 to index
    %c0_31 = arith.constant 0 : index
    %c0_32 = arith.constant 0 : index
    %72 = vector.load %arg19[%71, %c0_31, %c0_32] : memref<8x2x256xf32, #tpu.memory_space<vmem>>, vector<1x2x256xf32>
    %73 = vector.shape_cast %72 : vector<1x2x256xf32> to vector<2x256xf32>
    %74 = arith.addf %70, %73 : vector<2x256xf32>
    %75 = arith.negf %74 : vector<2x256xf32>
    %76 = math.exp %75 : vector<2x256xf32>
    %cst_33 = arith.constant 1.000000e+00 : f32
    %77 = vector.broadcast %cst_33 : f32 to vector<2x256xf32>
    %78 = arith.addf %77, %76 : vector<2x256xf32>
    %79 = arith.divf %77, %78 : vector<2x256xf32>
    %80 = vector.extract_strided_slice %74 {offsets = [0, 128], sizes = [2, 64], strides = [1, 1]} : vector<2x256xf32> to vector<2x64xf32>
    %81 = math.tanh %80 : vector<2x64xf32>
    %82 = vector.extract_strided_slice %79 {offsets = [0, 64], sizes = [2, 64], strides = [1, 1]} : vector<2x256xf32> to vector<2x64xf32>
    %83 = arith.mulf %82, %57 : vector<2x64xf32>
    %84 = vector.extract_strided_slice %79 {offsets = [0, 0], sizes = [2, 64], strides = [1, 1]} : vector<2x256xf32> to vector<2x64xf32>
    %85 = arith.mulf %84, %81 : vector<2x64xf32>
    %86 = arith.addf %83, %85 : vector<2x64xf32>
    %87 = vector.extract_strided_slice %79 {offsets = [0, 192], sizes = [2, 64], strides = [1, 1]} : vector<2x256xf32> to vector<2x64xf32>
    %88 = math.tanh %86 : vector<2x64xf32>
    %89 = arith.mulf %87, %88 : vector<2x64xf32>
    %90 = arith.index_cast %c2_i32 : i32 to index
    %c0_34 = arith.constant 0 : index
    %c0_35 = arith.constant 0 : index
    %91 = vector.load %arg17[%90, %c0_34, %c0_35] : memref<8x2x64xf32, #tpu.memory_space<vmem>>, vector<1x2x64xf32>
    %92 = vector.shape_cast %91 : vector<1x2x64xf32> to vector<2x64xf32>
    %93 = vector.shape_cast %89 : vector<2x64xf32> to vector<1x2x64xf32>
    tpu.vector_store %arg17[%90, %c0_34, %c0_35], %93 {strides = array<i32>} : memref<8x2x64xf32, #tpu.memory_space<vmem>>, vector<1x2x64xf32>,
    %c7_i32_36 = arith.constant 7 : i32
    %94 = arith.subi %c7_i32_36, %c2_i32 : i32
    %95 = arith.index_cast %94 : i32 to index
    %c0_37 = arith.constant 0 : index
    %c0_38 = arith.constant 0 : index
    %96 = vector.load %arg18[%95, %c0_37, %c0_38] : memref<8x2x64xf32, #tpu.memory_space<vmem>>, vector<1x2x64xf32>
    %97 = vector.shape_cast %96 : vector<1x2x64xf32> to vector<2x64xf32>
    %98 = vector.shape_cast %89 : vector<2x64xf32> to vector<1x2x64xf32>
    tpu.vector_store %arg18[%95, %c0_37, %c0_38], %98 {strides = array<i32>} : memref<8x2x64xf32, #tpu.memory_space<vmem>>, vector<1x2x64xf32>,
    %c3_i32 = arith.constant 3 : i32
    %cst_39 = arith.constant dense<0.000000e+00> : vector<2x256xf32>
    %99 = tpu.matmul %89, %11, %cst_39 {dimension_numbers = #tpu.dot_dimension_numbers<[1], [0], [0], [1], [0, 0, 1, 1], [], []>} : vector<2x64xf32>, vector<64x256xf32>, vector<2x256xf32> -> vector<2x256xf32>
    %100 = arith.index_cast %c3_i32 : i32 to index
    %c0_40 = arith.constant 0 : index
    %c0_41 = arith.constant 0 : index
    %101 = vector.load %arg19[%100, %c0_40, %c0_41] : memref<8x2x256xf32, #tpu.memory_space<vmem>>, vector<1x2x256xf32>
    %102 = vector.shape_cast %101 : vector<1x2x256xf32> to vector<2x256xf32>
    %103 = arith.addf %99, %102 : vector<2x256xf32>
    %104 = arith.negf %103 : vector<2x256xf32>
    %105 = math.exp %104 : vector<2x256xf32>
    %cst_42 = arith.constant 1.000000e+00 : f32
    %106 = vector.broadcast %cst_42 : f32 to vector<2x256xf32>
    %107 = arith.addf %106, %105 : vector<2x256xf32>
    %108 = arith.divf %106, %107 : vector<2x256xf32>
    %109 = vector.extract_strided_slice %103 {offsets = [0, 128], sizes = [2, 64], strides = [1, 1]} : vector<2x256xf32> to vector<2x64xf32>
    %110 = math.tanh %109 : vector<2x64xf32>
    %111 = vector.extract_strided_slice %108 {offsets = [0, 64], sizes = [2, 64], strides = [1, 1]} : vector<2x256xf32> to vector<2x64xf32>
    %112 = arith.mulf %111, %86 : vector<2x64xf32>
    %113 = vector.extract_strided_slice %108 {offsets = [0, 0], sizes = [2, 64], strides = [1, 1]} : vector<2x256xf32> to vector<2x64xf32>
    %114 = arith.mulf %113, %110 : vector<2x64xf32>
    %115 = arith.addf %112, %114 : vector<2x64xf32>
    %116 = vector.extract_strided_slice %108 {offsets = [0, 192], sizes = [2, 64], strides = [1, 1]} : vector<2x256xf32> to vector<2x64xf32>
    %117 = math.tanh %115 : vector<2x64xf32>
    %118 = arith.mulf %116, %117 : vector<2x64xf32>
    %119 = arith.index_cast %c3_i32 : i32 to index
    %c0_43 = arith.constant 0 : index
    %c0_44 = arith.constant 0 : index
    %120 = vector.load %arg17[%119, %c0_43, %c0_44] : memref<8x2x64xf32, #tpu.memory_space<vmem>>, vector<1x2x64xf32>
    %121 = vector.shape_cast %120 : vector<1x2x64xf32> to vector<2x64xf32>
    %122 = vector.shape_cast %118 : vector<2x64xf32> to vector<1x2x64xf32>
    tpu.vector_store %arg17[%119, %c0_43, %c0_44], %122 {strides = array<i32>} : memref<8x2x64xf32, #tpu.memory_space<vmem>>, vector<1x2x64xf32>,
    %c7_i32_45 = arith.constant 7 : i32
    %123 = arith.subi %c7_i32_45, %c3_i32 : i32
    %124 = arith.index_cast %123 : i32 to index
    %c0_46 = arith.constant 0 : index
    %c0_47 = arith.constant 0 : index
    %125 = vector.load %arg18[%124, %c0_46, %c0_47] : memref<8x2x64xf32, #tpu.memory_space<vmem>>, vector<1x2x64xf32>
    %126 = vector.shape_cast %125 : vector<1x2x64xf32> to vector<2x64xf32>
    %127 = vector.shape_cast %118 : vector<2x64xf32> to vector<1x2x64xf32>
    tpu.vector_store %arg18[%124, %c0_46, %c0_47], %127 {strides = array<i32>} : memref<8x2x64xf32, #tpu.memory_space<vmem>>, vector<1x2x64xf32>,
    %c4_i32 = arith.constant 4 : i32
    %cst_48 = arith.constant dense<0.000000e+00> : vector<2x256xf32>
    %128 = tpu.matmul %118, %11, %cst_48 {dimension_numbers = #tpu.dot_dimension_numbers<[1], [0], [0], [1], [0, 0, 1, 1], [], []>} : vector<2x64xf32>, vector<64x256xf32>, vector<2x256xf32> -> vector<2x256xf32>
    %129 = arith.index_cast %c4_i32 : i32 to index
    %c0_49 = arith.constant 0 : index
    %c0_50 = arith.constant 0 : index
    %130 = vector.load %arg19[%129, %c0_49, %c0_50] : memref<8x2x256xf32, #tpu.memory_space<vmem>>, vector<1x2x256xf32>
    %131 = vector.shape_cast %130 : vector<1x2x256xf32> to vector<2x256xf32>
    %132 = arith.addf %128, %131 : vector<2x256xf32>
    %133 = arith.negf %132 : vector<2x256xf32>
    %134 = math.exp %133 : vector<2x256xf32>
    %cst_51 = arith.constant 1.000000e+00 : f32
    %135 = vector.broadcast %cst_51 : f32 to vector<2x256xf32>
    %136 = arith.addf %135, %134 : vector<2x256xf32>
    %137 = arith.divf %135, %136 : vector<2x256xf32>
    %138 = vector.extract_strided_slice %132 {offsets = [0, 128], sizes = [2, 64], strides = [1, 1]} : vector<2x256xf32> to vector<2x64xf32>
    %139 = math.tanh %138 : vector<2x64xf32>
    %140 = vector.extract_strided_slice %137 {offsets = [0, 64], sizes = [2, 64], strides = [1, 1]} : vector<2x256xf32> to vector<2x64xf32>
    %141 = arith.mulf %140, %115 : vector<2x64xf32>
    %142 = vector.extract_strided_slice %137 {offsets = [0, 0], sizes = [2, 64], strides = [1, 1]} : vector<2x256xf32> to vector<2x64xf32>
    %143 = arith.mulf %142, %139 : vector<2x64xf32>
    %144 = arith.addf %141, %143 : vector<2x64xf32>
    %145 = vector.extract_strided_slice %137 {offsets = [0, 192], sizes = [2, 64], strides = [1, 1]} : vector<2x256xf32> to vector<2x64xf32>
    %146 = math.tanh %144 : vector<2x64xf32>
    %147 = arith.mulf %145, %146 : vector<2x64xf32>
    %148 = arith.index_cast %c4_i32 : i32 to index
    %c0_52 = arith.constant 0 : index
    %c0_53 = arith.constant 0 : index
    %149 = vector.load %arg17[%148, %c0_52, %c0_53] : memref<8x2x64xf32, #tpu.memory_space<vmem>>, vector<1x2x64xf32>
    %150 = vector.shape_cast %149 : vector<1x2x64xf32> to vector<2x64xf32>
    %151 = vector.shape_cast %147 : vector<2x64xf32> to vector<1x2x64xf32>
    tpu.vector_store %arg17[%148, %c0_52, %c0_53], %151 {strides = array<i32>} : memref<8x2x64xf32, #tpu.memory_space<vmem>>, vector<1x2x64xf32>,
    %c7_i32_54 = arith.constant 7 : i32
    %152 = arith.subi %c7_i32_54, %c4_i32 : i32
    %153 = arith.index_cast %152 : i32 to index
    %c0_55 = arith.constant 0 : index
    %c0_56 = arith.constant 0 : index
    %154 = vector.load %arg18[%153, %c0_55, %c0_56] : memref<8x2x64xf32, #tpu.memory_space<vmem>>, vector<1x2x64xf32>
    %155 = vector.shape_cast %154 : vector<1x2x64xf32> to vector<2x64xf32>
    %156 = vector.shape_cast %147 : vector<2x64xf32> to vector<1x2x64xf32>
    tpu.vector_store %arg18[%153, %c0_55, %c0_56], %156 {strides = array<i32>} : memref<8x2x64xf32, #tpu.memory_space<vmem>>, vector<1x2x64xf32>,
    %c5_i32 = arith.constant 5 : i32
    %cst_57 = arith.constant dense<0.000000e+00> : vector<2x256xf32>
    %157 = tpu.matmul %147, %11, %cst_57 {dimension_numbers = #tpu.dot_dimension_numbers<[1], [0], [0], [1], [0, 0, 1, 1], [], []>} : vector<2x64xf32>, vector<64x256xf32>, vector<2x256xf32> -> vector<2x256xf32>
    %158 = arith.index_cast %c5_i32 : i32 to index
    %c0_58 = arith.constant 0 : index
    %c0_59 = arith.constant 0 : index
    %159 = vector.load %arg19[%158, %c0_58, %c0_59] : memref<8x2x256xf32, #tpu.memory_space<vmem>>, vector<1x2x256xf32>
    %160 = vector.shape_cast %159 : vector<1x2x256xf32> to vector<2x256xf32>
    %161 = arith.addf %157, %160 : vector<2x256xf32>
    %162 = arith.negf %161 : vector<2x256xf32>
    %163 = math.exp %162 : vector<2x256xf32>
    %cst_60 = arith.constant 1.000000e+00 : f32
    %164 = vector.broadcast %cst_60 : f32 to vector<2x256xf32>
    %165 = arith.addf %164, %163 : vector<2x256xf32>
    %166 = arith.divf %164, %165 : vector<2x256xf32>
    %167 = vector.extract_strided_slice %161 {offsets = [0, 128], sizes = [2, 64], strides = [1, 1]} : vector<2x256xf32> to vector<2x64xf32>
    %168 = math.tanh %167 : vector<2x64xf32>
    %169 = vector.extract_strided_slice %166 {offsets = [0, 64], sizes = [2, 64], strides = [1, 1]} : vector<2x256xf32> to vector<2x64xf32>
    %170 = arith.mulf %169, %144 : vector<2x64xf32>
    %171 = vector.extract_strided_slice %166 {offsets = [0, 0], sizes = [2, 64], strides = [1, 1]} : vector<2x256xf32> to vector<2x64xf32>
    %172 = arith.mulf %171, %168 : vector<2x64xf32>
    %173 = arith.addf %170, %172 : vector<2x64xf32>
    %174 = vector.extract_strided_slice %166 {offsets = [0, 192], sizes = [2, 64], strides = [1, 1]} : vector<2x256xf32> to vector<2x64xf32>
    %175 = math.tanh %173 : vector<2x64xf32>
    %176 = arith.mulf %174, %175 : vector<2x64xf32>
    %177 = arith.index_cast %c5_i32 : i32 to index
    %c0_61 = arith.constant 0 : index
    %c0_62 = arith.constant 0 : index
    %178 = vector.load %arg17[%177, %c0_61, %c0_62] : memref<8x2x64xf32, #tpu.memory_space<vmem>>, vector<1x2x64xf32>
    %179 = vector.shape_cast %178 : vector<1x2x64xf32> to vector<2x64xf32>
    %180 = vector.shape_cast %176 : vector<2x64xf32> to vector<1x2x64xf32>
    tpu.vector_store %arg17[%177, %c0_61, %c0_62], %180 {strides = array<i32>} : memref<8x2x64xf32, #tpu.memory_space<vmem>>, vector<1x2x64xf32>,
    %c7_i32_63 = arith.constant 7 : i32
    %181 = arith.subi %c7_i32_63, %c5_i32 : i32
    %182 = arith.index_cast %181 : i32 to index
    %c0_64 = arith.constant 0 : index
    %c0_65 = arith.constant 0 : index
    %183 = vector.load %arg18[%182, %c0_64, %c0_65] : memref<8x2x64xf32, #tpu.memory_space<vmem>>, vector<1x2x64xf32>
    %184 = vector.shape_cast %183 : vector<1x2x64xf32> to vector<2x64xf32>
    %185 = vector.shape_cast %176 : vector<2x64xf32> to vector<1x2x64xf32>
    tpu.vector_store %arg18[%182, %c0_64, %c0_65], %185 {strides = array<i32>} : memref<8x2x64xf32, #tpu.memory_space<vmem>>, vector<1x2x64xf32>,
    %c6_i32 = arith.constant 6 : i32
    %cst_66 = arith.constant dense<0.000000e+00> : vector<2x256xf32>
    %186 = tpu.matmul %176, %11, %cst_66 {dimension_numbers = #tpu.dot_dimension_numbers<[1], [0], [0], [1], [0, 0, 1, 1], [], []>} : vector<2x64xf32>, vector<64x256xf32>, vector<2x256xf32> -> vector<2x256xf32>
    %187 = arith.index_cast %c6_i32 : i32 to index
    %c0_67 = arith.constant 0 : index
    %c0_68 = arith.constant 0 : index
    %188 = vector.load %arg19[%187, %c0_67, %c0_68] : memref<8x2x256xf32, #tpu.memory_space<vmem>>, vector<1x2x256xf32>
    %189 = vector.shape_cast %188 : vector<1x2x256xf32> to vector<2x256xf32>
    %190 = arith.addf %186, %189 : vector<2x256xf32>
    %191 = arith.negf %190 : vector<2x256xf32>
    %192 = math.exp %191 : vector<2x256xf32>
    %cst_69 = arith.constant 1.000000e+00 : f32
    %193 = vector.broadcast %cst_69 : f32 to vector<2x256xf32>
    %194 = arith.addf %193, %192 : vector<2x256xf32>
    %195 = arith.divf %193, %194 : vector<2x256xf32>
    %196 = vector.extract_strided_slice %190 {offsets = [0, 128], sizes = [2, 64], strides = [1, 1]} : vector<2x256xf32> to vector<2x64xf32>
    %197 = math.tanh %196 : vector<2x64xf32>
    %198 = vector.extract_strided_slice %195 {offsets = [0, 64], sizes = [2, 64], strides = [1, 1]} : vector<2x256xf32> to vector<2x64xf32>
    %199 = arith.mulf %198, %173 : vector<2x64xf32>
    %200 = vector.extract_strided_slice %195 {offsets = [0, 0], sizes = [2, 64], strides = [1, 1]} : vector<2x256xf32> to vector<2x64xf32>
    %201 = arith.mulf %200, %197 : vector<2x64xf32>
    %202 = arith.addf %199, %201 : vector<2x64xf32>
    %203 = vector.extract_strided_slice %195 {offsets = [0, 192], sizes = [2, 64], strides = [1, 1]} : vector<2x256xf32> to vector<2x64xf32>
    %204 = math.tanh %202 : vector<2x64xf32>
    %205 = arith.mulf %203, %204 : vector<2x64xf32>
    %206 = arith.index_cast %c6_i32 : i32 to index
    %c0_70 = arith.constant 0 : index
    %c0_71 = arith.constant 0 : index
    %207 = vector.load %arg17[%206, %c0_70, %c0_71] : memref<8x2x64xf32, #tpu.memory_space<vmem>>, vector<1x2x64xf32>
    %208 = vector.shape_cast %207 : vector<1x2x64xf32> to vector<2x64xf32>
    %209 = vector.shape_cast %205 : vector<2x64xf32> to vector<1x2x64xf32>
    tpu.vector_store %arg17[%206, %c0_70, %c0_71], %209 {strides = array<i32>} : memref<8x2x64xf32, #tpu.memory_space<vmem>>, vector<1x2x64xf32>,
    %c7_i32_72 = arith.constant 7 : i32
    %210 = arith.subi %c7_i32_72, %c6_i32 : i32
    %211 = arith.index_cast %210 : i32 to index
    %c0_73 = arith.constant 0 : index
    %c0_74 = arith.constant 0 : index
    %212 = vector.load %arg18[%211, %c0_73, %c0_74] : memref<8x2x64xf32, #tpu.memory_space<vmem>>, vector<1x2x64xf32>
    %213 = vector.shape_cast %212 : vector<1x2x64xf32> to vector<2x64xf32>
    %214 = vector.shape_cast %205 : vector<2x64xf32> to vector<1x2x64xf32>
    tpu.vector_store %arg18[%211, %c0_73, %c0_74], %214 {strides = array<i32>} : memref<8x2x64xf32, #tpu.memory_space<vmem>>, vector<1x2x64xf32>,
    %c7_i32_75 = arith.constant 7 : i32
    %cst_76 = arith.constant dense<0.000000e+00> : vector<2x256xf32>
    %215 = tpu.matmul %205, %11, %cst_76 {dimension_numbers = #tpu.dot_dimension_numbers<[1], [0], [0], [1], [0, 0, 1, 1], [], []>} : vector<2x64xf32>, vector<64x256xf32>, vector<2x256xf32> -> vector<2x256xf32>
    %216 = arith.index_cast %c7_i32_75 : i32 to index
    %c0_77 = arith.constant 0 : index
    %c0_78 = arith.constant 0 : index
    %217 = vector.load %arg19[%216, %c0_77, %c0_78] : memref<8x2x256xf32, #tpu.memory_space<vmem>>, vector<1x2x256xf32>
    %218 = vector.shape_cast %217 : vector<1x2x256xf32> to vector<2x256xf32>
    %219 = arith.addf %215, %218 : vector<2x256xf32>
    %220 = arith.negf %219 : vector<2x256xf32>
    %221 = math.exp %220 : vector<2x256xf32>
    %cst_79 = arith.constant 1.000000e+00 : f32
    %222 = vector.broadcast %cst_79 : f32 to vector<2x256xf32>
    %223 = arith.addf %222, %221 : vector<2x256xf32>
    %224 = arith.divf %222, %223 : vector<2x256xf32>
    %225 = vector.extract_strided_slice %219 {offsets = [0, 128], sizes = [2, 64], strides = [1, 1]} : vector<2x256xf32> to vector<2x64xf32>
    %226 = math.tanh %225 : vector<2x64xf32>
    %227 = vector.extract_strided_slice %224 {offsets = [0, 64], sizes = [2, 64], strides = [1, 1]} : vector<2x256xf32> to vector<2x64xf32>
    %228 = arith.mulf %227, %202 : vector<2x64xf32>
    %229 = vector.extract_strided_slice %224 {offsets = [0, 0], sizes = [2, 64], strides = [1, 1]} : vector<2x256xf32> to vector<2x64xf32>
    %230 = arith.mulf %229, %226 : vector<2x64xf32>
    %231 = arith.addf %228, %230 : vector<2x64xf32>
    %232 = vector.extract_strided_slice %224 {offsets = [0, 192], sizes = [2, 64], strides = [1, 1]} : vector<2x256xf32> to vector<2x64xf32>
    %233 = math.tanh %231 : vector<2x64xf32>
    %234 = arith.mulf %232, %233 : vector<2x64xf32>
    %235 = arith.index_cast %c7_i32_75 : i32 to index
    %c0_80 = arith.constant 0 : index
    %c0_81 = arith.constant 0 : index
    %236 = vector.load %arg17[%235, %c0_80, %c0_81] : memref<8x2x64xf32, #tpu.memory_space<vmem>>, vector<1x2x64xf32>
    %237 = vector.shape_cast %236 : vector<1x2x64xf32> to vector<2x64xf32>
    %238 = vector.shape_cast %234 : vector<2x64xf32> to vector<1x2x64xf32>
    tpu.vector_store %arg17[%235, %c0_80, %c0_81], %238 {strides = array<i32>} : memref<8x2x64xf32, #tpu.memory_space<vmem>>, vector<1x2x64xf32>,
    %c7_i32_82 = arith.constant 7 : i32
    %239 = arith.subi %c7_i32_82, %c7_i32_75 : i32
    %240 = arith.index_cast %239 : i32 to index
    %c0_83 = arith.constant 0 : index
    %c0_84 = arith.constant 0 : index
    %241 = vector.load %arg18[%240, %c0_83, %c0_84] : memref<8x2x64xf32, #tpu.memory_space<vmem>>, vector<1x2x64xf32>
    %242 = vector.shape_cast %241 : vector<1x2x64xf32> to vector<2x64xf32>
    %243 = vector.shape_cast %234 : vector<2x64xf32> to vector<1x2x64xf32>
    tpu.vector_store %arg18[%240, %c0_83, %c0_84], %243 {strides = array<i32>} : memref<8x2x64xf32, #tpu.memory_space<vmem>>, vector<1x2x64xf32>,
    %c8_i32 = arith.constant 8 : i32
    %c0_85 = arith.constant 0 : index
    %c0_86 = arith.constant 0 : index
    %c0_87 = arith.constant 0 : index
    %244 = vector.load %arg17[%c0_85, %c0_86, %c0_87] : memref<8x2x64xf32, #tpu.memory_space<vmem>>, vector<8x2x64xf32>
    %245 = vector.shape_cast %244 : vector<8x2x64xf32> to vector<16x64xf32>
    %c0_88 = arith.constant 0 : index
    %c0_89 = arith.constant 0 : index
    %c0_90 = arith.constant 0 : index
    %246 = vector.load %arg18[%c0_88, %c0_89, %c0_90] : memref<8x2x64xf32, #tpu.memory_space<vmem>>, vector<8x2x64xf32>
    %247 = vector.shape_cast %246 : vector<8x2x64xf32> to vector<16x64xf32>
    %c0_91 = arith.constant 0 : index
    %c0_92 = arith.constant 0 : index
    %248 = vector.load %arg4[%c0_91, %c0_92] : memref<64x256xf32, #tpu.memory_space<vmem>>, vector<64x256xf32>
    %cst_93 = arith.constant dense<0.000000e+00> : vector<16x256xf32>
    %249 = tpu.matmul %245, %248, %cst_93 {dimension_numbers = #tpu.dot_dimension_numbers<[1], [0], [0], [1], [0, 0, 1, 1], [], []>} : vector<16x64xf32>, vector<64x256xf32>, vector<16x256xf32> -> vector<16x256xf32>
    %c0_94 = arith.constant 0 : index
    %c0_95 = arith.constant 0 : index
    %250 = vector.load %arg5[%c0_94, %c0_95] : memref<64x256xf32, #tpu.memory_space<vmem>>, vector<64x256xf32>
    %cst_96 = arith.constant dense<0.000000e+00> : vector<16x256xf32>
    %251 = tpu.matmul %247, %250, %cst_96 {dimension_numbers = #tpu.dot_dimension_numbers<[1], [0], [0], [1], [0, 0, 1, 1], [], []>} : vector<16x64xf32>, vector<64x256xf32>, vector<16x256xf32> -> vector<16x256xf32>
    %252 = arith.addf %249, %251 : vector<16x256xf32>
    %c0_97 = arith.constant 0 : index
    %c0_98 = arith.constant 0 : index
    %253 = vector.load %arg7[%c0_97, %c0_98] : memref<1x256xf32, #tpu.memory_space<vmem>>, vector<1x256xf32>
    %254 = vector.broadcast %253 : vector<1x256xf32> to vector<16x256xf32>
    %255 = arith.addf %252, %254 : vector<16x256xf32>
    %256 = vector.shape_cast %255 : vector<16x256xf32> to vector<8x2x256xf32>
    %c0_99 = arith.constant 0 : index
    %c0_100 = arith.constant 0 : index
    %c0_101 = arith.constant 0 : index
    %257 = vector.load %arg19[%c0_99, %c0_100, %c0_101] : memref<8x2x256xf32, #tpu.memory_space<vmem>>, vector<8x2x256xf32>
    tpu.vector_store %arg19[%c0_99, %c0_100, %c0_101], %256 {strides = array<i32>} : memref<8x2x256xf32, #tpu.memory_space<vmem>>, vector<8x2x256xf32>,
    %c0_102 = arith.constant 0 : index
    %c0_103 = arith.constant 0 : index
    %258 = vector.load %arg6[%c0_102, %c0_103] : memref<64x256xf32, #tpu.memory_space<vmem>>, vector<64x256xf32>
    %c0_i32_104 = arith.constant 0 : i32
    %cst_105 = arith.constant dense<0.000000e+00> : vector<2x256xf32>
    %259 = tpu.matmul %0, %258, %cst_105 {dimension_numbers = #tpu.dot_dimension_numbers<[1], [0], [0], [1], [0, 0, 1, 1], [], []>} : vector<2x64xf32>, vector<64x256xf32>, vector<2x256xf32> -> vector<2x256xf32>
    %260 = arith.index_cast %c0_i32_104 : i32 to index
    %c0_106 = arith.constant 0 : index
    %c0_107 = arith.constant 0 : index
    %261 = vector.load %arg19[%260, %c0_106, %c0_107] : memref<8x2x256xf32, #tpu.memory_space<vmem>>, vector<1x2x256xf32>
    %262 = vector.shape_cast %261 : vector<1x2x256xf32> to vector<2x256xf32>
    %263 = arith.addf %259, %262 : vector<2x256xf32>
    %264 = arith.negf %263 : vector<2x256xf32>
    %265 = math.exp %264 : vector<2x256xf32>
    %cst_108 = arith.constant 1.000000e+00 : f32
    %266 = vector.broadcast %cst_108 : f32 to vector<2x256xf32>
    %267 = arith.addf %266, %265 : vector<2x256xf32>
    %268 = arith.divf %266, %267 : vector<2x256xf32>
    %269 = vector.extract_strided_slice %263 {offsets = [0, 128], sizes = [2, 64], strides = [1, 1]} : vector<2x256xf32> to vector<2x64xf32>
    %270 = math.tanh %269 : vector<2x64xf32>
    %271 = vector.extract_strided_slice %268 {offsets = [0, 64], sizes = [2, 64], strides = [1, 1]} : vector<2x256xf32> to vector<2x64xf32>
    %272 = arith.mulf %271, %1 : vector<2x64xf32>
    %273 = vector.extract_strided_slice %268 {offsets = [0, 0], sizes = [2, 64], strides = [1, 1]} : vector<2x256xf32> to vector<2x64xf32>
    %274 = arith.mulf %273, %270 : vector<2x64xf32>
    %275 = arith.addf %272, %274 : vector<2x64xf32>
    %276 = vector.extract_strided_slice %268 {offsets = [0, 192], sizes = [2, 64], strides = [1, 1]} : vector<2x256xf32> to vector<2x64xf32>
    %277 = math.tanh %275 : vector<2x64xf32>
    %278 = arith.mulf %276, %277 : vector<2x64xf32>
    %c1_i32_109 = arith.constant 1 : i32
    %cst_110 = arith.constant dense<0.000000e+00> : vector<2x256xf32>
    %279 = tpu.matmul %278, %258, %cst_110 {dimension_numbers = #tpu.dot_dimension_numbers<[1], [0], [0], [1], [0, 0, 1, 1], [], []>} : vector<2x64xf32>, vector<64x256xf32>, vector<2x256xf32> -> vector<2x256xf32>
    %280 = arith.index_cast %c1_i32_109 : i32 to index
    %c0_111 = arith.constant 0 : index
    %c0_112 = arith.constant 0 : index
    %281 = vector.load %arg19[%280, %c0_111, %c0_112] : memref<8x2x256xf32, #tpu.memory_space<vmem>>, vector<1x2x256xf32>
    %282 = vector.shape_cast %281 : vector<1x2x256xf32> to vector<2x256xf32>
    %283 = arith.addf %279, %282 : vector<2x256xf32>
    %284 = arith.negf %283 : vector<2x256xf32>
    %285 = math.exp %284 : vector<2x256xf32>
    %cst_113 = arith.constant 1.000000e+00 : f32
    %286 = vector.broadcast %cst_113 : f32 to vector<2x256xf32>
    %287 = arith.addf %286, %285 : vector<2x256xf32>
    %288 = arith.divf %286, %287 : vector<2x256xf32>
    %289 = vector.extract_strided_slice %283 {offsets = [0, 128], sizes = [2, 64], strides = [1, 1]} : vector<2x256xf32> to vector<2x64xf32>
    %290 = math.tanh %289 : vector<2x64xf32>
    %291 = vector.extract_strided_slice %288 {offsets = [0, 64], sizes = [2, 64], strides = [1, 1]} : vector<2x256xf32> to vector<2x64xf32>
    %292 = arith.mulf %291, %275 : vector<2x64xf32>
    %293 = vector.extract_strided_slice %288 {offsets = [0, 0], sizes = [2, 64], strides = [1, 1]} : vector<2x256xf32> to vector<2x64xf32>
    %294 = arith.mulf %293, %290 : vector<2x64xf32>
    %295 = arith.addf %292, %294 : vector<2x64xf32>
    %296 = vector.extract_strided_slice %288 {offsets = [0, 192], sizes = [2, 64], strides = [1, 1]} : vector<2x256xf32> to vector<2x64xf32>
    %297 = math.tanh %295 : vector<2x64xf32>
    %298 = arith.mulf %296, %297 : vector<2x64xf32>
    %c2_i32_114 = arith.constant 2 : i32
    %cst_115 = arith.constant dense<0.000000e+00> : vector<2x256xf32>
    %299 = tpu.matmul %298, %258, %cst_115 {dimension_numbers = #tpu.dot_dimension_numbers<[1], [0], [0], [1], [0, 0, 1, 1], [], []>} : vector<2x64xf32>, vector<64x256xf32>, vector<2x256xf32> -> vector<2x256xf32>
    %300 = arith.index_cast %c2_i32_114 : i32 to index
    %c0_116 = arith.constant 0 : index
    %c0_117 = arith.constant 0 : index
    %301 = vector.load %arg19[%300, %c0_116, %c0_117] : memref<8x2x256xf32, #tpu.memory_space<vmem>>, vector<1x2x256xf32>
    %302 = vector.shape_cast %301 : vector<1x2x256xf32> to vector<2x256xf32>
    %303 = arith.addf %299, %302 : vector<2x256xf32>
    %304 = arith.negf %303 : vector<2x256xf32>
    %305 = math.exp %304 : vector<2x256xf32>
    %cst_118 = arith.constant 1.000000e+00 : f32
    %306 = vector.broadcast %cst_118 : f32 to vector<2x256xf32>
    %307 = arith.addf %306, %305 : vector<2x256xf32>
    %308 = arith.divf %306, %307 : vector<2x256xf32>
    %309 = vector.extract_strided_slice %303 {offsets = [0, 128], sizes = [2, 64], strides = [1, 1]} : vector<2x256xf32> to vector<2x64xf32>
    %310 = math.tanh %309 : vector<2x64xf32>
    %311 = vector.extract_strided_slice %308 {offsets = [0, 64], sizes = [2, 64], strides = [1, 1]} : vector<2x256xf32> to vector<2x64xf32>
    %312 = arith.mulf %311, %295 : vector<2x64xf32>
    %313 = vector.extract_strided_slice %308 {offsets = [0, 0], sizes = [2, 64], strides = [1, 1]} : vector<2x256xf32> to vector<2x64xf32>
    %314 = arith.mulf %313, %310 : vector<2x64xf32>
    %315 = arith.addf %312, %314 : vector<2x64xf32>
    %316 = vector.extract_strided_slice %308 {offsets = [0, 192], sizes = [2, 64], strides = [1, 1]} : vector<2x256xf32> to vector<2x64xf32>
    %317 = math.tanh %315 : vector<2x64xf32>
    %318 = arith.mulf %316, %317 : vector<2x64xf32>
    %c3_i32_119 = arith.constant 3 : i32
    %cst_120 = arith.constant dense<0.000000e+00> : vector<2x256xf32>
    %319 = tpu.matmul %318, %258, %cst_120 {dimension_numbers = #tpu.dot_dimension_numbers<[1], [0], [0], [1], [0, 0, 1, 1], [], []>} : vector<2x64xf32>, vector<64x256xf32>, vector<2x256xf32> -> vector<2x256xf32>
    %320 = arith.index_cast %c3_i32_119 : i32 to index
    %c0_121 = arith.constant 0 : index
    %c0_122 = arith.constant 0 : index
    %321 = vector.load %arg19[%320, %c0_121, %c0_122] : memref<8x2x256xf32, #tpu.memory_space<vmem>>, vector<1x2x256xf32>
    %322 = vector.shape_cast %321 : vector<1x2x256xf32> to vector<2x256xf32>
    %323 = arith.addf %319, %322 : vector<2x256xf32>
    %324 = arith.negf %323 : vector<2x256xf32>
    %325 = math.exp %324 : vector<2x256xf32>
    %cst_123 = arith.constant 1.000000e+00 : f32
    %326 = vector.broadcast %cst_123 : f32 to vector<2x256xf32>
    %327 = arith.addf %326, %325 : vector<2x256xf32>
    %328 = arith.divf %326, %327 : vector<2x256xf32>
    %329 = vector.extract_strided_slice %323 {offsets = [0, 128], sizes = [2, 64], strides = [1, 1]} : vector<2x256xf32> to vector<2x64xf32>
    %330 = math.tanh %329 : vector<2x64xf32>
    %331 = vector.extract_strided_slice %328 {offsets = [0, 64], sizes = [2, 64], strides = [1, 1]} : vector<2x256xf32> to vector<2x64xf32>
    %332 = arith.mulf %331, %315 : vector<2x64xf32>
    %333 = vector.extract_strided_slice %328 {offsets = [0, 0], sizes = [2, 64], strides = [1, 1]} : vector<2x256xf32> to vector<2x64xf32>
    %334 = arith.mulf %333, %330 : vector<2x64xf32>
    %335 = arith.addf %332, %334 : vector<2x64xf32>
    %336 = vector.extract_strided_slice %328 {offsets = [0, 192], sizes = [2, 64], strides = [1, 1]} : vector<2x256xf32> to vector<2x64xf32>
    %337 = math.tanh %335 : vector<2x64xf32>
    %338 = arith.mulf %336, %337 : vector<2x64xf32>
    %c4_i32_124 = arith.constant 4 : i32
    %cst_125 = arith.constant dense<0.000000e+00> : vector<2x256xf32>
    %339 = tpu.matmul %338, %258, %cst_125 {dimension_numbers = #tpu.dot_dimension_numbers<[1], [0], [0], [1], [0, 0, 1, 1], [], []>} : vector<2x64xf32>, vector<64x256xf32>, vector<2x256xf32> -> vector<2x256xf32>
    %340 = arith.index_cast %c4_i32_124 : i32 to index
    %c0_126 = arith.constant 0 : index
    %c0_127 = arith.constant 0 : index
    %341 = vector.load %arg19[%340, %c0_126, %c0_127] : memref<8x2x256xf32, #tpu.memory_space<vmem>>, vector<1x2x256xf32>
    %342 = vector.shape_cast %341 : vector<1x2x256xf32> to vector<2x256xf32>
    %343 = arith.addf %339, %342 : vector<2x256xf32>
    %344 = arith.negf %343 : vector<2x256xf32>
    %345 = math.exp %344 : vector<2x256xf32>
    %cst_128 = arith.constant 1.000000e+00 : f32
    %346 = vector.broadcast %cst_128 : f32 to vector<2x256xf32>
    %347 = arith.addf %346, %345 : vector<2x256xf32>
    %348 = arith.divf %346, %347 : vector<2x256xf32>
    %349 = vector.extract_strided_slice %343 {offsets = [0, 128], sizes = [2, 64], strides = [1, 1]} : vector<2x256xf32> to vector<2x64xf32>
    %350 = math.tanh %349 : vector<2x64xf32>
    %351 = vector.extract_strided_slice %348 {offsets = [0, 64], sizes = [2, 64], strides = [1, 1]} : vector<2x256xf32> to vector<2x64xf32>
    %352 = arith.mulf %351, %335 : vector<2x64xf32>
    %353 = vector.extract_strided_slice %348 {offsets = [0, 0], sizes = [2, 64], strides = [1, 1]} : vector<2x256xf32> to vector<2x64xf32>
    %354 = arith.mulf %353, %350 : vector<2x64xf32>
    %355 = arith.addf %352, %354 : vector<2x64xf32>
    %356 = vector.extract_strided_slice %348 {offsets = [0, 192], sizes = [2, 64], strides = [1, 1]} : vector<2x256xf32> to vector<2x64xf32>
    %357 = math.tanh %355 : vector<2x64xf32>
    %358 = arith.mulf %356, %357 : vector<2x64xf32>
    %c5_i32_129 = arith.constant 5 : i32
    %cst_130 = arith.constant dense<0.000000e+00> : vector<2x256xf32>
    %359 = tpu.matmul %358, %258, %cst_130 {dimension_numbers = #tpu.dot_dimension_numbers<[1], [0], [0], [1], [0, 0, 1, 1], [], []>} : vector<2x64xf32>, vector<64x256xf32>, vector<2x256xf32> -> vector<2x256xf32>
    %360 = arith.index_cast %c5_i32_129 : i32 to index
    %c0_131 = arith.constant 0 : index
    %c0_132 = arith.constant 0 : index
    %361 = vector.load %arg19[%360, %c0_131, %c0_132] : memref<8x2x256xf32, #tpu.memory_space<vmem>>, vector<1x2x256xf32>
    %362 = vector.shape_cast %361 : vector<1x2x256xf32> to vector<2x256xf32>
    %363 = arith.addf %359, %362 : vector<2x256xf32>
    %364 = arith.negf %363 : vector<2x256xf32>
    %365 = math.exp %364 : vector<2x256xf32>
    %cst_133 = arith.constant 1.000000e+00 : f32
    %366 = vector.broadcast %cst_133 : f32 to vector<2x256xf32>
    %367 = arith.addf %366, %365 : vector<2x256xf32>
    %368 = arith.divf %366, %367 : vector<2x256xf32>
    %369 = vector.extract_strided_slice %363 {offsets = [0, 128], sizes = [2, 64], strides = [1, 1]} : vector<2x256xf32> to vector<2x64xf32>
    %370 = math.tanh %369 : vector<2x64xf32>
    %371 = vector.extract_strided_slice %368 {offsets = [0, 64], sizes = [2, 64], strides = [1, 1]} : vector<2x256xf32> to vector<2x64xf32>
    %372 = arith.mulf %371, %355 : vector<2x64xf32>
    %373 = vector.extract_strided_slice %368 {offsets = [0, 0], sizes = [2, 64], strides = [1, 1]} : vector<2x256xf32> to vector<2x64xf32>
    %374 = arith.mulf %373, %370 : vector<2x64xf32>
    %375 = arith.addf %372, %374 : vector<2x64xf32>
    %376 = vector.extract_strided_slice %368 {offsets = [0, 192], sizes = [2, 64], strides = [1, 1]} : vector<2x256xf32> to vector<2x64xf32>
    %377 = math.tanh %375 : vector<2x64xf32>
    %378 = arith.mulf %376, %377 : vector<2x64xf32>
    %c6_i32_134 = arith.constant 6 : i32
    %cst_135 = arith.constant dense<0.000000e+00> : vector<2x256xf32>
    %379 = tpu.matmul %378, %258, %cst_135 {dimension_numbers = #tpu.dot_dimension_numbers<[1], [0], [0], [1], [0, 0, 1, 1], [], []>} : vector<2x64xf32>, vector<64x256xf32>, vector<2x256xf32> -> vector<2x256xf32>
    %380 = arith.index_cast %c6_i32_134 : i32 to index
    %c0_136 = arith.constant 0 : index
    %c0_137 = arith.constant 0 : index
    %381 = vector.load %arg19[%380, %c0_136, %c0_137] : memref<8x2x256xf32, #tpu.memory_space<vmem>>, vector<1x2x256xf32>
    %382 = vector.shape_cast %381 : vector<1x2x256xf32> to vector<2x256xf32>
    %383 = arith.addf %379, %382 : vector<2x256xf32>
    %384 = arith.negf %383 : vector<2x256xf32>
    %385 = math.exp %384 : vector<2x256xf32>
    %cst_138 = arith.constant 1.000000e+00 : f32
    %386 = vector.broadcast %cst_138 : f32 to vector<2x256xf32>
    %387 = arith.addf %386, %385 : vector<2x256xf32>
    %388 = arith.divf %386, %387 : vector<2x256xf32>
    %389 = vector.extract_strided_slice %383 {offsets = [0, 128], sizes = [2, 64], strides = [1, 1]} : vector<2x256xf32> to vector<2x64xf32>
    %390 = math.tanh %389 : vector<2x64xf32>
    %391 = vector.extract_strided_slice %388 {offsets = [0, 64], sizes = [2, 64], strides = [1, 1]} : vector<2x256xf32> to vector<2x64xf32>
    %392 = arith.mulf %391, %375 : vector<2x64xf32>
    %393 = vector.extract_strided_slice %388 {offsets = [0, 0], sizes = [2, 64], strides = [1, 1]} : vector<2x256xf32> to vector<2x64xf32>
    %394 = arith.mulf %393, %390 : vector<2x64xf32>
    %395 = arith.addf %392, %394 : vector<2x64xf32>
    %396 = vector.extract_strided_slice %388 {offsets = [0, 192], sizes = [2, 64], strides = [1, 1]} : vector<2x256xf32> to vector<2x64xf32>
    %397 = math.tanh %395 : vector<2x64xf32>
    %398 = arith.mulf %396, %397 : vector<2x64xf32>
    %c7_i32_139 = arith.constant 7 : i32
    %cst_140 = arith.constant dense<0.000000e+00> : vector<2x256xf32>
    %399 = tpu.matmul %398, %258, %cst_140 {dimension_numbers = #tpu.dot_dimension_numbers<[1], [0], [0], [1], [0, 0, 1, 1], [], []>} : vector<2x64xf32>, vector<64x256xf32>, vector<2x256xf32> -> vector<2x256xf32>
    %400 = arith.index_cast %c7_i32_139 : i32 to index
    %c0_141 = arith.constant 0 : index
    %c0_142 = arith.constant 0 : index
    %401 = vector.load %arg19[%400, %c0_141, %c0_142] : memref<8x2x256xf32, #tpu.memory_space<vmem>>, vector<1x2x256xf32>
    %402 = vector.shape_cast %401 : vector<1x2x256xf32> to vector<2x256xf32>
    %403 = arith.addf %399, %402 : vector<2x256xf32>
    %404 = arith.negf %403 : vector<2x256xf32>
    %405 = math.exp %404 : vector<2x256xf32>
    %cst_143 = arith.constant 1.000000e+00 : f32
    %406 = vector.broadcast %cst_143 : f32 to vector<2x256xf32>
    %407 = arith.addf %406, %405 : vector<2x256xf32>
    %408 = arith.divf %406, %407 : vector<2x256xf32>
    %409 = vector.extract_strided_slice %403 {offsets = [0, 128], sizes = [2, 64], strides = [1, 1]} : vector<2x256xf32> to vector<2x64xf32>
    %410 = math.tanh %409 : vector<2x64xf32>
    %411 = vector.extract_strided_slice %408 {offsets = [0, 64], sizes = [2, 64], strides = [1, 1]} : vector<2x256xf32> to vector<2x64xf32>
    %412 = arith.mulf %411, %395 : vector<2x64xf32>
    %413 = vector.extract_strided_slice %408 {offsets = [0, 0], sizes = [2, 64], strides = [1, 1]} : vector<2x256xf32> to vector<2x64xf32>
    %414 = arith.mulf %413, %410 : vector<2x64xf32>
    %415 = arith.addf %412, %414 : vector<2x64xf32>
    %416 = vector.extract_strided_slice %408 {offsets = [0, 192], sizes = [2, 64], strides = [1, 1]} : vector<2x256xf32> to vector<2x64xf32>
    %417 = math.tanh %415 : vector<2x64xf32>
    %418 = arith.mulf %416, %417 : vector<2x64xf32>
    %c8_i32_144 = arith.constant 8 : i32
    %c0_145 = arith.constant 0 : index
    %c0_146 = arith.constant 0 : index
    %419 = vector.load %arg11[%c0_145, %c0_146] : memref<1x64xf32, #tpu.memory_space<vmem>>, vector<1x64xf32>
    %cst_147 = arith.constant 9.99999974E-6 : f32
    %420 = vector.broadcast %cst_147 : f32 to vector<1x64xf32>
    %421 = arith.addf %419, %420 : vector<1x64xf32>
    %422 = math.rsqrt %421 : vector<1x64xf32>
    %c0_148 = arith.constant 0 : index
    %c0_149 = arith.constant 0 : index
    %423 = vector.load %arg10[%c0_148, %c0_149] : memref<1x64xf32, #tpu.memory_space<vmem>>, vector<1x64xf32>
    %424 = vector.broadcast %423 : vector<1x64xf32> to vector<2x64xf32>
    %425 = arith.subf %418, %424 : vector<2x64xf32>
    %426 = vector.broadcast %422 : vector<1x64xf32> to vector<2x64xf32>
    %427 = arith.mulf %425, %426 : vector<2x64xf32>
    %c0_150 = arith.constant 0 : index
    %c0_151 = arith.constant 0 : index
    %428 = vector.load %arg8[%c0_150, %c0_151] : memref<1x64xf32, #tpu.memory_space<vmem>>, vector<1x64xf32>
    %429 = vector.broadcast %428 : vector<1x64xf32> to vector<2x64xf32>
    %430 = arith.mulf %427, %429 : vector<2x64xf32>
    %c0_152 = arith.constant 0 : index
    %c0_153 = arith.constant 0 : index
    %431 = vector.load %arg9[%c0_152, %c0_153] : memref<1x64xf32, #tpu.memory_space<vmem>>, vector<1x64xf32>
    %432 = vector.broadcast %431 : vector<1x64xf32> to vector<2x64xf32>
    %433 = arith.addf %430, %432 : vector<2x64xf32>
    %c0_154 = arith.constant 0 : index
    %c0_155 = arith.constant 0 : index
    %434 = vector.load %arg12[%c0_154, %c0_155] : memref<64x32xf32, #tpu.memory_space<vmem>>, vector<64x32xf32>
    %cst_156 = arith.constant dense<0.000000e+00> : vector<2x32xf32>
    %435 = tpu.matmul %433, %434, %cst_156 {dimension_numbers = #tpu.dot_dimension_numbers<[1], [0], [0], [1], [0, 0, 1, 1], [], []>} : vector<2x64xf32>, vector<64x32xf32>, vector<2x32xf32> -> vector<2x32xf32>
    %c0_157 = arith.constant 0 : index
    %c0_158 = arith.constant 0 : index
    %436 = vector.load %arg13[%c0_157, %c0_158] : memref<1x32xf32, #tpu.memory_space<vmem>>, vector<1x32xf32>
    %437 = vector.broadcast %436 : vector<1x32xf32> to vector<2x32xf32>
    %438 = arith.addf %435, %437 : vector<2x32xf32>
    %cst_159 = arith.constant 0.000000e+00 : f32
    %439 = vector.broadcast %cst_159 : f32 to vector<2x32xf32>
    %440 = arith.maximumf %438, %439 : vector<2x32xf32>
    %c0_160 = arith.constant 0 : index
    %c0_161 = arith.constant 0 : index
    %441 = vector.load %arg14[%c0_160, %c0_161] : memref<32x1xf32, #tpu.memory_space<vmem>>, vector<32x1xf32>
    %cst_162 = arith.constant dense<0.000000e+00> : vector<2x1xf32>
    %442 = tpu.matmul %440, %441, %cst_162 {dimension_numbers = #tpu.dot_dimension_numbers<[1], [0], [0], [1], [0, 0, 1, 1], [], []>} : vector<2x32xf32>, vector<32x1xf32>, vector<2x1xf32> -> vector<2x1xf32>
    %c0_163 = arith.constant 0 : index
    %c0_164 = arith.constant 0 : index
    %443 = vector.load %arg15[%c0_163, %c0_164] : memref<1x1xf32, #tpu.memory_space<vmem>>, vector<1x1xf32>
    %444 = vector.broadcast %443 : vector<1x1xf32> to vector<2x1xf32>
    %445 = arith.addf %442, %444 : vector<2x1xf32>
    %c0_165 = arith.constant 0 : index
    %c0_166 = arith.constant 0 : index
    %446 = vector.load %arg16[%c0_165, %c0_166] : memref<2x1xf32, #tpu.memory_space<vmem>>, vector<2x1xf32>
    tpu.vector_store %arg16[%c0_165, %c0_166], %445 {strides = array<i32>} : memref<2x1xf32, #tpu.memory_space<vmem>>, vector<2x1xf32>,
    return
  }
}

</mosaic_0001>

<llo_original>
// kernel: tpu_custom_call.1
$region0: #{tpu_custom_call.1}
  #allocation0 [shape = 'u32[]', space=smem, size = 0x4, offset = 0x4, fixed_abs, tag = 'smem constant byte address 0x4 - core index']
  #allocation1 [shape = 'u32[144,128]{1,0:T(1,128)}', space=vmem, size = 0x12000, scoped, tag = 'internal scratch']
  #allocation2 [shape = 'f32[8,2,64]{2,1,0:T(2,128)}', space=vmem, size = 0x2000, scoped, tag = 'scratch operand']
  #allocation3 [shape = 'f32[8,2,64]{2,1,0:T(2,128)}', space=vmem, size = 0x2000, scoped, tag = 'scratch operand']
  #allocation4 [shape = 'f32[8,2,256]{2,1,0:T(2,128)}', space=vmem, size = 0x4000, scoped, tag = 'scratch operand']
  #allocation5 [shape = 'f32[1,1]{1,0:T(1,128)S(1)}', space=vmem, size = 0x200, scoped, tag = 'scoped memory for tpu_custom_call.1']
  %s0 = inlined_call_operand.vmem [shape: f32[8,2,4], index: 0, kind: input, shape index: {}]
  %s1 = inlined_call_operand.vmem [shape: f32[4,256], index: 1, kind: input, shape index: {}]
  %s2 = inlined_call_operand.vmem [shape: f32[64,256], index: 2, kind: input, shape index: {}]
  %s3 = inlined_call_operand.hbm [shape: f32[1,256], index: 3, kind: input, shape index: {}]
  %s4 = inlined_call_operand.hbm [shape: f32[64,256], index: 4, kind: input, shape index: {}]
  %s5 = inlined_call_operand.hbm [shape: f32[64,256], index: 5, kind: input, shape index: {}]
  %s6 = inlined_call_operand.hbm [shape: f32[64,256], index: 6, kind: input, shape index: {}]
  %s7 = inlined_call_operand.vmem [shape: f32[1,256], index: 7, kind: input, shape index: {}]
  %s8 = inlined_call_operand.vmem [shape: f32[1,64], index: 8, kind: input, shape index: {}]
  %s9 = inlined_call_operand.vmem [shape: f32[1,64], index: 9, kind: input, shape index: {}]
  %s10 = inlined_call_operand.vmem [shape: f32[1,64], index: 10, kind: input, shape index: {}]
  %s11 = inlined_call_operand.vmem [shape: f32[1,64], index: 11, kind: input, shape index: {}]
  %s12 = inlined_call_operand.vmem [shape: f32[64,32], index: 12, kind: input, shape index: {}]
  %s13 = inlined_call_operand.vmem [shape: f32[1,32], index: 13, kind: input, shape index: {}]
  %s14 = inlined_call_operand.vmem [shape: f32[32,1], index: 14, kind: input, shape index: {}]
  %s15 = inlined_call_operand.<no memory space> [shape: f32[1,1], index: 15, kind: input, shape index: {}]
  %s16 = inlined_call_operand.vmem [shape: f32[2,1], index: 16, kind: output, shape index: {}]
  %s17 = sld [smem:[#allocation0]]
  $region90: #{tpu_custom_call.1} parent=0
    _
  %s19 = ssub.s32 1, %s17
  %s20 = scalar_select 0, %s19, %s17
  %v21 = vstv %s15
  %22 = vst [vmem:[#allocation5] sm:$0x1] %v21
  $region1: #{tpu_custom_call.1} parent=0
    #allocation6 [shape = 'u8[1024]{0}', space=vmem, size = 0x400, scoped, tag = 'input window, operand 3, single buffered']
    #allocation7 [shape = 's32[1]{0}', space=sflag, size = 0x4, scoped, tag = 'scoped memory for tpu_custom_call.1']
    #allocation8 [shape = 'u8[65536]{0}', space=vmem, size = 0x10000, scoped, tag = 'input window, operand 4, single buffered']
    #allocation9 [shape = 's32[1]{0}', space=sflag, size = 0x4, scoped, tag = 'scoped memory for tpu_custom_call.1']
    #allocation10 [shape = 'u8[65536]{0}', space=vmem, size = 0x10000, scoped, tag = 'input window, operand 5, single buffered']
    #allocation11 [shape = 'u8[65536]{0}', space=vmem, size = 0x10000, scoped, tag = 'input window, operand 6, single buffered']
    #allocation12 [shape = 's32[1]{0}', space=sflag, size = 0x4, scoped, tag = 'scoped memory for tpu_custom_call.1']
    %23 = vsyncpa [#allocation7], 0
    %24 = vsyncpa [#allocation9], 0
    %25 = vsyncpa [#allocation12], 0
    // Predicated region
    $region2: #{tpu_custom_call.1} parent=1 // pred_check
      _
    $region3: #{tpu_custom_call.1} parent=1 // pred_check_branch
      %27 = sbr.rel (0) target = $region5
    $region4: #{tpu_custom_call.1} parent=1 // pred_region
      _
    $region5: #{tpu_custom_call.1} parent=1 // pred_fallthru
      _
    // Predicated region
    $region6: #{tpu_custom_call.1} parent=1 // pred_check
      _
    $region7: #{tpu_custom_call.1} parent=1 // pred_check_branch
      %29 = sbr.rel (0) target = $region9
    $region8: #{tpu_custom_call.1} parent=1 // pred_region
      _
    $region9: #{tpu_custom_call.1} parent=1 // pred_fallthru
      _
    // Predicated region
    $region10: #{tpu_custom_call.1} parent=1 // pred_check
      _
    $region11: #{tpu_custom_call.1} parent=1 // pred_check_branch
      %31 = sbr.rel (0) target = $region13
    $region12: #{tpu_custom_call.1} parent=1 // pred_region
      _
    $region13: #{tpu_custom_call.1} parent=1 // pred_fallthru
      _
    // Predicated region
    $region14: #{tpu_custom_call.1} parent=1 // pred_check
      _
    $region15: #{tpu_custom_call.1} parent=1 // pred_check_branch
      %33 = sbr.rel (0) target = $region17
    $region16: #{tpu_custom_call.1} parent=1 // pred_region
      %s35 = ssub.s32 32, 32
      %36 = vsyncadd [#allocation7], %s35
      %s38 = sshll.u32 [#allocation6], 4
      %s39 = int_to_ptr.vmem [resolvable:$true] %s38
      %41 = dma.hbm_to_vmem [thread:$0]  %s3, 32, %s39, [#allocation7]
    $region17: #{tpu_custom_call.1} parent=1 // pred_fallthru
      _
    // Predicated region
    $region18: #{tpu_custom_call.1} parent=1 // pred_check
      _
    $region19: #{tpu_custom_call.1} parent=1 // pred_check_branch
      %43 = sbr.rel (0) target = $region21
    $region20: #{tpu_custom_call.1} parent=1 // pred_region
      %s45 = ssub.s32 2048, 2048
      %46 = vsyncadd [#allocation9], %s45
      %s47 = sshll.u32 [#allocation8], 4
      %s48 = int_to_ptr.vmem [resolvable:$true] %s47
      %53 = dma.hbm_to_vmem [thread:$0]  %s4, 2048, %s48, [#allocation9], 256, 256, 16
    $region21: #{tpu_custom_call.1} parent=1 // pred_fallthru
      _
    // Predicated region
    $region22: #{tpu_custom_call.1} parent=1 // pred_check
      _
    $region23: #{tpu_custom_call.1} parent=1 // pred_check_branch
      %55 = sbr.rel (0) target = $region25
    $region24: #{tpu_custom_call.1} parent=1 // pred_region
      %s57 = ssub.s32 2048, 2048
      %58 = vsyncadd [#allocation9], %s57
      %s59 = sshll.u32 [#allocation10], 4
      %s60 = int_to_ptr.vmem [resolvable:$true] %s59
      %65 = dma.hbm_to_vmem [thread:$0]  %s5, 2048, %s60, [#allocation9], 256, 256, 16
    $region25: #{tpu_custom_call.1} parent=1 // pred_fallthru
      _
    // Predicated region
    $region26: #{tpu_custom_call.1} parent=1 // pred_check
      _
    $region27: #{tpu_custom_call.1} parent=1 // pred_check_branch
      %67 = sbr.rel (0) target = $region29
    $region28: #{tpu_custom_call.1} parent=1 // pred_region
      %s69 = ssub.s32 2048, 2048
      %70 = vsyncadd [#allocation12], %s69
      %s71 = sshll.u32 [#allocation11], 4
      %s72 = int_to_ptr.vmem [resolvable:$true] %s71
      %77 = dma.hbm_to_vmem [thread:$0]  %s6, 2048, %s72, [#allocation12], 256, 256, 16
    $region29: #{tpu_custom_call.1} parent=1 // pred_fallthru
      _
    // Predicated region
    $region30: #{tpu_custom_call.1} parent=1 // pred_check
      _
    $region31: #{tpu_custom_call.1} parent=1 // pred_check_branch
      %79 = sbr.rel (0) target = $region33
    $region32: #{tpu_custom_call.1} parent=1 // pred_region
      _
    $region33: #{tpu_custom_call.1} parent=1 // pred_fallthru
      _
    // Predicated region
    $region34: #{tpu_custom_call.1} parent=1 // pred_check
      _
    $region35: #{tpu_custom_call.1} parent=1 // pred_check_branch
      %81 = sbr.rel (0) target = $region37
    $region36: #{tpu_custom_call.1} parent=1 // pred_region
      _
    $region37: #{tpu_custom_call.1} parent=1 // pred_fallthru
      _
    // Predicated region
    $region38: #{tpu_custom_call.1} parent=1 // pred_check
      _
    $region39: #{tpu_custom_call.1} parent=1 // pred_check_branch
      %83 = sbr.rel (0) target = $region41
    $region40: #{tpu_custom_call.1} parent=1 // pred_region
      _
    $region41: #{tpu_custom_call.1} parent=1 // pred_fallthru
      _
    // Predicated region
    $region42: #{tpu_custom_call.1} parent=1 // pred_check
      _
    $region43: #{tpu_custom_call.1} parent=1 // pred_check_branch
      %85 = sbr.rel (0) target = $region45
    $region44: #{tpu_custom_call.1} parent=1 // pred_region
      _
    $region45: #{tpu_custom_call.1} parent=1 // pred_fallthru
      _
    // Predicated region
    $region46: #{tpu_custom_call.1} parent=1 // pred_check
      _
    $region47: #{tpu_custom_call.1} parent=1 // pred_check_branch
      %87 = sbr.rel (0) target = $region49
    $region48: #{tpu_custom_call.1} parent=1 // pred_region
      _
    $region49: #{tpu_custom_call.1} parent=1 // pred_fallthru
      _
    // Predicated region
    $region50: #{tpu_custom_call.1} parent=1 // pred_check
      _
    $region51: #{tpu_custom_call.1} parent=1 // pred_check_branch
      %89 = sbr.rel (0) target = $region53
    $region52: #{tpu_custom_call.1} parent=1 // pred_region
      _
    $region53: #{tpu_custom_call.1} parent=1 // pred_fallthru
      _
    // Predicated region
    $region54: #{tpu_custom_call.1} parent=1 // pred_check
      _
    $region55: #{tpu_custom_call.1} parent=1 // pred_check_branch
      %91 = sbr.rel (0) target = $region57
    $region56: #{tpu_custom_call.1} parent=1 // pred_region
      _
    $region57: #{tpu_custom_call.1} parent=1 // pred_fallthru
      _
    // Predicated region
    $region58: #{tpu_custom_call.1} parent=1 // pred_check
      _
    $region59: #{tpu_custom_call.1} parent=1 // pred_check_branch
      %93 = sbr.rel (0) target = $region61
    $region60: #{tpu_custom_call.1} parent=1 // pred_region
      _
    $region61: #{tpu_custom_call.1} parent=1 // pred_fallthru
      _
    // Predicated region
    $region62: #{tpu_custom_call.1} parent=1 // pred_check
      _
    $region63: #{tpu_custom_call.1} parent=1 // pred_check_branch
      %95 = sbr.rel (0) target = $region65
    $region64: #{tpu_custom_call.1} parent=1 // pred_region
      _
    $region65: #{tpu_custom_call.1} parent=1 // pred_fallthru
      _
    // Predicated region
    $region66: #{tpu_custom_call.1} parent=1 // pred_check
      _
    $region67: #{tpu_custom_call.1} parent=1 // pred_check_branch
      %97 = sbr.rel (0) target = $region69
    $region68: #{tpu_custom_call.1} parent=1 // pred_region
      %98 = dma.done [#allocation7], 32
    $region69: #{tpu_custom_call.1} parent=1 // pred_fallthru
      _
    // Predicated region
    $region70: #{tpu_custom_call.1} parent=1 // pred_check
      _
    $region71: #{tpu_custom_call.1} parent=1 // pred_check_branch
      %100 = sbr.rel (0) target = $region73
    $region72: #{tpu_custom_call.1} parent=1 // pred_region
      %101 = dma.done [#allocation9], 2048
    $region73: #{tpu_custom_call.1} parent=1 // pred_fallthru
      _
    // Predicated region
    $region74: #{tpu_custom_call.1} parent=1 // pred_check
      _
    $region75: #{tpu_custom_call.1} parent=1 // pred_check_branch
      %103 = sbr.rel (0) target = $region77
    $region76: #{tpu_custom_call.1} parent=1 // pred_region
      %104 = dma.done [#allocation9], 2048
    $region77: #{tpu_custom_call.1} parent=1 // pred_fallthru
      _
    // Predicated region
    $region78: #{tpu_custom_call.1} parent=1 // pred_check
      _
    $region79: #{tpu_custom_call.1} parent=1 // pred_check_branch
      %106 = sbr.rel (0) target = $region81
    $region80: #{tpu_custom_call.1} parent=1 // pred_region
      %107 = dma.done [#allocation12], 2048
    $region81: #{tpu_custom_call.1} parent=1 // pred_fallthru
      _
    %v108 = vld [vmem:[%s0] sm:$0x3]
    %v109 = vld [vmem:[%s0 + $0x2] sm:$0x3]
    %v110 = vld [vmem:[%s0 + $0x4] sm:$0x3]
    %v111 = vld [vmem:[%s0 + $0x6] sm:$0x3]
    %v112 = vld [vmem:[%s0 + $0x8] sm:$0x3]
    %v113 = vld [vmem:[%s0 + $0xa] sm:$0x3]
    %v114 = vld [vmem:[%s0 + $0xc] sm:$0x3]
    %v115 = vld [vmem:[%s0 + $0xe] sm:$0x3]
    %v116 = vld [vmem:[%s1] sm:$0xff]
    %v117 = vld [vmem:[#allocation6] sm:$0x3]
    %v119 = vlaneseq
    %v120 = vshrl.u32 %v119, 7
    %v121 = vsub.s32 0, %v120
    %v122 = vrot.slane %v117, %v121
    %v123 = vlaneseq
    %v124 = vshrl.u32 %v123, 7
    %v125 = vsub.s32 1, %v124
    %v126 = vrot.slane %v117, %v125
    %v137 = vcombine.low %v108, %v109
    %v138 = vcombine.low %v110, %v111
    %v140 = vunpack.c.l.s4 1983009808
    %v141 = vunpack.c.0.s8 %v140
    %v142 = vlaneseq
    %v143 = vshrl.u32 %v142, 7
    %v144 = vsub.s32 %v141, %v143
    %v145 = vrot.slane %v137, %v144
    %v147 = vunpack.c.l.s4 1983009808
    %v148 = vunpack.c.0.s8 %v147
    %v149 = vlaneseq
    %v150 = vshrl.u32 %v149, 7
    %v151 = vsub.s32 %v148, %v150
    %v152 = vrot.slane %v138, %v151
    %v153 = vcombine.low %v145, %v152
    %v154 = vcombine.low %v112, %v113
    %v155 = vcombine.low %v114, %v115
    %v157 = vunpack.c.l.s4 1983009808
    %v158 = vunpack.c.0.s8 %v157
    %v159 = vlaneseq
    %v160 = vshrl.u32 %v159, 7
    %v161 = vsub.s32 %v158, %v160
    %v162 = vrot.slane %v154, %v161
    %v164 = vunpack.c.l.s4 1983009808
    %v165 = vunpack.c.0.s8 %v164
    %v166 = vlaneseq
    %v167 = vshrl.u32 %v166, 7
    %v168 = vsub.s32 %v165, %v167
    %v169 = vrot.slane %v155, %v168
    %v170 = vcombine.low %v162, %v169
    %v172 = vcombine.high %v116, %v116
    %vm173 = vcmask 31744
    %v174 = vsel %vm173, %v153, 0
    %v176 = vsel %vm173, %v170, 0
    %vm178 = vcmask 1043456
    %v179 = vsel %vm178, %v116, 0
    %v181 = vsel %vm178, %v172, 0
    %183 = vmatprep.subr.mxu0 %v181
    %184 = vmatpush1.msra.mxu0 %v179
    %185 = vmatprep.subr.mxu0 0.0
    %186 = vmatpush1.msra.mxu0 0.0
    %187 = vmatprep.subr.mxu0 0.0
    %188 = vmatpush1.msra.mxu0 0.0
    %189 = vmatprep.subr.mxu0 0.0
    %190 = vmatpush1.msra.mxu0 0.0
    %191 = vmatprep.subr.mxu0 0.0
    %192 = vmatpush1.msra.mxu0 0.0
    %193 = vmatprep.subr.mxu0 0.0
    %194 = vmatpush1.msra.mxu0 0.0
    %195 = vmatprep.subr.mxu0 0.0
    %196 = vmatpush1.msra.mxu0 0.0
    %197 = vmatprep.subr.mxu0 0.0
    %198 = vmatpush1.msra.mxu0 0.0
    %199 = vmatprep.subr.mxu0 0.0
    %200 = vmatpush1.msra.mxu0 0.0
    %201 = vmatprep.subr.mxu0 0.0
    %202 = vmatpush1.msra.mxu0 0.0
    %203 = vmatprep.subr.mxu0 0.0
    %204 = vmatpush1.msra.mxu0 0.0
    %205 = vmatprep.subr.mxu0 0.0
    %206 = vmatpush1.msra.mxu0 0.0
    %207 = vmatprep.subr.mxu0 0.0
    %208 = vmatpush1.msra.mxu0 0.0
    %209 = vmatprep.subr.mxu0 0.0
    %210 = vmatpush1.msra.mxu0 0.0
    %211 = vmatprep.subr.mxu0 0.0
    %212 = vmatpush1.msra.mxu0 0.0
    %213 = vmatprep.subr.mxu0 0.0
    %214 = vmatpush1.msra.mxu0 0.0
    %215 = vmatprep.subr.mxu0 0.0
    %216 = vmatpush1.msra.mxu0 0.0
    %217 = vmatprep.subr.mxu0 0.0
    %218 = vmatpush1.msra.mxu0 0.0
    %219 = vmatprep.subr.mxu0 0.0
    %220 = vmatpush1.msra.mxu0 0.0
    %221 = vmatprep.subr.mxu0 0.0
    %222 = vmatpush1.msra.mxu0 0.0
    %223 = vmatprep.subr.mxu0 0.0
    %224 = vmatpush1.msra.mxu0 0.0
    %225 = vmatprep.subr.mxu0 0.0
    %226 = vmatpush1.msra.mxu0 0.0
    %227 = vmatprep.subr.mxu0 0.0
    %228 = vmatpush1.msra.mxu0 0.0
    %229 = vmatprep.subr.mxu0 0.0
    %230 = vmatpush1.msra.mxu0 0.0
    %231 = vmatprep.subr.mxu0 0.0
    %232 = vmatpush1.msra.mxu0 0.0
    %233 = vmatprep.subr.mxu0 0.0
    %234 = vmatpush1.msra.mxu0 0.0
    %235 = vmatprep.subr.mxu0 0.0
    %236 = vmatpush1.msra.mxu0 0.0
    %237 = vmatprep.subr.mxu0 0.0
    %238 = vmatpush1.msra.mxu0 0.0
    %239 = vmatprep.subr.mxu0 0.0
    %240 = vmatpush1.msra.mxu0 0.0
    %241 = vmatprep.subr.mxu0 0.0
    %242 = vmatpush1.msra.mxu0 0.0
    %243 = vmatprep.subr.mxu0 0.0
    %244 = vmatpush1.msra.mxu0 0.0
    %245 = vmatprep.subr.mxu0 0.0
    %246 = vmatpush1.msra.mxu0 0.0
    %247 = vmatprep.mubr.f32.mxu0 0.0
    %248 = vmatmul.mubr.f32.gmra.mrb[0].mxu0 %v174
    %v249 = vpop.f32.mrb[0].mxu0
    %v250 = vadd.f32 %v122, %v249
    %v251 = vpop.f32.mrb[0].mxu0
    %v252 = vadd.f32 %v126, %v251
    %253 = vmatprep.mubr.f32.mxu0 0.0
    %254 = vmatmul.mubr.f32.gmra.mrb[0].mxu0 %v176
    %v255 = vpop.f32.mrb[0].mxu0
    %v256 = vadd.f32 %v122, %v255
    %v257 = vpop.f32.mrb[0].mxu0
    %v258 = vadd.f32 %v126, %v257
    %259 = vdwg.mxu0
    %v264 = vcombine.low %v250, %v252
    %v265 = vcombine.high %v250, %v252
    %v267 = vunpack.c.l.s4 1983009808
    %v268 = vunpack.c.0.s8 %v267
    %v269 = vlaneseq
    %v270 = vshrl.u32 %v269, 7
    %v271 = vsub.s32 %v268, %v270
    %v272 = vrot.slane %v264, %v271
    %v274 = vunpack.c.l.s4 1983009808
    %v275 = vunpack.c.0.s8 %v274
    %v276 = vlaneseq
    %v277 = vshrl.u32 %v276, 7
    %v278 = vsub.s32 %v275, %v277
    %v279 = vrot.slane %v265, %v278
    %v280 = vcombine.high %v272, %v272
    %v281 = vcombine.high %v279, %v279
    %v282 = vcombine.low %v256, %v258
    %v283 = vcombine.high %v256, %v258
    %v285 = vunpack.c.l.s4 1983009808
    %v286 = vunpack.c.0.s8 %v285
    %v287 = vlaneseq
    %v288 = vshrl.u32 %v287, 7
    %v289 = vsub.s32 %v286, %v288
    %v290 = vrot.slane %v282, %v289
    %v292 = vunpack.c.l.s4 1983009808
    %v293 = vunpack.c.0.s8 %v292
    %v294 = vlaneseq
    %v295 = vshrl.u32 %v294, 7
    %v296 = vsub.s32 %v293, %v295
    %v297 = vrot.slane %v283, %v296
    %v298 = vcombine.high %v290, %v290
    %v299 = vcombine.high %v297, %v297
    %308 = vst [vmem:[#allocation4] sm:$0xf] %v272
    %309 = vst [vmem:[#allocation4 + $0x4] sm:$0xf] %v280
    %310 = vst [vmem:[#allocation4 + $0x8] sm:$0xf] %v279
    %311 = vst [vmem:[#allocation4 + $0xc] sm:$0xf] %v281
    %312 = vst [vmem:[#allocation4 + $0x10] sm:$0xf] %v290
    %313 = vst [vmem:[#allocation4 + $0x14] sm:$0xf] %v298
    %314 = vst [vmem:[#allocation4 + $0x18] sm:$0xf] %v297
    %315 = vst [vmem:[#allocation4 + $0x1c] sm:$0xf] %v299
    %v316 = vld [vmem:[%s2] sm:$0xff]
    %v317 = vld [vmem:[%s2 + $0x8] sm:$0xff]
    %v318 = vld [vmem:[%s2 + $0x10] sm:$0xff]
    %v319 = vld [vmem:[%s2 + $0x18] sm:$0xff]
    %v320 = vld [vmem:[%s2 + $0x20] sm:$0xff]
    %v321 = vld [vmem:[%s2 + $0x28] sm:$0xff]
    %v322 = vld [vmem:[%s2 + $0x30] sm:$0xff]
    %v323 = vld [vmem:[%s2 + $0x38] sm:$0xff]
    %v324 = vld [vmem:[%s2 + $0x40] sm:$0xff]
    %v325 = vld [vmem:[%s2 + $0x48] sm:$0xff]
    %v326 = vld [vmem:[%s2 + $0x50] sm:$0xff]
    %v327 = vld [vmem:[%s2 + $0x58] sm:$0xff]
    %v328 = vld [vmem:[%s2 + $0x60] sm:$0xff]
    %v329 = vld [vmem:[%s2 + $0x68] sm:$0xff]
    %v330 = vld [vmem:[%s2 + $0x70] sm:$0xff]
    %v331 = vld [vmem:[%s2 + $0x78] sm:$0xff]
    %v332 = vld [vmem:[#allocation4] sm:$0xf]
    %v335 = vunpack.c.l.s4 1983009808
    %v336 = vunpack.c.0.s8 %v335
    %v337 = vlaneseq
    %v338 = vshrl.u32 %v337, 7
    %v339 = vsub.s32 %v336, %v338
    %v340 = vrot.slane %v332, %v339
    %v341 = vcombine.high %v340, %v340
    %vm344 = vcmask 523264
    %v346 = vsel %vm344, 0.0, 0
    %348 = vmatprep.subr.mxu0 %v317
    %349 = vmatpush1.msra.mxu0 %v316
    %350 = vmatprep.subr.mxu0 %v319
    %351 = vmatpush1.msra.mxu0 %v318
    %352 = vmatprep.subr.mxu0 %v321
    %353 = vmatpush1.msra.mxu0 %v320
    %354 = vmatprep.subr.mxu0 %v323
    %355 = vmatpush1.msra.mxu0 %v322
    %356 = vmatprep.subr.mxu0 %v325
    %357 = vmatpush1.msra.mxu0 %v324
    %358 = vmatprep.subr.mxu0 %v327
    %359 = vmatpush1.msra.mxu0 %v326
    %360 = vmatprep.subr.mxu0 %v329
    %361 = vmatpush1.msra.mxu0 %v328
    %362 = vmatprep.subr.mxu0 %v331
    %363 = vmatpush1.msra.mxu0 %v330
    %364 = vmatprep.subr.mxu0 0.0
    %365 = vmatpush1.msra.mxu0 0.0
    %366 = vmatprep.subr.mxu0 0.0
    %367 = vmatpush1.msra.mxu0 0.0
    %368 = vmatprep.subr.mxu0 0.0
    %369 = vmatpush1.msra.mxu0 0.0
    %370 = vmatprep.subr.mxu0 0.0
    %371 = vmatpush1.msra.mxu0 0.0
    %372 = vmatprep.subr.mxu0 0.0
    %373 = vmatpush1.msra.mxu0 0.0
    %374 = vmatprep.subr.mxu0 0.0
    %375 = vmatpush1.msra.mxu0 0.0
    %376 = vmatprep.subr.mxu0 0.0
    %377 = vmatpush1.msra.mxu0 0.0
    %378 = vmatprep.subr.mxu0 0.0
    %379 = vmatpush1.msra.mxu0 0.0
    %380 = vmatprep.subr.mxu0 0.0
    %381 = vmatpush1.msra.mxu0 0.0
    %382 = vmatprep.subr.mxu0 0.0
    %383 = vmatpush1.msra.mxu0 0.0
    %384 = vmatprep.subr.mxu0 0.0
    %385 = vmatpush1.msra.mxu0 0.0
    %386 = vmatprep.subr.mxu0 0.0
    %387 = vmatpush1.msra.mxu0 0.0
    %388 = vmatprep.subr.mxu0 0.0
    %389 = vmatpush1.msra.mxu0 0.0
    %390 = vmatprep.subr.mxu0 0.0
    %391 = vmatpush1.msra.mxu0 0.0
    %392 = vmatprep.subr.mxu0 0.0
    %393 = vmatpush1.msra.mxu0 0.0
    %394 = vmatprep.subr.mxu0 0.0
    %395 = vmatpush1.msra.mxu0 0.0
    %396 = vmatprep.subr.mxu0 0.0
    %397 = vmatpush1.msra.mxu0 0.0
    %398 = vmatprep.subr.mxu0 0.0
    %399 = vmatpush1.msra.mxu0 0.0
    %400 = vmatprep.subr.mxu0 0.0
    %401 = vmatpush1.msra.mxu0 0.0
    %402 = vmatprep.subr.mxu0 0.0
    %403 = vmatpush1.msra.mxu0 0.0
    %404 = vmatprep.subr.mxu0 0.0
    %405 = vmatpush1.msra.mxu0 0.0
    %406 = vmatprep.subr.mxu0 0.0
    %407 = vmatpush1.msra.mxu0 0.0
    %408 = vmatprep.subr.mxu0 0.0
    %409 = vmatpush1.msra.mxu0 0.0
    %410 = vmatprep.subr.mxu0 0.0
    %411 = vmatpush1.msra.mxu0 0.0
    %412 = vmatprep.mubr.f32.mxu0 0.0
    %413 = vmatmul.mubr.f32.gmra.mrb[0].mxu0 %v346
    %v414 = vpop.f32.mrb[0].mxu0
    %v415 = vadd.f32 %v340, %v414
    %v416 = vpop.f32.mrb[0].mxu0
    %v417 = vadd.f32 %v341, %v416
    %418 = vdwg.mxu0
    %v419 = vxor.u32 %v415, 2147483648
    %v420 = vxor.u32 %v417, 2147483648
    %v421 = vmul.f32 %v419, 1.442695
    %v422 = vpow.pop %v421
    %v423 = vmul.f32 %v420, 1.442695
    %v424 = vpow.pop %v423
    %v425 = vadd.f32 %v422, 1.0
    %v426 = vadd.f32 %v424, 1.0
    %v427 = vrcp.pop %v425
    %v428 = vmul.f32 1.0, %v427
    %v429 = vrcp.pop %v426
    %v430 = vmul.f32 1.0, %v429
    %v431 = vtanh.pop %v417
    %v432 = vmul.f32 %v428, 0.0
    %v433 = vmul.f32 %v428, %v431
    %435 = vrot.lane.b32.xlu0 %v433, 64
    %v436 = vpop.permute.xlu0 %435
    %v438 = vadd.f32 %v432, %v436
    %v439 = vtanh.pop %v438
    %v440 = vmul.f32 %v430, %v439
    %442 = vrot.lane.b32.xlu0 %v440, 64
    %v443 = vpop.permute.xlu0 %442
    %vm445 = vcmask 517120
    %446 = vst.msk [vmem:[#allocation2] sm:$0x3] %vm445, %v443
    %s447 = scalar_lea.vmem [#allocation3], 14
    %448 = vst.msk [vmem:[%s447] sm:$0x3] %vm445, %v443
    %s449 = scalar_lea.vmem [#allocation4], 4
    %v450 = vld [vmem:[%s449] sm:$0xf]
    %v453 = vunpack.c.l.s4 1983009808
    %v454 = vunpack.c.0.s8 %v453
    %v455 = vlaneseq
    %v456 = vshrl.u32 %v455, 7
    %v457 = vsub.s32 %v454, %v456
    %v458 = vrot.slane %v450, %v457
    %v459 = vcombine.high %v458, %v458
    %v462 = vsel %vm344, %v443, 0
    %464 = vmatprep.subr.mxu0 %v317
    %465 = vmatpush1.msra.mxu0 %v316
    %466 = vmatprep.subr.mxu0 %v319
    %467 = vmatpush1.msra.mxu0 %v318
    %468 = vmatprep.subr.mxu0 %v321
    %469 = vmatpush1.msra.mxu0 %v320
    %470 = vmatprep.subr.mxu0 %v323
    %471 = vmatpush1.msra.mxu0 %v322
    %472 = vmatprep.subr.mxu0 %v325
    %473 = vmatpush1.msra.mxu0 %v324
    %474 = vmatprep.subr.mxu0 %v327
    %475 = vmatpush1.msra.mxu0 %v326
    %476 = vmatprep.subr.mxu0 %v329
    %477 = vmatpush1.msra.mxu0 %v328
    %478 = vmatprep.subr.mxu0 %v331
    %479 = vmatpush1.msra.mxu0 %v330
    %480 = vmatprep.subr.mxu0 0.0
    %481 = vmatpush1.msra.mxu0 0.0
    %482 = vmatprep.subr.mxu0 0.0
    %483 = vmatpush1.msra.mxu0 0.0
    %484 = vmatprep.subr.mxu0 0.0
    %485 = vmatpush1.msra.mxu0 0.0
    %486 = vmatprep.subr.mxu0 0.0
    %487 = vmatpush1.msra.mxu0 0.0
    %488 = vmatprep.subr.mxu0 0.0
    %489 = vmatpush1.msra.mxu0 0.0
    %490 = vmatprep.subr.mxu0 0.0
    %491 = vmatpush1.msra.mxu0 0.0
    %492 = vmatprep.subr.mxu0 0.0
    %493 = vmatpush1.msra.mxu0 0.0
    %494 = vmatprep.subr.mxu0 0.0
    %495 = vmatpush1.msra.mxu0 0.0
    %496 = vmatprep.subr.mxu0 0.0
    %497 = vmatpush1.msra.mxu0 0.0
    %498 = vmatprep.subr.mxu0 0.0
    %499 = vmatpush1.msra.mxu0 0.0
    %500 = vmatprep.subr.mxu0 0.0
    %501 = vmatpush1.msra.mxu0 0.0
    %502 = vmatprep.subr.mxu0 0.0
    %503 = vmatpush1.msra.mxu0 0.0
    %504 = vmatprep.subr.mxu0 0.0
    %505 = vmatpush1.msra.mxu0 0.0
    %506 = vmatprep.subr.mxu0 0.0
    %507 = vmatpush1.msra.mxu0 0.0
    %508 = vmatprep.subr.mxu0 0.0
    %509 = vmatpush1.msra.mxu0 0.0
    %510 = vmatprep.subr.mxu0 0.0
    %511 = vmatpush1.msra.mxu0 0.0
    %512 = vmatprep.subr.mxu0 0.0
    %513 = vmatpush1.msra.mxu0 0.0
    %514 = vmatprep.subr.mxu0 0.0
    %515 = vmatpush1.msra.mxu0 0.0
    %516 = vmatprep.subr.mxu0 0.0
    %517 = vmatpush1.msra.mxu0 0.0
    %518 = vmatprep.subr.mxu0 0.0
    %519 = vmatpush1.msra.mxu0 0.0
    %520 = vmatprep.subr.mxu0 0.0
    %521 = vmatpush1.msra.mxu0 0.0
    %522 = vmatprep.subr.mxu0 0.0
    %523 = vmatpush1.msra.mxu0 0.0
    %524 = vmatprep.subr.mxu0 0.0
    %525 = vmatpush1.msra.mxu0 0.0
    %526 = vmatprep.subr.mxu0 0.0
    %527 = vmatpush1.msra.mxu0 0.0
    %528 = vmatprep.mubr.f32.mxu0 0.0
    %529 = vmatmul.mubr.f32.gmra.mrb[0].mxu0 %v462
    %v530 = vpop.f32.mrb[0].mxu0
    %v531 = vadd.f32 %v458, %v530
    %v532 = vpop.f32.mrb[0].mxu0
    %v533 = vadd.f32 %v459, %v532
    %534 = vdwg.mxu0
    %v535 = vxor.u32 %v531, 2147483648
    %v536 = vxor.u32 %v533, 2147483648
    %v537 = vmul.f32 %v535, 1.442695
    %v538 = vpow.pop %v537
    %v539 = vmul.f32 %v536, 1.442695
    %v540 = vpow.pop %v539
    %v541 = vadd.f32 %v538, 1.0
    %v542 = vadd.f32 %v540, 1.0
    %v543 = vrcp.pop %v541
    %v544 = vmul.f32 1.0, %v543
    %v545 = vrcp.pop %v542
    %v546 = vmul.f32 1.0, %v545
    %v547 = vtanh.pop %v533
    %v548 = vmul.f32 %v544, %v438
    %v549 = vmul.f32 %v544, %v547
    %551 = vrot.lane.b32.xlu0 %v549, 64
    %v552 = vpop.permute.xlu0 %551
    %v554 = vadd.f32 %v548, %v552
    %v555 = vtanh.pop %v554
    %v556 = vmul.f32 %v546, %v555
    %558 = vrot.lane.b32.xlu0 %v556, 64
    %v559 = vpop.permute.xlu0 %558
    %s561 = scalar_lea.vmem [#allocation2], 2
    %562 = vst.msk [vmem:[%s561] sm:$0x3] %vm445, %v559
    %s563 = scalar_lea.vmem [#allocation3], 12
    %564 = vst.msk [vmem:[%s563] sm:$0x3] %vm445, %v559
    %s565 = scalar_lea.vmem [#allocation4], 8
    %v566 = vld [vmem:[%s565] sm:$0xf]
    %v569 = vunpack.c.l.s4 1983009808
    %v570 = vunpack.c.0.s8 %v569
    %v571 = vlaneseq
    %v572 = vshrl.u32 %v571, 7
    %v573 = vsub.s32 %v570, %v572
    %v574 = vrot.slane %v566, %v573
    %v575 = vcombine.high %v574, %v574
    %v578 = vsel %vm344, %v559, 0
    %580 = vmatprep.subr.mxu0 %v317
    %581 = vmatpush1.msra.mxu0 %v316
    %582 = vmatprep.subr.mxu0 %v319
    %583 = vmatpush1.msra.mxu0 %v318
    %584 = vmatprep.subr.mxu0 %v321
    %585 = vmatpush1.msra.mxu0 %v320
    %586 = vmatprep.subr.mxu0 %v323
    %587 = vmatpush1.msra.mxu0 %v322
    %588 = vmatprep.subr.mxu0 %v325
    %589 = vmatpush1.msra.mxu0 %v324
    %590 = vmatprep.subr.mxu0 %v327
    %591 = vmatpush1.msra.mxu0 %v326
    %592 = vmatprep.subr.mxu0 %v329
    %593 = vmatpush1.msra.mxu0 %v328
    %594 = vmatprep.subr.mxu0 %v331
    %595 = vmatpush1.msra.mxu0 %v330
    %596 = vmatprep.subr.mxu0 0.0
    %597 = vmatpush1.msra.mxu0 0.0
    %598 = vmatprep.subr.mxu0 0.0
    %599 = vmatpush1.msra.mxu0 0.0
    %600 = vmatprep.subr.mxu0 0.0
    %601 = vmatpush1.msra.mxu0 0.0
    %602 = vmatprep.subr.mxu0 0.0
    %603 = vmatpush1.msra.mxu0 0.0
    %604 = vmatprep.subr.mxu0 0.0
    %605 = vmatpush1.msra.mxu0 0.0
    %606 = vmatprep.subr.mxu0 0.0
    %607 = vmatpush1.msra.mxu0 0.0
    %608 = vmatprep.subr.mxu0 0.0
    %609 = vmatpush1.msra.mxu0 0.0
    %610 = vmatprep.subr.mxu0 0.0
    %611 = vmatpush1.msra.mxu0 0.0
    %612 = vmatprep.subr.mxu0 0.0
    %613 = vmatpush1.msra.mxu0 0.0
    %614 = vmatprep.subr.mxu0 0.0
    %615 = vmatpush1.msra.mxu0 0.0
    %616 = vmatprep.subr.mxu0 0.0
    %617 = vmatpush1.msra.mxu0 0.0
    %618 = vmatprep.subr.mxu0 0.0
    %619 = vmatpush1.msra.mxu0 0.0
    %620 = vmatprep.subr.mxu0 0.0
    %621 = vmatpush1.msra.mxu0 0.0
    %622 = vmatprep.subr.mxu0 0.0
    %623 = vmatpush1.msra.mxu0 0.0
    %624 = vmatprep.subr.mxu0 0.0
    %625 = vmatpush1.msra.mxu0 0.0
    %626 = vmatprep.subr.mxu0 0.0
    %627 = vmatpush1.msra.mxu0 0.0
    %628 = vmatprep.subr.mxu0 0.0
    %629 = vmatpush1.msra.mxu0 0.0
    %630 = vmatprep.subr.mxu0 0.0
    %631 = vmatpush1.msra.mxu0 0.0
    %632 = vmatprep.subr.mxu0 0.0
    %633 = vmatpush1.msra.mxu0 0.0
    %634 = vmatprep.subr.mxu0 0.0
    %635 = vmatpush1.msra.mxu0 0.0
    %636 = vmatprep.subr.mxu0 0.0
    %637 = vmatpush1.msra.mxu0 0.0
    %638 = vmatprep.subr.mxu0 0.0
    %639 = vmatpush1.msra.mxu0 0.0
    %640 = vmatprep.subr.mxu0 0.0
    %641 = vmatpush1.msra.mxu0 0.0
    %642 = vmatprep.subr.mxu0 0.0
    %643 = vmatpush1.msra.mxu0 0.0
    %644 = vmatprep.mubr.f32.mxu0 0.0
    %645 = vmatmul.mubr.f32.gmra.mrb[0].mxu0 %v578
    %v646 = vpop.f32.mrb[0].mxu0
    %v647 = vadd.f32 %v574, %v646
    %v648 = vpop.f32.mrb[0].mxu0
    %v649 = vadd.f32 %v575, %v648
    %650 = vdwg.mxu0
    %v651 = vxor.u32 %v647, 2147483648
    %v652 = vxor.u32 %v649, 2147483648
    %v653 = vmul.f32 %v651, 1.442695
    %v654 = vpow.pop %v653
    %v655 = vmul.f32 %v652, 1.442695
    %v656 = vpow.pop %v655
    %v657 = vadd.f32 %v654, 1.0
    %v658 = vadd.f32 %v656, 1.0
    %v659 = vrcp.pop %v657
    %v660 = vmul.f32 1.0, %v659
    %v661 = vrcp.pop %v658
    %v662 = vmul.f32 1.0, %v661
    %v663 = vtanh.pop %v649
    %v664 = vmul.f32 %v660, %v554
    %v665 = vmul.f32 %v660, %v663
    %667 = vrot.lane.b32.xlu0 %v665, 64
    %v668 = vpop.permute.xlu0 %667
    %v670 = vadd.f32 %v664, %v668
    %v671 = vtanh.pop %v670
    %v672 = vmul.f32 %v662, %v671
    %674 = vrot.lane.b32.xlu0 %v672, 64
    %v675 = vpop.permute.xlu0 %674
    %s677 = scalar_lea.vmem [#allocation2], 4
    %678 = vst.msk [vmem:[%s677] sm:$0x3] %vm445, %v675
    %s679 = scalar_lea.vmem [#allocation3], 10
    %680 = vst.msk [vmem:[%s679] sm:$0x3] %vm445, %v675
    %s681 = scalar_lea.vmem [#allocation4], 12
    %v682 = vld [vmem:[%s681] sm:$0xf]
    %v685 = vunpack.c.l.s4 1983009808
    %v686 = vunpack.c.0.s8 %v685
    %v687 = vlaneseq
    %v688 = vshrl.u32 %v687, 7
    %v689 = vsub.s32 %v686, %v688
    %v690 = vrot.slane %v682, %v689
    %v691 = vcombine.high %v690, %v690
    %v694 = vsel %vm344, %v675, 0
    %696 = vmatprep.subr.mxu0 %v317
    %697 = vmatpush1.msra.mxu0 %v316
    %698 = vmatprep.subr.mxu0 %v319
    %699 = vmatpush1.msra.mxu0 %v318
    %700 = vmatprep.subr.mxu0 %v321
    %701 = vmatpush1.msra.mxu0 %v320
    %702 = vmatprep.subr.mxu0 %v323
    %703 = vmatpush1.msra.mxu0 %v322
    %704 = vmatprep.subr.mxu0 %v325
    %705 = vmatpush1.msra.mxu0 %v324
    %706 = vmatprep.subr.mxu0 %v327
    %707 = vmatpush1.msra.mxu0 %v326
    %708 = vmatprep.subr.mxu0 %v329
    %709 = vmatpush1.msra.mxu0 %v328
    %710 = vmatprep.subr.mxu0 %v331
    %711 = vmatpush1.msra.mxu0 %v330
    %712 = vmatprep.subr.mxu0 0.0
    %713 = vmatpush1.msra.mxu0 0.0
    %714 = vmatprep.subr.mxu0 0.0
    %715 = vmatpush1.msra.mxu0 0.0
    %716 = vmatprep.subr.mxu0 0.0
    %717 = vmatpush1.msra.mxu0 0.0
    %718 = vmatprep.subr.mxu0 0.0
    %719 = vmatpush1.msra.mxu0 0.0
    %720 = vmatprep.subr.mxu0 0.0
    %721 = vmatpush1.msra.mxu0 0.0
    %722 = vmatprep.subr.mxu0 0.0
    %723 = vmatpush1.msra.mxu0 0.0
    %724 = vmatprep.subr.mxu0 0.0
    %725 = vmatpush1.msra.mxu0 0.0
    %726 = vmatprep.subr.mxu0 0.0
    %727 = vmatpush1.msra.mxu0 0.0
    %728 = vmatprep.subr.mxu0 0.0
    %729 = vmatpush1.msra.mxu0 0.0
    %730 = vmatprep.subr.mxu0 0.0
    %731 = vmatpush1.msra.mxu0 0.0
    %732 = vmatprep.subr.mxu0 0.0
    %733 = vmatpush1.msra.mxu0 0.0
    %734 = vmatprep.subr.mxu0 0.0
    %735 = vmatpush1.msra.mxu0 0.0
    %736 = vmatprep.subr.mxu0 0.0
    %737 = vmatpush1.msra.mxu0 0.0
    %738 = vmatprep.subr.mxu0 0.0
    %739 = vmatpush1.msra.mxu0 0.0
    %740 = vmatprep.subr.mxu0 0.0
    %741 = vmatpush1.msra.mxu0 0.0
    %742 = vmatprep.subr.mxu0 0.0
    %743 = vmatpush1.msra.mxu0 0.0
    %744 = vmatprep.subr.mxu0 0.0
    %745 = vmatpush1.msra.mxu0 0.0
    %746 = vmatprep.subr.mxu0 0.0
    %747 = vmatpush1.msra.mxu0 0.0
    %748 = vmatprep.subr.mxu0 0.0
    %749 = vmatpush1.msra.mxu0 0.0
    %750 = vmatprep.subr.mxu0 0.0
    %751 = vmatpush1.msra.mxu0 0.0
    %752 = vmatprep.subr.mxu0 0.0
    %753 = vmatpush1.msra.mxu0 0.0
    %754 = vmatprep.subr.mxu0 0.0
    %755 = vmatpush1.msra.mxu0 0.0
    %756 = vmatprep.subr.mxu0 0.0
    %757 = vmatpush1.msra.mxu0 0.0
    %758 = vmatprep.subr.mxu0 0.0
    %759 = vmatpush1.msra.mxu0 0.0
    %760 = vmatprep.mubr.f32.mxu0 0.0
    %761 = vmatmul.mubr.f32.gmra.mrb[0].mxu0 %v694
    %v762 = vpop.f32.mrb[0].mxu0
    %v763 = vadd.f32 %v690, %v762
    %v764 = vpop.f32.mrb[0].mxu0
    %v765 = vadd.f32 %v691, %v764
    %766 = vdwg.mxu0
    %v767 = vxor.u32 %v763, 2147483648
    %v768 = vxor.u32 %v765, 2147483648
    %v769 = vmul.f32 %v767, 1.442695
    %v770 = vpow.pop %v769
    %v771 = vmul.f32 %v768, 1.442695
    %v772 = vpow.pop %v771
    %v773 = vadd.f32 %v770, 1.0
    %v774 = vadd.f32 %v772, 1.0
    %v775 = vrcp.pop %v773
    %v776 = vmul.f32 1.0, %v775
    %v777 = vrcp.pop %v774
    %v778 = vmul.f32 1.0, %v777
    %v779 = vtanh.pop %v765
    %v780 = vmul.f32 %v776, %v670
    %v781 = vmul.f32 %v776, %v779
    %783 = vrot.lane.b32.xlu0 %v781, 64
    %v784 = vpop.permute.xlu0 %783
    %v786 = vadd.f32 %v780, %v784
    %v787 = vtanh.pop %v786
    %v788 = vmul.f32 %v778, %v787
    %790 = vrot.lane.b32.xlu0 %v788, 64
    %v791 = vpop.permute.xlu0 %790
    %s793 = scalar_lea.vmem [#allocation2], 6
    %794 = vst.msk [vmem:[%s793] sm:$0x3] %vm445, %v791
    %s795 = scalar_lea.vmem [#allocation3], 8
    %796 = vst.msk [vmem:[%s795] sm:$0x3] %vm445, %v791
    %s797 = scalar_lea.vmem [#allocation4], 16
    %v798 = vld [vmem:[%s797] sm:$0xf]
    %v801 = vunpack.c.l.s4 1983009808
    %v802 = vunpack.c.0.s8 %v801
    %v803 = vlaneseq
    %v804 = vshrl.u32 %v803, 7
    %v805 = vsub.s32 %v802, %v804
    %v806 = vrot.slane %v798, %v805
    %v807 = vcombine.high %v806, %v806
    %v810 = vsel %vm344, %v791, 0
    %812 = vmatprep.subr.mxu0 %v317
    %813 = vmatpush1.msra.mxu0 %v316
    %814 = vmatprep.subr.mxu0 %v319
    %815 = vmatpush1.msra.mxu0 %v318
    %816 = vmatprep.subr.mxu0 %v321
    %817 = vmatpush1.msra.mxu0 %v320
    %818 = vmatprep.subr.mxu0 %v323
    %819 = vmatpush1.msra.mxu0 %v322
    %820 = vmatprep.subr.mxu0 %v325
    %821 = vmatpush1.msra.mxu0 %v324
    %822 = vmatprep.subr.mxu0 %v327
    %823 = vmatpush1.msra.mxu0 %v326
    %824 = vmatprep.subr.mxu0 %v329
    %825 = vmatpush1.msra.mxu0 %v328
    %826 = vmatprep.subr.mxu0 %v331
    %827 = vmatpush1.msra.mxu0 %v330
    %828 = vmatprep.subr.mxu0 0.0
    %829 = vmatpush1.msra.mxu0 0.0
    %830 = vmatprep.subr.mxu0 0.0
    %831 = vmatpush1.msra.mxu0 0.0
    %832 = vmatprep.subr.mxu0 0.0
    %833 = vmatpush1.msra.mxu0 0.0
    %834 = vmatprep.subr.mxu0 0.0
    %835 = vmatpush1.msra.mxu0 0.0
    %836 = vmatprep.subr.mxu0 0.0
    %837 = vmatpush1.msra.mxu0 0.0
    %838 = vmatprep.subr.mxu0 0.0
    %839 = vmatpush1.msra.mxu0 0.0
    %840 = vmatprep.subr.mxu0 0.0
    %841 = vmatpush1.msra.mxu0 0.0
    %842 = vmatprep.subr.mxu0 0.0
    %843 = vmatpush1.msra.mxu0 0.0
    %844 = vmatprep.subr.mxu0 0.0
    %845 = vmatpush1.msra.mxu0 0.0
    %846 = vmatprep.subr.mxu0 0.0
    %847 = vmatpush1.msra.mxu0 0.0
    %848 = vmatprep.subr.mxu0 0.0
    %849 = vmatpush1.msra.mxu0 0.0
    %850 = vmatprep.subr.mxu0 0.0
    %851 = vmatpush1.msra.mxu0 0.0
    %852 = vmatprep.subr.mxu0 0.0
    %853 = vmatpush1.msra.mxu0 0.0
    %854 = vmatprep.subr.mxu0 0.0
    %855 = vmatpush1.msra.mxu0 0.0
    %856 = vmatprep.subr.mxu0 0.0
    %857 = vmatpush1.msra.mxu0 0.0
    %858 = vmatprep.subr.mxu0 0.0
    %859 = vmatpush1.msra.mxu0 0.0
    %860 = vmatprep.subr.mxu0 0.0
    %861 = vmatpush1.msra.mxu0 0.0
    %862 = vmatprep.subr.mxu0 0.0
    %863 = vmatpush1.msra.mxu0 0.0
    %864 = vmatprep.subr.mxu0 0.0
    %865 = vmatpush1.msra.mxu0 0.0
    %866 = vmatprep.subr.mxu0 0.0
    %867 = vmatpush1.msra.mxu0 0.0
    %868 = vmatprep.subr.mxu0 0.0
    %869 = vmatpush1.msra.mxu0 0.0
    %870 = vmatprep.subr.mxu0 0.0
    %871 = vmatpush1.msra.mxu0 0.0
    %872 = vmatprep.subr.mxu0 0.0
    %873 = vmatpush1.msra.mxu0 0.0
    %874 = vmatprep.subr.mxu0 0.0
    %875 = vmatpush1.msra.mxu0 0.0
    %876 = vmatprep.mubr.f32.mxu0 0.0
    %877 = vmatmul.mubr.f32.gmra.mrb[0].mxu0 %v810
    %v878 = vpop.f32.mrb[0].mxu0
    %v879 = vadd.f32 %v806, %v878
    %v880 = vpop.f32.mrb[0].mxu0
    %v881 = vadd.f32 %v807, %v880
    %882 = vdwg.mxu0
    %v883 = vxor.u32 %v879, 2147483648
    %v884 = vxor.u32 %v881, 2147483648
    %v885 = vmul.f32 %v883, 1.442695
    %v886 = vpow.pop %v885
    %v887 = vmul.f32 %v884, 1.442695
    %v888 = vpow.pop %v887
    %v889 = vadd.f32 %v886, 1.0
    %v890 = vadd.f32 %v888, 1.0
    %v891 = vrcp.pop %v889
    %v892 = vmul.f32 1.0, %v891
    %v893 = vrcp.pop %v890
    %v894 = vmul.f32 1.0, %v893
    %v895 = vtanh.pop %v881
    %v896 = vmul.f32 %v892, %v786
    %v897 = vmul.f32 %v892, %v895
    %899 = vrot.lane.b32.xlu0 %v897, 64
    %v900 = vpop.permute.xlu0 %899
    %v902 = vadd.f32 %v896, %v900
    %v903 = vtanh.pop %v902
    %v904 = vmul.f32 %v894, %v903
    %906 = vrot.lane.b32.xlu0 %v904, 64
    %v907 = vpop.permute.xlu0 %906
    %s909 = scalar_lea.vmem [#allocation2], 8
    %910 = vst.msk [vmem:[%s909] sm:$0x3] %vm445, %v907
    %s911 = scalar_lea.vmem [#allocation3], 6
    %912 = vst.msk [vmem:[%s911] sm:$0x3] %vm445, %v907
    %s913 = scalar_lea.vmem [#allocation4], 20
    %v914 = vld [vmem:[%s913] sm:$0xf]
    %v917 = vunpack.c.l.s4 1983009808
    %v918 = vunpack.c.0.s8 %v917
    %v919 = vlaneseq
    %v920 = vshrl.u32 %v919, 7
    %v921 = vsub.s32 %v918, %v920
    %v922 = vrot.slane %v914, %v921
    %v923 = vcombine.high %v922, %v922
    %v926 = vsel %vm344, %v907, 0
    %928 = vmatprep.subr.mxu0 %v317
    %929 = vmatpush1.msra.mxu0 %v316
    %930 = vmatprep.subr.mxu0 %v319
    %931 = vmatpush1.msra.mxu0 %v318
    %932 = vmatprep.subr.mxu0 %v321
    %933 = vmatpush1.msra.mxu0 %v320
    %934 = vmatprep.subr.mxu0 %v323
    %935 = vmatpush1.msra.mxu0 %v322
    %936 = vmatprep.subr.mxu0 %v325
    %937 = vmatpush1.msra.mxu0 %v324
    %938 = vmatprep.subr.mxu0 %v327
    %939 = vmatpush1.msra.mxu0 %v326
    %940 = vmatprep.subr.mxu0 %v329
    %941 = vmatpush1.msra.mxu0 %v328
    %942 = vmatprep.subr.mxu0 %v331
    %943 = vmatpush1.msra.mxu0 %v330
    %944 = vmatprep.subr.mxu0 0.0
    %945 = vmatpush1.msra.mxu0 0.0
    %946 = vmatprep.subr.mxu0 0.0
    %947 = vmatpush1.msra.mxu0 0.0
    %948 = vmatprep.subr.mxu0 0.0
    %949 = vmatpush1.msra.mxu0 0.0
    %950 = vmatprep.subr.mxu0 0.0
    %951 = vmatpush1.msra.mxu0 0.0
    %952 = vmatprep.subr.mxu0 0.0
    %953 = vmatpush1.msra.mxu0 0.0
    %954 = vmatprep.subr.mxu0 0.0
    %955 = vmatpush1.msra.mxu0 0.0
    %956 = vmatprep.subr.mxu0 0.0
    %957 = vmatpush1.msra.mxu0 0.0
    %958 = vmatprep.subr.mxu0 0.0
    %959 = vmatpush1.msra.mxu0 0.0
    %960 = vmatprep.subr.mxu0 0.0
    %961 = vmatpush1.msra.mxu0 0.0
    %962 = vmatprep.subr.mxu0 0.0
    %963 = vmatpush1.msra.mxu0 0.0
    %964 = vmatprep.subr.mxu0 0.0
    %965 = vmatpush1.msra.mxu0 0.0
    %966 = vmatprep.subr.mxu0 0.0
    %967 = vmatpush1.msra.mxu0 0.0
    %968 = vmatprep.subr.mxu0 0.0
    %969 = vmatpush1.msra.mxu0 0.0
    %970 = vmatprep.subr.mxu0 0.0
    %971 = vmatpush1.msra.mxu0 0.0
    %972 = vmatprep.subr.mxu0 0.0
    %973 = vmatpush1.msra.mxu0 0.0
    %974 = vmatprep.subr.mxu0 0.0
    %975 = vmatpush1.msra.mxu0 0.0
    %976 = vmatprep.subr.mxu0 0.0
    %977 = vmatpush1.msra.mxu0 0.0
    %978 = vmatprep.subr.mxu0 0.0
    %979 = vmatpush1.msra.mxu0 0.0
    %980 = vmatprep.subr.mxu0 0.0
    %981 = vmatpush1.msra.mxu0 0.0
    %982 = vmatprep.subr.mxu0 0.0
    %983 = vmatpush1.msra.mxu0 0.0
    %984 = vmatprep.subr.mxu0 0.0
    %985 = vmatpush1.msra.mxu0 0.0
    %986 = vmatprep.subr.mxu0 0.0
    %987 = vmatpush1.msra.mxu0 0.0
    %988 = vmatprep.subr.mxu0 0.0
    %989 = vmatpush1.msra.mxu0 0.0
    %990 = vmatprep.subr.mxu0 0.0
    %991 = vmatpush1.msra.mxu0 0.0
    %992 = vmatprep.mubr.f32.mxu0 0.0
    %993 = vmatmul.mubr.f32.gmra.mrb[0].mxu0 %v926
    %v994 = vpop.f32.mrb[0].mxu0
    %v995 = vadd.f32 %v922, %v994
    %v996 = vpop.f32.mrb[0].mxu0
    %v997 = vadd.f32 %v923, %v996
    %998 = vdwg.mxu0
    %v999 = vxor.u32 %v995, 2147483648
    %v1000 = vxor.u32 %v997, 2147483648
    %v1001 = vmul.f32 %v999, 1.442695
    %v1002 = vpow.pop %v1001
    %v1003 = vmul.f32 %v1000, 1.442695
    %v1004 = vpow.pop %v1003
    %v1005 = vadd.f32 %v1002, 1.0
    %v1006 = vadd.f32 %v1004, 1.0
    %v1007 = vrcp.pop %v1005
    %v1008 = vmul.f32 1.0, %v1007
    %v1009 = vrcp.pop %v1006
    %v1010 = vmul.f32 1.0, %v1009
    %v1011 = vtanh.pop %v997
    %v1012 = vmul.f32 %v1008, %v902
    %v1013 = vmul.f32 %v1008, %v1011
    %1015 = vrot.lane.b32.xlu0 %v1013, 64
    %v1016 = vpop.permute.xlu0 %1015
    %v1018 = vadd.f32 %v1012, %v1016
    %v1019 = vtanh.pop %v1018
    %v1020 = vmul.f32 %v1010, %v1019
    %1022 = vrot.lane.b32.xlu0 %v1020, 64
    %v1023 = vpop.permute.xlu0 %1022
    %s1025 = scalar_lea.vmem [#allocation2], 10
    %1026 = vst.msk [vmem:[%s1025] sm:$0x3] %vm445, %v1023
    %s1027 = scalar_lea.vmem [#allocation3], 4
    %1028 = vst.msk [vmem:[%s1027] sm:$0x3] %vm445, %v1023
    %s1029 = scalar_lea.vmem [#allocation4], 24
    %v1030 = vld [vmem:[%s1029] sm:$0xf]
    %v1033 = vunpack.c.l.s4 1983009808
    %v1034 = vunpack.c.0.s8 %v1033
    %v1035 = vlaneseq
    %v1036 = vshrl.u32 %v1035, 7
    %v1037 = vsub.s32 %v1034, %v1036
    %v1038 = vrot.slane %v1030, %v1037
    %v1039 = vcombine.high %v1038, %v1038
    %v1042 = vsel %vm344, %v1023, 0
    %1044 = vmatprep.subr.mxu0 %v317
    %1045 = vmatpush1.msra.mxu0 %v316
    %1046 = vmatprep.subr.mxu0 %v319
    %1047 = vmatpush1.msra.mxu0 %v318
    %1048 = vmatprep.subr.mxu0 %v321
    %1049 = vmatpush1.msra.mxu0 %v320
    %1050 = vmatprep.subr.mxu0 %v323
    %1051 = vmatpush1.msra.mxu0 %v322
    %1052 = vmatprep.subr.mxu0 %v325
    %1053 = vmatpush1.msra.mxu0 %v324
    %1054 = vmatprep.subr.mxu0 %v327
    %1055 = vmatpush1.msra.mxu0 %v326
    %1056 = vmatprep.subr.mxu0 %v329
    %1057 = vmatpush1.msra.mxu0 %v328
    %1058 = vmatprep.subr.mxu0 %v331
    %1059 = vmatpush1.msra.mxu0 %v330
    %1060 = vmatprep.subr.mxu0 0.0
    %1061 = vmatpush1.msra.mxu0 0.0
    %1062 = vmatprep.subr.mxu0 0.0
    %1063 = vmatpush1.msra.mxu0 0.0
    %1064 = vmatprep.subr.mxu0 0.0
    %1065 = vmatpush1.msra.mxu0 0.0
    %1066 = vmatprep.subr.mxu0 0.0
    %1067 = vmatpush1.msra.mxu0 0.0
    %1068 = vmatprep.subr.mxu0 0.0
    %1069 = vmatpush1.msra.mxu0 0.0
    %1070 = vmatprep.subr.mxu0 0.0
    %1071 = vmatpush1.msra.mxu0 0.0
    %1072 = vmatprep.subr.mxu0 0.0
    %1073 = vmatpush1.msra.mxu0 0.0
    %1074 = vmatprep.subr.mxu0 0.0
    %1075 = vmatpush1.msra.mxu0 0.0
    %1076 = vmatprep.subr.mxu0 0.0
    %1077 = vmatpush1.msra.mxu0 0.0
    %1078 = vmatprep.subr.mxu0 0.0
    %1079 = vmatpush1.msra.mxu0 0.0
    %1080 = vmatprep.subr.mxu0 0.0
    %1081 = vmatpush1.msra.mxu0 0.0
    %1082 = vmatprep.subr.mxu0 0.0
    %1083 = vmatpush1.msra.mxu0 0.0
    %1084 = vmatprep.subr.mxu0 0.0
    %1085 = vmatpush1.msra.mxu0 0.0
    %1086 = vmatprep.subr.mxu0 0.0
    %1087 = vmatpush1.msra.mxu0 0.0
    %1088 = vmatprep.subr.mxu0 0.0
    %1089 = vmatpush1.msra.mxu0 0.0
    %1090 = vmatprep.subr.mxu0 0.0
    %1091 = vmatpush1.msra.mxu0 0.0
    %1092 = vmatprep.subr.mxu0 0.0
    %1093 = vmatpush1.msra.mxu0 0.0
    %1094 = vmatprep.subr.mxu0 0.0
    %1095 = vmatpush1.msra.mxu0 0.0
    %1096 = vmatprep.subr.mxu0 0.0
    %1097 = vmatpush1.msra.mxu0 0.0
    %1098 = vmatprep.subr.mxu0 0.0
    %1099 = vmatpush1.msra.mxu0 0.0
    %1100 = vmatprep.subr.mxu0 0.0
    %1101 = vmatpush1.msra.mxu0 0.0
    %1102 = vmatprep.subr.mxu0 0.0
    %1103 = vmatpush1.msra.mxu0 0.0
    %1104 = vmatprep.subr.mxu0 0.0
    %1105 = vmatpush1.msra.mxu0 0.0
    %1106 = vmatprep.subr.mxu0 0.0
    %1107 = vmatpush1.msra.mxu0 0.0
    %1108 = vmatprep.mubr.f32.mxu0 0.0
    %1109 = vmatmul.mubr.f32.gmra.mrb[0].mxu0 %v1042
    %v1110 = vpop.f32.mrb[0].mxu0
    %v1111 = vadd.f32 %v1038, %v1110
    %v1112 = vpop.f32.mrb[0].mxu0
    %v1113 = vadd.f32 %v1039, %v1112
    %1114 = vdwg.mxu0
    %v1115 = vxor.u32 %v1111, 2147483648
    %v1116 = vxor.u32 %v1113, 2147483648
    %v1117 = vmul.f32 %v1115, 1.442695
    %v1118 = vpow.pop %v1117
    %v1119 = vmul.f32 %v1116, 1.442695
    %v1120 = vpow.pop %v1119
    %v1121 = vadd.f32 %v1118, 1.0
    %v1122 = vadd.f32 %v1120, 1.0
    %v1123 = vrcp.pop %v1121
    %v1124 = vmul.f32 1.0, %v1123
    %v1125 = vrcp.pop %v1122
    %v1126 = vmul.f32 1.0, %v1125
    %v1127 = vtanh.pop %v1113
    %v1128 = vmul.f32 %v1124, %v1018
    %v1129 = vmul.f32 %v1124, %v1127
    %1131 = vrot.lane.b32.xlu0 %v1129, 64
    %v1132 = vpop.permute.xlu0 %1131
    %v1134 = vadd.f32 %v1128, %v1132
    %v1135 = vtanh.pop %v1134
    %v1136 = vmul.f32 %v1126, %v1135
    %1138 = vrot.lane.b32.xlu0 %v1136, 64
    %v1139 = vpop.permute.xlu0 %1138
    %s1141 = scalar_lea.vmem [#allocation2], 12
    %1142 = vst.msk [vmem:[%s1141] sm:$0x3] %vm445, %v1139
    %s1143 = scalar_lea.vmem [#allocation3], 2
    %1144 = vst.msk [vmem:[%s1143] sm:$0x3] %vm445, %v1139
    %s1145 = scalar_lea.vmem [#allocation4], 28
    %v1146 = vld [vmem:[%s1145] sm:$0xf]
    %v1149 = vunpack.c.l.s4 1983009808
    %v1150 = vunpack.c.0.s8 %v1149
    %v1151 = vlaneseq
    %v1152 = vshrl.u32 %v1151, 7
    %v1153 = vsub.s32 %v1150, %v1152
    %v1154 = vrot.slane %v1146, %v1153
    %v1155 = vcombine.high %v1154, %v1154
    %v1158 = vsel %vm344, %v1139, 0
    %1160 = vmatprep.subr.mxu0 %v317
    %1161 = vmatpush1.msra.mxu0 %v316
    %1162 = vmatprep.subr.mxu0 %v319
    %1163 = vmatpush1.msra.mxu0 %v318
    %1164 = vmatprep.subr.mxu0 %v321
    %1165 = vmatpush1.msra.mxu0 %v320
    %1166 = vmatprep.subr.mxu0 %v323
    %1167 = vmatpush1.msra.mxu0 %v322
    %1168 = vmatprep.subr.mxu0 %v325
    %1169 = vmatpush1.msra.mxu0 %v324
    %1170 = vmatprep.subr.mxu0 %v327
    %1171 = vmatpush1.msra.mxu0 %v326
    %1172 = vmatprep.subr.mxu0 %v329
    %1173 = vmatpush1.msra.mxu0 %v328
    %1174 = vmatprep.subr.mxu0 %v331
    %1175 = vmatpush1.msra.mxu0 %v330
    %1176 = vmatprep.subr.mxu0 0.0
    %1177 = vmatpush1.msra.mxu0 0.0
    %1178 = vmatprep.subr.mxu0 0.0
    %1179 = vmatpush1.msra.mxu0 0.0
    %1180 = vmatprep.subr.mxu0 0.0
    %1181 = vmatpush1.msra.mxu0 0.0
    %1182 = vmatprep.subr.mxu0 0.0
    %1183 = vmatpush1.msra.mxu0 0.0
    %1184 = vmatprep.subr.mxu0 0.0
    %1185 = vmatpush1.msra.mxu0 0.0
    %1186 = vmatprep.subr.mxu0 0.0
    %1187 = vmatpush1.msra.mxu0 0.0
    %1188 = vmatprep.subr.mxu0 0.0
    %1189 = vmatpush1.msra.mxu0 0.0
    %1190 = vmatprep.subr.mxu0 0.0
    %1191 = vmatpush1.msra.mxu0 0.0
    %1192 = vmatprep.subr.mxu0 0.0
    %1193 = vmatpush1.msra.mxu0 0.0
    %1194 = vmatprep.subr.mxu0 0.0
    %1195 = vmatpush1.msra.mxu0 0.0
    %1196 = vmatprep.subr.mxu0 0.0
    %1197 = vmatpush1.msra.mxu0 0.0
    %1198 = vmatprep.subr.mxu0 0.0
    %1199 = vmatpush1.msra.mxu0 0.0
    %1200 = vmatprep.subr.mxu0 0.0
    %1201 = vmatpush1.msra.mxu0 0.0
    %1202 = vmatprep.subr.mxu0 0.0
    %1203 = vmatpush1.msra.mxu0 0.0
    %1204 = vmatprep.subr.mxu0 0.0
    %1205 = vmatpush1.msra.mxu0 0.0
    %1206 = vmatprep.subr.mxu0 0.0
    %1207 = vmatpush1.msra.mxu0 0.0
    %1208 = vmatprep.subr.mxu0 0.0
    %1209 = vmatpush1.msra.mxu0 0.0
    %1210 = vmatprep.subr.mxu0 0.0
    %1211 = vmatpush1.msra.mxu0 0.0
    %1212 = vmatprep.subr.mxu0 0.0
    %1213 = vmatpush1.msra.mxu0 0.0
    %1214 = vmatprep.subr.mxu0 0.0
    %1215 = vmatpush1.msra.mxu0 0.0
    %1216 = vmatprep.subr.mxu0 0.0
    %1217 = vmatpush1.msra.mxu0 0.0
    %1218 = vmatprep.subr.mxu0 0.0
    %1219 = vmatpush1.msra.mxu0 0.0
    %1220 = vmatprep.subr.mxu0 0.0
    %1221 = vmatpush1.msra.mxu0 0.0
    %1222 = vmatprep.subr.mxu0 0.0
    %1223 = vmatpush1.msra.mxu0 0.0
    %1224 = vmatprep.mubr.f32.mxu0 0.0
    %1225 = vmatmul.mubr.f32.gmra.mrb[0].mxu0 %v1158
    %v1226 = vpop.f32.mrb[0].mxu0
    %v1227 = vadd.f32 %v1154, %v1226
    %v1228 = vpop.f32.mrb[0].mxu0
    %v1229 = vadd.f32 %v1155, %v1228
    %1230 = vdwg.mxu0
    %v1231 = vxor.u32 %v1227, 2147483648
    %v1232 = vxor.u32 %v1229, 2147483648
    %v1233 = vmul.f32 %v1231, 1.442695
    %v1234 = vpow.pop %v1233
    %v1235 = vmul.f32 %v1232, 1.442695
    %v1236 = vpow.pop %v1235
    %v1237 = vadd.f32 %v1234, 1.0
    %v1238 = vadd.f32 %v1236, 1.0
    %v1239 = vrcp.pop %v1237
    %v1240 = vmul.f32 1.0, %v1239
    %v1241 = vrcp.pop %v1238
    %v1242 = vmul.f32 1.0, %v1241
    %v1243 = vtanh.pop %v1229
    %v1244 = vmul.f32 %v1240, %v1134
    %v1245 = vmul.f32 %v1240, %v1243
    %1247 = vrot.lane.b32.xlu0 %v1245, 64
    %v1248 = vpop.permute.xlu0 %1247
    %v1250 = vadd.f32 %v1244, %v1248
    %v1251 = vtanh.pop %v1250
    %v1252 = vmul.f32 %v1242, %v1251
    %1254 = vrot.lane.b32.xlu0 %v1252, 64
    %v1255 = vpop.permute.xlu0 %1254
    %s1257 = scalar_lea.vmem [#allocation2], 14
    %1258 = vst.msk [vmem:[%s1257] sm:$0x3] %vm445, %v1255
    %1259 = vst.msk [vmem:[#allocation3] sm:$0x3] %vm445, %v1255
    %v1260 = vld [vmem:[#allocation2] sm:$0x3]
    %v1261 = vld [vmem:[#allocation2 + $0x2] sm:$0x3]
    %v1262 = vld [vmem:[#allocation2 + $0x4] sm:$0x3]
    %v1263 = vld [vmem:[#allocation2 + $0x6] sm:$0x3]
    %v1264 = vld [vmem:[#allocation2 + $0x8] sm:$0x3]
    %v1265 = vld [vmem:[#allocation2 + $0xa] sm:$0x3]
    %v1266 = vld [vmem:[#allocation2 + $0xc] sm:$0x3]
    %v1267 = vld [vmem:[#allocation2 + $0xe] sm:$0x3]
    %v1268 = vld [vmem:[#allocation3] sm:$0x3]
    %v1269 = vld [vmem:[#allocation3 + $0x2] sm:$0x3]
    %v1270 = vld [vmem:[#allocation3 + $0x4] sm:$0x3]
    %v1271 = vld [vmem:[#allocation3 + $0x6] sm:$0x3]
    %v1272 = vld [vmem:[#allocation3 + $0x8] sm:$0x3]
    %v1273 = vld [vmem:[#allocation3 + $0xa] sm:$0x3]
    %v1274 = vld [vmem:[#allocation3 + $0xc] sm:$0x3]
    %v1275 = vld [vmem:[#allocation3 + $0xe] sm:$0x3]
    %v1276 = vld [vmem:[#allocation8] sm:$0xff]
    %v1277 = vld [vmem:[#allocation8 + $0x8] sm:$0xff]
    %v1278 = vld [vmem:[#allocation8 + $0x10] sm:$0xff]
    %v1279 = vld [vmem:[#allocation8 + $0x18] sm:$0xff]
    %v1280 = vld [vmem:[#allocation8 + $0x20] sm:$0xff]
    %v1281 = vld [vmem:[#allocation8 + $0x28] sm:$0xff]
    %v1282 = vld [vmem:[#allocation8 + $0x30] sm:$0xff]
    %v1283 = vld [vmem:[#allocation8 + $0x38] sm:$0xff]
    %v1284 = vld [vmem:[#allocation8 + $0x40] sm:$0xff]
    %v1285 = vld [vmem:[#allocation8 + $0x48] sm:$0xff]
    %v1286 = vld [vmem:[#allocation8 + $0x50] sm:$0xff]
    %v1287 = vld [vmem:[#allocation8 + $0x58] sm:$0xff]
    %v1288 = vld [vmem:[#allocation8 + $0x60] sm:$0xff]
    %v1289 = vld [vmem:[#allocation8 + $0x68] sm:$0xff]
    %v1290 = vld [vmem:[#allocation8 + $0x70] sm:$0xff]
    %v1291 = vld [vmem:[#allocation8 + $0x78] sm:$0xff]
    %v1292 = vld [vmem:[#allocation10] sm:$0xff]
    %v1293 = vld [vmem:[#allocation10 + $0x8] sm:$0xff]
    %v1294 = vld [vmem:[#allocation10 + $0x10] sm:$0xff]
    %v1295 = vld [vmem:[#allocation10 + $0x18] sm:$0xff]
    %v1296 = vld [vmem:[#allocation10 + $0x20] sm:$0xff]
    %v1297 = vld [vmem:[#allocation10 + $0x28] sm:$0xff]
    %v1298 = vld [vmem:[#allocation10 + $0x30] sm:$0xff]
    %v1299 = vld [vmem:[#allocation10 + $0x38] sm:$0xff]
    %v1300 = vld [vmem:[#allocation10 + $0x40] sm:$0xff]
    %v1301 = vld [vmem:[#allocation10 + $0x48] sm:$0xff]
    %v1302 = vld [vmem:[#allocation10 + $0x50] sm:$0xff]
    %v1303 = vld [vmem:[#allocation10 + $0x58] sm:$0xff]
    %v1304 = vld [vmem:[#allocation10 + $0x60] sm:$0xff]
    %v1305 = vld [vmem:[#allocation10 + $0x68] sm:$0xff]
    %v1306 = vld [vmem:[#allocation10 + $0x70] sm:$0xff]
    %v1307 = vld [vmem:[#allocation10 + $0x78] sm:$0xff]
    %v1316 = vcombine.low %v1268, %v1269
    %v1317 = vcombine.low %v1270, %v1271
    %v1319 = vunpack.c.l.s4 1983009808
    %v1320 = vunpack.c.0.s8 %v1319
    %v1321 = vlaneseq
    %v1322 = vshrl.u32 %v1321, 7
    %v1323 = vsub.s32 %v1320, %v1322
    %v1324 = vrot.slane %v1316, %v1323
    %v1326 = vunpack.c.l.s4 1983009808
    %v1327 = vunpack.c.0.s8 %v1326
    %v1328 = vlaneseq
    %v1329 = vshrl.u32 %v1328, 7
    %v1330 = vsub.s32 %v1327, %v1329
    %v1331 = vrot.slane %v1317, %v1330
    %v1332 = vcombine.low %v1324, %v1331
    %v1333 = vcombine.low %v1272, %v1273
    %v1334 = vcombine.low %v1274, %v1275
    %v1336 = vunpack.c.l.s4 1983009808
    %v1337 = vunpack.c.0.s8 %v1336
    %v1338 = vlaneseq
    %v1339 = vshrl.u32 %v1338, 7
    %v1340 = vsub.s32 %v1337, %v1339
    %v1341 = vrot.slane %v1333, %v1340
    %v1343 = vunpack.c.l.s4 1983009808
    %v1344 = vunpack.c.0.s8 %v1343
    %v1345 = vlaneseq
    %v1346 = vshrl.u32 %v1345, 7
    %v1347 = vsub.s32 %v1344, %v1346
    %v1348 = vrot.slane %v1334, %v1347
    %v1349 = vcombine.low %v1341, %v1348
    %v1350 = vsel %vm344, %v1332, 0
    %v1352 = vsel %vm344, %v1349, 0
    %1354 = vmatprep.subr.mxu0 %v1293
    %1355 = vmatpush1.msra.mxu0 %v1292
    %1356 = vmatprep.subr.mxu0 %v1295
    %1357 = vmatpush1.msra.mxu0 %v1294
    %1358 = vmatprep.subr.mxu0 %v1297
    %1359 = vmatpush1.msra.mxu0 %v1296
    %1360 = vmatprep.subr.mxu0 %v1299
    %1361 = vmatpush1.msra.mxu0 %v1298
    %1362 = vmatprep.subr.mxu0 %v1301
    %1363 = vmatpush1.msra.mxu0 %v1300
    %1364 = vmatprep.subr.mxu0 %v1303
    %1365 = vmatpush1.msra.mxu0 %v1302
    %1366 = vmatprep.subr.mxu0 %v1305
    %1367 = vmatpush1.msra.mxu0 %v1304
    %1368 = vmatprep.subr.mxu0 %v1307
    %1369 = vmatpush1.msra.mxu0 %v1306
    %1370 = vmatprep.subr.mxu0 0.0
    %1371 = vmatpush1.msra.mxu0 0.0
    %1372 = vmatprep.subr.mxu0 0.0
    %1373 = vmatpush1.msra.mxu0 0.0
    %1374 = vmatprep.subr.mxu0 0.0
    %1375 = vmatpush1.msra.mxu0 0.0
    %1376 = vmatprep.subr.mxu0 0.0
    %1377 = vmatpush1.msra.mxu0 0.0
    %1378 = vmatprep.subr.mxu0 0.0
    %1379 = vmatpush1.msra.mxu0 0.0
    %1380 = vmatprep.subr.mxu0 0.0
    %1381 = vmatpush1.msra.mxu0 0.0
    %1382 = vmatprep.subr.mxu0 0.0
    %1383 = vmatpush1.msra.mxu0 0.0
    %1384 = vmatprep.subr.mxu0 0.0
    %1385 = vmatpush1.msra.mxu0 0.0
    %1386 = vmatprep.subr.mxu0 0.0
    %1387 = vmatpush1.msra.mxu0 0.0
    %1388 = vmatprep.subr.mxu0 0.0
    %1389 = vmatpush1.msra.mxu0 0.0
    %1390 = vmatprep.subr.mxu0 0.0
    %1391 = vmatpush1.msra.mxu0 0.0
    %1392 = vmatprep.subr.mxu0 0.0
    %1393 = vmatpush1.msra.mxu0 0.0
    %1394 = vmatprep.subr.mxu0 0.0
    %1395 = vmatpush1.msra.mxu0 0.0
    %1396 = vmatprep.subr.mxu0 0.0
    %1397 = vmatpush1.msra.mxu0 0.0
    %1398 = vmatprep.subr.mxu0 0.0
    %1399 = vmatpush1.msra.mxu0 0.0
    %1400 = vmatprep.subr.mxu0 0.0
    %1401 = vmatpush1.msra.mxu0 0.0
    %1402 = vmatprep.subr.mxu0 0.0
    %1403 = vmatpush1.msra.mxu0 0.0
    %1404 = vmatprep.subr.mxu0 0.0
    %1405 = vmatpush1.msra.mxu0 0.0
    %1406 = vmatprep.subr.mxu0 0.0
    %1407 = vmatpush1.msra.mxu0 0.0
    %1408 = vmatprep.subr.mxu0 0.0
    %1409 = vmatpush1.msra.mxu0 0.0
    %1410 = vmatprep.subr.mxu0 0.0
    %1411 = vmatpush1.msra.mxu0 0.0
    %1412 = vmatprep.subr.mxu0 0.0
    %1413 = vmatpush1.msra.mxu0 0.0
    %1414 = vmatprep.subr.mxu0 0.0
    %1415 = vmatpush1.msra.mxu0 0.0
    %1416 = vmatprep.subr.mxu0 0.0
    %1417 = vmatpush1.msra.mxu0 0.0
    %1418 = vmatprep.mubr.f32.mxu0 0.0
    %1419 = vmatmul.mubr.f32.gmra.mrb[0].mxu0 %v1350
    %v1420 = vpop.f32.mrb[0].mxu0
    %v1421 = vadd.f32 0.0, %v1420
    %v1422 = vpop.f32.mrb[0].mxu0
    %v1423 = vadd.f32 0.0, %v1422
    %1424 = vmatprep.mubr.f32.mxu0 0.0
    %1425 = vmatmul.mubr.f32.gmra.mrb[0].mxu0 %v1352
    %v1426 = vpop.f32.mrb[0].mxu0
    %v1427 = vadd.f32 0.0, %v1426
    %v1428 = vpop.f32.mrb[0].mxu0
    %v1429 = vadd.f32 0.0, %v1428
    %1430 = vdwg.mxu0
    %v1439 = vcombine.low %v1260, %v1261
    %v1440 = vcombine.low %v1262, %v1263
    %v1442 = vunpack.c.l.s4 1983009808
    %v1443 = vunpack.c.0.s8 %v1442
    %v1444 = vlaneseq
    %v1445 = vshrl.u32 %v1444, 7
    %v1446 = vsub.s32 %v1443, %v1445
    %v1447 = vrot.slane %v1439, %v1446
    %v1449 = vunpack.c.l.s4 1983009808
    %v1450 = vunpack.c.0.s8 %v1449
    %v1451 = vlaneseq
    %v1452 = vshrl.u32 %v1451, 7
    %v1453 = vsub.s32 %v1450, %v1452
    %v1454 = vrot.slane %v1440, %v1453
    %v1455 = vcombine.low %v1447, %v1454
    %v1456 = vcombine.low %v1264, %v1265
    %v1457 = vcombine.low %v1266, %v1267
    %v1459 = vunpack.c.l.s4 1983009808
    %v1460 = vunpack.c.0.s8 %v1459
    %v1461 = vlaneseq
    %v1462 = vshrl.u32 %v1461, 7
    %v1463 = vsub.s32 %v1460, %v1462
    %v1464 = vrot.slane %v1456, %v1463
    %v1466 = vunpack.c.l.s4 1983009808
    %v1467 = vunpack.c.0.s8 %v1466
    %v1468 = vlaneseq
    %v1469 = vshrl.u32 %v1468, 7
    %v1470 = vsub.s32 %v1467, %v1469
    %v1471 = vrot.slane %v1457, %v1470
    %v1472 = vcombine.low %v1464, %v1471
    %v1473 = vsel %vm344, %v1455, 0
    %v1475 = vsel %vm344, %v1472, 0
    %1477 = vmatprep.subr.mxu0 %v1277
    %1478 = vmatpush1.msra.mxu0 %v1276
    %1479 = vmatprep.subr.mxu0 %v1279
    %1480 = vmatpush1.msra.mxu0 %v1278
    %1481 = vmatprep.subr.mxu0 %v1281
    %1482 = vmatpush1.msra.mxu0 %v1280
    %1483 = vmatprep.subr.mxu0 %v1283
    %1484 = vmatpush1.msra.mxu0 %v1282
    %1485 = vmatprep.subr.mxu0 %v1285
    %1486 = vmatpush1.msra.mxu0 %v1284
    %1487 = vmatprep.subr.mxu0 %v1287
    %1488 = vmatpush1.msra.mxu0 %v1286
    %1489 = vmatprep.subr.mxu0 %v1289
    %1490 = vmatpush1.msra.mxu0 %v1288
    %1491 = vmatprep.subr.mxu0 %v1291
    %1492 = vmatpush1.msra.mxu0 %v1290
    %1493 = vmatprep.subr.mxu0 0.0
    %1494 = vmatpush1.msra.mxu0 0.0
    %1495 = vmatprep.subr.mxu0 0.0
    %1496 = vmatpush1.msra.mxu0 0.0
    %1497 = vmatprep.subr.mxu0 0.0
    %1498 = vmatpush1.msra.mxu0 0.0
    %1499 = vmatprep.subr.mxu0 0.0
    %1500 = vmatpush1.msra.mxu0 0.0
    %1501 = vmatprep.subr.mxu0 0.0
    %1502 = vmatpush1.msra.mxu0 0.0
    %1503 = vmatprep.subr.mxu0 0.0
    %1504 = vmatpush1.msra.mxu0 0.0
    %1505 = vmatprep.subr.mxu0 0.0
    %1506 = vmatpush1.msra.mxu0 0.0
    %1507 = vmatprep.subr.mxu0 0.0
    %1508 = vmatpush1.msra.mxu0 0.0
    %1509 = vmatprep.subr.mxu0 0.0
    %1510 = vmatpush1.msra.mxu0 0.0
    %1511 = vmatprep.subr.mxu0 0.0
    %1512 = vmatpush1.msra.mxu0 0.0
    %1513 = vmatprep.subr.mxu0 0.0
    %1514 = vmatpush1.msra.mxu0 0.0
    %1515 = vmatprep.subr.mxu0 0.0
    %1516 = vmatpush1.msra.mxu0 0.0
    %1517 = vmatprep.subr.mxu0 0.0
    %1518 = vmatpush1.msra.mxu0 0.0
    %1519 = vmatprep.subr.mxu0 0.0
    %1520 = vmatpush1.msra.mxu0 0.0
    %1521 = vmatprep.subr.mxu0 0.0
    %1522 = vmatpush1.msra.mxu0 0.0
    %1523 = vmatprep.subr.mxu0 0.0
    %1524 = vmatpush1.msra.mxu0 0.0
    %1525 = vmatprep.subr.mxu0 0.0
    %1526 = vmatpush1.msra.mxu0 0.0
    %1527 = vmatprep.subr.mxu0 0.0
    %1528 = vmatpush1.msra.mxu0 0.0
    %1529 = vmatprep.subr.mxu0 0.0
    %1530 = vmatpush1.msra.mxu0 0.0
    %1531 = vmatprep.subr.mxu0 0.0
    %1532 = vmatpush1.msra.mxu0 0.0
    %1533 = vmatprep.subr.mxu0 0.0
    %1534 = vmatpush1.msra.mxu0 0.0
    %1535 = vmatprep.subr.mxu0 0.0
    %1536 = vmatpush1.msra.mxu0 0.0
    %1537 = vmatprep.subr.mxu0 0.0
    %1538 = vmatpush1.msra.mxu0 0.0
    %1539 = vmatprep.subr.mxu0 0.0
    %1540 = vmatpush1.msra.mxu0 0.0
    %1541 = vmatprep.mubr.f32.mxu0 0.0
    %1542 = vmatmul.mubr.f32.gmra.mrb[0].mxu0 %v1473
    %v1543 = vpop.f32.mrb[0].mxu0
    %v1544 = vadd.f32 %v1421, %v1543
    %v1545 = vpop.f32.mrb[0].mxu0
    %v1546 = vadd.f32 %v1423, %v1545
    %1547 = vmatprep.mubr.f32.mxu0 0.0
    %1548 = vmatmul.mubr.f32.gmra.mrb[0].mxu0 %v1475
    %v1549 = vpop.f32.mrb[0].mxu0
    %v1550 = vadd.f32 %v1427, %v1549
    %v1551 = vpop.f32.mrb[0].mxu0
    %v1552 = vadd.f32 %v1429, %v1551
    %1553 = vdwg.mxu0
    %v1554 = vld [vmem:[%s7] sm:$0x3]
    %v1556 = vlaneseq
    %v1557 = vshrl.u32 %v1556, 7
    %v1558 = vsub.s32 0, %v1557
    %v1559 = vrot.slane %v1554, %v1558
    %v1560 = vlaneseq
    %v1561 = vshrl.u32 %v1560, 7
    %v1562 = vsub.s32 1, %v1561
    %v1563 = vrot.slane %v1554, %v1562
    %v1566 = vadd.f32 %v1544, %v1559
    %v1567 = vadd.f32 %v1546, %v1563
    %v1568 = vadd.f32 %v1550, %v1559
    %v1569 = vadd.f32 %v1552, %v1563
    %v1574 = vcombine.low %v1566, %v1567
    %v1575 = vcombine.high %v1566, %v1567
    %v1577 = vunpack.c.l.s4 1983009808
    %v1578 = vunpack.c.0.s8 %v1577
    %v1579 = vlaneseq
    %v1580 = vshrl.u32 %v1579, 7
    %v1581 = vsub.s32 %v1578, %v1580
    %v1582 = vrot.slane %v1574, %v1581
    %v1584 = vunpack.c.l.s4 1983009808
    %v1585 = vunpack.c.0.s8 %v1584
    %v1586 = vlaneseq
    %v1587 = vshrl.u32 %v1586, 7
    %v1588 = vsub.s32 %v1585, %v1587
    %v1589 = vrot.slane %v1575, %v1588
    %v1590 = vcombine.high %v1582, %v1582
    %v1591 = vcombine.high %v1589, %v1589
    %v1592 = vcombine.low %v1568, %v1569
    %v1593 = vcombine.high %v1568, %v1569
    %v1595 = vunpack.c.l.s4 1983009808
    %v1596 = vunpack.c.0.s8 %v1595
    %v1597 = vlaneseq
    %v1598 = vshrl.u32 %v1597, 7
    %v1599 = vsub.s32 %v1596, %v1598
    %v1600 = vrot.slane %v1592, %v1599
    %v1602 = vunpack.c.l.s4 1983009808
    %v1603 = vunpack.c.0.s8 %v1602
    %v1604 = vlaneseq
    %v1605 = vshrl.u32 %v1604, 7
    %v1606 = vsub.s32 %v1603, %v1605
    %v1607 = vrot.slane %v1593, %v1606
    %v1608 = vcombine.high %v1600, %v1600
    %v1609 = vcombine.high %v1607, %v1607
    %1618 = vst [vmem:[#allocation4] sm:$0xf] %v1582
    %1619 = vst [vmem:[#allocation4 + $0x4] sm:$0xf] %v1590
    %1620 = vst [vmem:[#allocation4 + $0x8] sm:$0xf] %v1589
    %1621 = vst [vmem:[#allocation4 + $0xc] sm:$0xf] %v1591
    %1622 = vst [vmem:[#allocation4 + $0x10] sm:$0xf] %v1600
    %1623 = vst [vmem:[#allocation4 + $0x14] sm:$0xf] %v1608
    %1624 = vst [vmem:[#allocation4 + $0x18] sm:$0xf] %v1607
    %1625 = vst [vmem:[#allocation4 + $0x1c] sm:$0xf] %v1609
    %v1626 = vld [vmem:[#allocation11] sm:$0xff]
    %v1627 = vld [vmem:[#allocation11 + $0x8] sm:$0xff]
    %v1628 = vld [vmem:[#allocation11 + $0x10] sm:$0xff]
    %v1629 = vld [vmem:[#allocation11 + $0x18] sm:$0xff]
    %v1630 = vld [vmem:[#allocation11 + $0x20] sm:$0xff]
    %v1631 = vld [vmem:[#allocation11 + $0x28] sm:$0xff]
    %v1632 = vld [vmem:[#allocation11 + $0x30] sm:$0xff]
    %v1633 = vld [vmem:[#allocation11 + $0x38] sm:$0xff]
    %v1634 = vld [vmem:[#allocation11 + $0x40] sm:$0xff]
    %v1635 = vld [vmem:[#allocation11 + $0x48] sm:$0xff]
    %v1636 = vld [vmem:[#allocation11 + $0x50] sm:$0xff]
    %v1637 = vld [vmem:[#allocation11 + $0x58] sm:$0xff]
    %v1638 = vld [vmem:[#allocation11 + $0x60] sm:$0xff]
    %v1639 = vld [vmem:[#allocation11 + $0x68] sm:$0xff]
    %v1640 = vld [vmem:[#allocation11 + $0x70] sm:$0xff]
    %v1641 = vld [vmem:[#allocation11 + $0x78] sm:$0xff]
    %v1642 = vld [vmem:[#allocation4] sm:$0xf]
    %v1645 = vunpack.c.l.s4 1983009808
    %v1646 = vunpack.c.0.s8 %v1645
    %v1647 = vlaneseq
    %v1648 = vshrl.u32 %v1647, 7
    %v1649 = vsub.s32 %v1646, %v1648
    %v1650 = vrot.slane %v1642, %v1649
    %v1651 = vcombine.high %v1650, %v1650
    %1654 = vmatprep.subr.mxu0 %v1627
    %1655 = vmatpush1.msra.mxu0 %v1626
    %1656 = vmatprep.subr.mxu0 %v1629
    %1657 = vmatpush1.msra.mxu0 %v1628
    %1658 = vmatprep.subr.mxu0 %v1631
    %1659 = vmatpush1.msra.mxu0 %v1630
    %1660 = vmatprep.subr.mxu0 %v1633
    %1661 = vmatpush1.msra.mxu0 %v1632
    %1662 = vmatprep.subr.mxu0 %v1635
    %1663 = vmatpush1.msra.mxu0 %v1634
    %1664 = vmatprep.subr.mxu0 %v1637
    %1665 = vmatpush1.msra.mxu0 %v1636
    %1666 = vmatprep.subr.mxu0 %v1639
    %1667 = vmatpush1.msra.mxu0 %v1638
    %1668 = vmatprep.subr.mxu0 %v1641
    %1669 = vmatpush1.msra.mxu0 %v1640
    %1670 = vmatprep.subr.mxu0 0.0
    %1671 = vmatpush1.msra.mxu0 0.0
    %1672 = vmatprep.subr.mxu0 0.0
    %1673 = vmatpush1.msra.mxu0 0.0
    %1674 = vmatprep.subr.mxu0 0.0
    %1675 = vmatpush1.msra.mxu0 0.0
    %1676 = vmatprep.subr.mxu0 0.0
    %1677 = vmatpush1.msra.mxu0 0.0
    %1678 = vmatprep.subr.mxu0 0.0
    %1679 = vmatpush1.msra.mxu0 0.0
    %1680 = vmatprep.subr.mxu0 0.0
    %1681 = vmatpush1.msra.mxu0 0.0
    %1682 = vmatprep.subr.mxu0 0.0
    %1683 = vmatpush1.msra.mxu0 0.0
    %1684 = vmatprep.subr.mxu0 0.0
    %1685 = vmatpush1.msra.mxu0 0.0
    %1686 = vmatprep.subr.mxu0 0.0
    %1687 = vmatpush1.msra.mxu0 0.0
    %1688 = vmatprep.subr.mxu0 0.0
    %1689 = vmatpush1.msra.mxu0 0.0
    %1690 = vmatprep.subr.mxu0 0.0
    %1691 = vmatpush1.msra.mxu0 0.0
    %1692 = vmatprep.subr.mxu0 0.0
    %1693 = vmatpush1.msra.mxu0 0.0
    %1694 = vmatprep.subr.mxu0 0.0
    %1695 = vmatpush1.msra.mxu0 0.0
    %1696 = vmatprep.subr.mxu0 0.0
    %1697 = vmatpush1.msra.mxu0 0.0
    %1698 = vmatprep.subr.mxu0 0.0
    %1699 = vmatpush1.msra.mxu0 0.0
    %1700 = vmatprep.subr.mxu0 0.0
    %1701 = vmatpush1.msra.mxu0 0.0
    %1702 = vmatprep.subr.mxu0 0.0
    %1703 = vmatpush1.msra.mxu0 0.0
    %1704 = vmatprep.subr.mxu0 0.0
    %1705 = vmatpush1.msra.mxu0 0.0
    %1706 = vmatprep.subr.mxu0 0.0
    %1707 = vmatpush1.msra.mxu0 0.0
    %1708 = vmatprep.subr.mxu0 0.0
    %1709 = vmatpush1.msra.mxu0 0.0
    %1710 = vmatprep.subr.mxu0 0.0
    %1711 = vmatpush1.msra.mxu0 0.0
    %1712 = vmatprep.subr.mxu0 0.0
    %1713 = vmatpush1.msra.mxu0 0.0
    %1714 = vmatprep.subr.mxu0 0.0
    %1715 = vmatpush1.msra.mxu0 0.0
    %1716 = vmatprep.subr.mxu0 0.0
    %1717 = vmatpush1.msra.mxu0 0.0
    %1718 = vmatprep.mubr.f32.mxu0 0.0
    %1719 = vmatmul.mubr.f32.gmra.mrb[0].mxu0 %v346
    %v1720 = vpop.f32.mrb[0].mxu0
    %v1721 = vadd.f32 %v1650, %v1720
    %v1722 = vpop.f32.mrb[0].mxu0
    %v1723 = vadd.f32 %v1651, %v1722
    %1724 = vdwg.mxu0
    %v1725 = vxor.u32 %v1721, 2147483648
    %v1726 = vxor.u32 %v1723, 2147483648
    %v1727 = vmul.f32 %v1725, 1.442695
    %v1728 = vpow.pop %v1727
    %v1729 = vmul.f32 %v1726, 1.442695
    %v1730 = vpow.pop %v1729
    %v1731 = vadd.f32 %v1728, 1.0
    %v1732 = vadd.f32 %v1730, 1.0
    %v1733 = vrcp.pop %v1731
    %v1734 = vmul.f32 1.0, %v1733
    %v1735 = vrcp.pop %v1732
    %v1736 = vmul.f32 1.0, %v1735
    %v1737 = vtanh.pop %v1723
    %v1738 = vmul.f32 %v1734, 0.0
    %v1739 = vmul.f32 %v1734, %v1737
    %1741 = vrot.lane.b32.xlu0 %v1739, 64
    %v1742 = vpop.permute.xlu0 %1741
    %v1744 = vadd.f32 %v1738, %v1742
    %v1745 = vtanh.pop %v1744
    %v1746 = vmul.f32 %v1736, %v1745
    %v1747 = vld [vmem:[%s449] sm:$0xf]
    %1749 = vrot.lane.b32.xlu0 %v1746, 64
    %v1750 = vpop.permute.xlu0 %1749
    %v1753 = vunpack.c.l.s4 1983009808
    %v1754 = vunpack.c.0.s8 %v1753
    %v1755 = vlaneseq
    %v1756 = vshrl.u32 %v1755, 7
    %v1757 = vsub.s32 %v1754, %v1756
    %v1758 = vrot.slane %v1747, %v1757
    %v1759 = vcombine.high %v1758, %v1758
    %v1762 = vsel %vm344, %v1750, 0
    %1764 = vmatprep.subr.mxu0 %v1627
    %1765 = vmatpush1.msra.mxu0 %v1626
    %1766 = vmatprep.subr.mxu0 %v1629
    %1767 = vmatpush1.msra.mxu0 %v1628
    %1768 = vmatprep.subr.mxu0 %v1631
    %1769 = vmatpush1.msra.mxu0 %v1630
    %1770 = vmatprep.subr.mxu0 %v1633
    %1771 = vmatpush1.msra.mxu0 %v1632
    %1772 = vmatprep.subr.mxu0 %v1635
    %1773 = vmatpush1.msra.mxu0 %v1634
    %1774 = vmatprep.subr.mxu0 %v1637
    %1775 = vmatpush1.msra.mxu0 %v1636
    %1776 = vmatprep.subr.mxu0 %v1639
    %1777 = vmatpush1.msra.mxu0 %v1638
    %1778 = vmatprep.subr.mxu0 %v1641
    %1779 = vmatpush1.msra.mxu0 %v1640
    %1780 = vmatprep.subr.mxu0 0.0
    %1781 = vmatpush1.msra.mxu0 0.0
    %1782 = vmatprep.subr.mxu0 0.0
    %1783 = vmatpush1.msra.mxu0 0.0
    %1784 = vmatprep.subr.mxu0 0.0
    %1785 = vmatpush1.msra.mxu0 0.0
    %1786 = vmatprep.subr.mxu0 0.0
    %1787 = vmatpush1.msra.mxu0 0.0
    %1788 = vmatprep.subr.mxu0 0.0
    %1789 = vmatpush1.msra.mxu0 0.0
    %1790 = vmatprep.subr.mxu0 0.0
    %1791 = vmatpush1.msra.mxu0 0.0
    %1792 = vmatprep.subr.mxu0 0.0
    %1793 = vmatpush1.msra.mxu0 0.0
    %1794 = vmatprep.subr.mxu0 0.0
    %1795 = vmatpush1.msra.mxu0 0.0
    %1796 = vmatprep.subr.mxu0 0.0
    %1797 = vmatpush1.msra.mxu0 0.0
    %1798 = vmatprep.subr.mxu0 0.0
    %1799 = vmatpush1.msra.mxu0 0.0
    %1800 = vmatprep.subr.mxu0 0.0
    %1801 = vmatpush1.msra.mxu0 0.0
    %1802 = vmatprep.subr.mxu0 0.0
    %1803 = vmatpush1.msra.mxu0 0.0
    %1804 = vmatprep.subr.mxu0 0.0
    %1805 = vmatpush1.msra.mxu0 0.0
    %1806 = vmatprep.subr.mxu0 0.0
    %1807 = vmatpush1.msra.mxu0 0.0
    %1808 = vmatprep.subr.mxu0 0.0
    %1809 = vmatpush1.msra.mxu0 0.0
    %1810 = vmatprep.subr.mxu0 0.0
    %1811 = vmatpush1.msra.mxu0 0.0
    %1812 = vmatprep.subr.mxu0 0.0
    %1813 = vmatpush1.msra.mxu0 0.0
    %1814 = vmatprep.subr.mxu0 0.0
    %1815 = vmatpush1.msra.mxu0 0.0
    %1816 = vmatprep.subr.mxu0 0.0
    %1817 = vmatpush1.msra.mxu0 0.0
    %1818 = vmatprep.subr.mxu0 0.0
    %1819 = vmatpush1.msra.mxu0 0.0
    %1820 = vmatprep.subr.mxu0 0.0
    %1821 = vmatpush1.msra.mxu0 0.0
    %1822 = vmatprep.subr.mxu0 0.0
    %1823 = vmatpush1.msra.mxu0 0.0
    %1824 = vmatprep.subr.mxu0 0.0
    %1825 = vmatpush1.msra.mxu0 0.0
    %1826 = vmatprep.subr.mxu0 0.0
    %1827 = vmatpush1.msra.mxu0 0.0
    %1828 = vmatprep.mubr.f32.mxu0 0.0
    %1829 = vmatmul.mubr.f32.gmra.mrb[0].mxu0 %v1762
    %v1830 = vpop.f32.mrb[0].mxu0
    %v1831 = vadd.f32 %v1758, %v1830
    %v1832 = vpop.f32.mrb[0].mxu0
    %v1833 = vadd.f32 %v1759, %v1832
    %1834 = vdwg.mxu0
    %v1835 = vxor.u32 %v1831, 2147483648
    %v1836 = vxor.u32 %v1833, 2147483648
    %v1837 = vmul.f32 %v1835, 1.442695
    %v1838 = vpow.pop %v1837
    %v1839 = vmul.f32 %v1836, 1.442695
    %v1840 = vpow.pop %v1839
    %v1841 = vadd.f32 %v1838, 1.0
    %v1842 = vadd.f32 %v1840, 1.0
    %v1843 = vrcp.pop %v1841
    %v1844 = vmul.f32 1.0, %v1843
    %v1845 = vrcp.pop %v1842
    %v1846 = vmul.f32 1.0, %v1845
    %v1847 = vtanh.pop %v1833
    %v1848 = vmul.f32 %v1844, %v1744
    %v1849 = vmul.f32 %v1844, %v1847
    %1851 = vrot.lane.b32.xlu0 %v1849, 64
    %v1852 = vpop.permute.xlu0 %1851
    %v1854 = vadd.f32 %v1848, %v1852
    %v1855 = vtanh.pop %v1854
    %v1856 = vmul.f32 %v1846, %v1855
    %v1857 = vld [vmem:[%s565] sm:$0xf]
    %1859 = vrot.lane.b32.xlu0 %v1856, 64
    %v1860 = vpop.permute.xlu0 %1859
    %v1863 = vunpack.c.l.s4 1983009808
    %v1864 = vunpack.c.0.s8 %v1863
    %v1865 = vlaneseq
    %v1866 = vshrl.u32 %v1865, 7
    %v1867 = vsub.s32 %v1864, %v1866
    %v1868 = vrot.slane %v1857, %v1867
    %v1869 = vcombine.high %v1868, %v1868
    %v1872 = vsel %vm344, %v1860, 0
    %1874 = vmatprep.subr.mxu0 %v1627
    %1875 = vmatpush1.msra.mxu0 %v1626
    %1876 = vmatprep.subr.mxu0 %v1629
    %1877 = vmatpush1.msra.mxu0 %v1628
    %1878 = vmatprep.subr.mxu0 %v1631
    %1879 = vmatpush1.msra.mxu0 %v1630
    %1880 = vmatprep.subr.mxu0 %v1633
    %1881 = vmatpush1.msra.mxu0 %v1632
    %1882 = vmatprep.subr.mxu0 %v1635
    %1883 = vmatpush1.msra.mxu0 %v1634
    %1884 = vmatprep.subr.mxu0 %v1637
    %1885 = vmatpush1.msra.mxu0 %v1636
    %1886 = vmatprep.subr.mxu0 %v1639
    %1887 = vmatpush1.msra.mxu0 %v1638
    %1888 = vmatprep.subr.mxu0 %v1641
    %1889 = vmatpush1.msra.mxu0 %v1640
    %1890 = vmatprep.subr.mxu0 0.0
    %1891 = vmatpush1.msra.mxu0 0.0
    %1892 = vmatprep.subr.mxu0 0.0
    %1893 = vmatpush1.msra.mxu0 0.0
    %1894 = vmatprep.subr.mxu0 0.0
    %1895 = vmatpush1.msra.mxu0 0.0
    %1896 = vmatprep.subr.mxu0 0.0
    %1897 = vmatpush1.msra.mxu0 0.0
    %1898 = vmatprep.subr.mxu0 0.0
    %1899 = vmatpush1.msra.mxu0 0.0
    %1900 = vmatprep.subr.mxu0 0.0
    %1901 = vmatpush1.msra.mxu0 0.0
    %1902 = vmatprep.subr.mxu0 0.0
    %1903 = vmatpush1.msra.mxu0 0.0
    %1904 = vmatprep.subr.mxu0 0.0
    %1905 = vmatpush1.msra.mxu0 0.0
    %1906 = vmatprep.subr.mxu0 0.0
    %1907 = vmatpush1.msra.mxu0 0.0
    %1908 = vmatprep.subr.mxu0 0.0
    %1909 = vmatpush1.msra.mxu0 0.0
    %1910 = vmatprep.subr.mxu0 0.0
    %1911 = vmatpush1.msra.mxu0 0.0
    %1912 = vmatprep.subr.mxu0 0.0
    %1913 = vmatpush1.msra.mxu0 0.0
    %1914 = vmatprep.subr.mxu0 0.0
    %1915 = vmatpush1.msra.mxu0 0.0
    %1916 = vmatprep.subr.mxu0 0.0
    %1917 = vmatpush1.msra.mxu0 0.0
    %1918 = vmatprep.subr.mxu0 0.0
    %1919 = vmatpush1.msra.mxu0 0.0
    %1920 = vmatprep.subr.mxu0 0.0
    %1921 = vmatpush1.msra.mxu0 0.0
    %1922 = vmatprep.subr.mxu0 0.0
    %1923 = vmatpush1.msra.mxu0 0.0
    %1924 = vmatprep.subr.mxu0 0.0
    %1925 = vmatpush1.msra.mxu0 0.0
    %1926 = vmatprep.subr.mxu0 0.0
    %1927 = vmatpush1.msra.mxu0 0.0
    %1928 = vmatprep.subr.mxu0 0.0
    %1929 = vmatpush1.msra.mxu0 0.0
    %1930 = vmatprep.subr.mxu0 0.0
    %1931 = vmatpush1.msra.mxu0 0.0
    %1932 = vmatprep.subr.mxu0 0.0
    %1933 = vmatpush1.msra.mxu0 0.0
    %1934 = vmatprep.subr.mxu0 0.0
    %1935 = vmatpush1.msra.mxu0 0.0
    %1936 = vmatprep.subr.mxu0 0.0
    %1937 = vmatpush1.msra.mxu0 0.0
    %1938 = vmatprep.mubr.f32.mxu0 0.0
    %1939 = vmatmul.mubr.f32.gmra.mrb[0].mxu0 %v1872
    %v1940 = vpop.f32.mrb[0].mxu0
    %v1941 = vadd.f32 %v1868, %v1940
    %v1942 = vpop.f32.mrb[0].mxu0
    %v1943 = vadd.f32 %v1869, %v1942
    %1944 = vdwg.mxu0
    %v1945 = vxor.u32 %v1941, 2147483648
    %v1946 = vxor.u32 %v1943, 2147483648
    %v1947 = vmul.f32 %v1945, 1.442695
    %v1948 = vpow.pop %v1947
    %v1949 = vmul.f32 %v1946, 1.442695
    %v1950 = vpow.pop %v1949
    %v1951 = vadd.f32 %v1948, 1.0
    %v1952 = vadd.f32 %v1950, 1.0
    %v1953 = vrcp.pop %v1951
    %v1954 = vmul.f32 1.0, %v1953
    %v1955 = vrcp.pop %v1952
    %v1956 = vmul.f32 1.0, %v1955
    %v1957 = vtanh.pop %v1943
    %v1958 = vmul.f32 %v1954, %v1854
    %v1959 = vmul.f32 %v1954, %v1957
    %1961 = vrot.lane.b32.xlu0 %v1959, 64
    %v1962 = vpop.permute.xlu0 %1961
    %v1964 = vadd.f32 %v1958, %v1962
    %v1965 = vtanh.pop %v1964
    %v1966 = vmul.f32 %v1956, %v1965
    %v1967 = vld [vmem:[%s681] sm:$0xf]
    %1969 = vrot.lane.b32.xlu0 %v1966, 64
    %v1970 = vpop.permute.xlu0 %1969
    %v1973 = vunpack.c.l.s4 1983009808
    %v1974 = vunpack.c.0.s8 %v1973
    %v1975 = vlaneseq
    %v1976 = vshrl.u32 %v1975, 7
    %v1977 = vsub.s32 %v1974, %v1976
    %v1978 = vrot.slane %v1967, %v1977
    %v1979 = vcombine.high %v1978, %v1978
    %v1982 = vsel %vm344, %v1970, 0
    %1984 = vmatprep.subr.mxu0 %v1627
    %1985 = vmatpush1.msra.mxu0 %v1626
    %1986 = vmatprep.subr.mxu0 %v1629
    %1987 = vmatpush1.msra.mxu0 %v1628
    %1988 = vmatprep.subr.mxu0 %v1631
    %1989 = vmatpush1.msra.mxu0 %v1630
    %1990 = vmatprep.subr.mxu0 %v1633
    %1991 = vmatpush1.msra.mxu0 %v1632
    %1992 = vmatprep.subr.mxu0 %v1635
    %1993 = vmatpush1.msra.mxu0 %v1634
    %1994 = vmatprep.subr.mxu0 %v1637
    %1995 = vmatpush1.msra.mxu0 %v1636
    %1996 = vmatprep.subr.mxu0 %v1639
    %1997 = vmatpush1.msra.mxu0 %v1638
    %1998 = vmatprep.subr.mxu0 %v1641
    %1999 = vmatpush1.msra.mxu0 %v1640
    %2000 = vmatprep.subr.mxu0 0.0
    %2001 = vmatpush1.msra.mxu0 0.0
    %2002 = vmatprep.subr.mxu0 0.0
    %2003 = vmatpush1.msra.mxu0 0.0
    %2004 = vmatprep.subr.mxu0 0.0
    %2005 = vmatpush1.msra.mxu0 0.0
    %2006 = vmatprep.subr.mxu0 0.0
    %2007 = vmatpush1.msra.mxu0 0.0
    %2008 = vmatprep.subr.mxu0 0.0
    %2009 = vmatpush1.msra.mxu0 0.0
    %2010 = vmatprep.subr.mxu0 0.0
    %2011 = vmatpush1.msra.mxu0 0.0
    %2012 = vmatprep.subr.mxu0 0.0
    %2013 = vmatpush1.msra.mxu0 0.0
    %2014 = vmatprep.subr.mxu0 0.0
    %2015 = vmatpush1.msra.mxu0 0.0
    %2016 = vmatprep.subr.mxu0 0.0
    %2017 = vmatpush1.msra.mxu0 0.0
    %2018 = vmatprep.subr.mxu0 0.0
    %2019 = vmatpush1.msra.mxu0 0.0
    %2020 = vmatprep.subr.mxu0 0.0
    %2021 = vmatpush1.msra.mxu0 0.0
    %2022 = vmatprep.subr.mxu0 0.0
    %2023 = vmatpush1.msra.mxu0 0.0
    %2024 = vmatprep.subr.mxu0 0.0
    %2025 = vmatpush1.msra.mxu0 0.0
    %2026 = vmatprep.subr.mxu0 0.0
    %2027 = vmatpush1.msra.mxu0 0.0
    %2028 = vmatprep.subr.mxu0 0.0
    %2029 = vmatpush1.msra.mxu0 0.0
    %2030 = vmatprep.subr.mxu0 0.0
    %2031 = vmatpush1.msra.mxu0 0.0
    %2032 = vmatprep.subr.mxu0 0.0
    %2033 = vmatpush1.msra.mxu0 0.0
    %2034 = vmatprep.subr.mxu0 0.0
    %2035 = vmatpush1.msra.mxu0 0.0
    %2036 = vmatprep.subr.mxu0 0.0
    %2037 = vmatpush1.msra.mxu0 0.0
    %2038 = vmatprep.subr.mxu0 0.0
    %2039 = vmatpush1.msra.mxu0 0.0
    %2040 = vmatprep.subr.mxu0 0.0
    %2041 = vmatpush1.msra.mxu0 0.0
    %2042 = vmatprep.subr.mxu0 0.0
    %2043 = vmatpush1.msra.mxu0 0.0
    %2044 = vmatprep.subr.mxu0 0.0
    %2045 = vmatpush1.msra.mxu0 0.0
    %2046 = vmatprep.subr.mxu0 0.0
    %2047 = vmatpush1.msra.mxu0 0.0
    %2048 = vmatprep.mubr.f32.mxu0 0.0
    %2049 = vmatmul.mubr.f32.gmra.mrb[0].mxu0 %v1982
    %v2050 = vpop.f32.mrb[0].mxu0
    %v2051 = vadd.f32 %v1978, %v2050
    %v2052 = vpop.f32.mrb[0].mxu0
    %v2053 = vadd.f32 %v1979, %v2052
    %2054 = vdwg.mxu0
    %v2055 = vxor.u32 %v2051, 2147483648
    %v2056 = vxor.u32 %v2053, 2147483648
    %v2057 = vmul.f32 %v2055, 1.442695
    %v2058 = vpow.pop %v2057
    %v2059 = vmul.f32 %v2056, 1.442695
    %v2060 = vpow.pop %v2059
    %v2061 = vadd.f32 %v2058, 1.0
    %v2062 = vadd.f32 %v2060, 1.0
    %v2063 = vrcp.pop %v2061
    %v2064 = vmul.f32 1.0, %v2063
    %v2065 = vrcp.pop %v2062
    %v2066 = vmul.f32 1.0, %v2065
    %v2067 = vtanh.pop %v2053
    %v2068 = vmul.f32 %v2064, %v1964
    %v2069 = vmul.f32 %v2064, %v2067
    %2071 = vrot.lane.b32.xlu0 %v2069, 64
    %v2072 = vpop.permute.xlu0 %2071
    %v2074 = vadd.f32 %v2068, %v2072
    %v2075 = vtanh.pop %v2074
    %v2076 = vmul.f32 %v2066, %v2075
    %v2077 = vld [vmem:[%s797] sm:$0xf]
    %2079 = vrot.lane.b32.xlu0 %v2076, 64
    %v2080 = vpop.permute.xlu0 %2079
    %v2083 = vunpack.c.l.s4 1983009808
    %v2084 = vunpack.c.0.s8 %v2083
    %v2085 = vlaneseq
    %v2086 = vshrl.u32 %v2085, 7
    %v2087 = vsub.s32 %v2084, %v2086
    %v2088 = vrot.slane %v2077, %v2087
    %v2089 = vcombine.high %v2088, %v2088
    %v2092 = vsel %vm344, %v2080, 0
    %2094 = vmatprep.subr.mxu0 %v1627
    %2095 = vmatpush1.msra.mxu0 %v1626
    %2096 = vmatprep.subr.mxu0 %v1629
    %2097 = vmatpush1.msra.mxu0 %v1628
    %2098 = vmatprep.subr.mxu0 %v1631
    %2099 = vmatpush1.msra.mxu0 %v1630
    %2100 = vmatprep.subr.mxu0 %v1633
    %2101 = vmatpush1.msra.mxu0 %v1632
    %2102 = vmatprep.subr.mxu0 %v1635
    %2103 = vmatpush1.msra.mxu0 %v1634
    %2104 = vmatprep.subr.mxu0 %v1637
    %2105 = vmatpush1.msra.mxu0 %v1636
    %2106 = vmatprep.subr.mxu0 %v1639
    %2107 = vmatpush1.msra.mxu0 %v1638
    %2108 = vmatprep.subr.mxu0 %v1641
    %2109 = vmatpush1.msra.mxu0 %v1640
    %2110 = vmatprep.subr.mxu0 0.0
    %2111 = vmatpush1.msra.mxu0 0.0
    %2112 = vmatprep.subr.mxu0 0.0
    %2113 = vmatpush1.msra.mxu0 0.0
    %2114 = vmatprep.subr.mxu0 0.0
    %2115 = vmatpush1.msra.mxu0 0.0
    %2116 = vmatprep.subr.mxu0 0.0
    %2117 = vmatpush1.msra.mxu0 0.0
    %2118 = vmatprep.subr.mxu0 0.0
    %2119 = vmatpush1.msra.mxu0 0.0
    %2120 = vmatprep.subr.mxu0 0.0
    %2121 = vmatpush1.msra.mxu0 0.0
    %2122 = vmatprep.subr.mxu0 0.0
    %2123 = vmatpush1.msra.mxu0 0.0
    %2124 = vmatprep.subr.mxu0 0.0
    %2125 = vmatpush1.msra.mxu0 0.0
    %2126 = vmatprep.subr.mxu0 0.0
    %2127 = vmatpush1.msra.mxu0 0.0
    %2128 = vmatprep.subr.mxu0 0.0
    %2129 = vmatpush1.msra.mxu0 0.0
    %2130 = vmatprep.subr.mxu0 0.0
    %2131 = vmatpush1.msra.mxu0 0.0
    %2132 = vmatprep.subr.mxu0 0.0
    %2133 = vmatpush1.msra.mxu0 0.0
    %2134 = vmatprep.subr.mxu0 0.0
    %2135 = vmatpush1.msra.mxu0 0.0
    %2136 = vmatprep.subr.mxu0 0.0
    %2137 = vmatpush1.msra.mxu0 0.0
    %2138 = vmatprep.subr.mxu0 0.0
    %2139 = vmatpush1.msra.mxu0 0.0
    %2140 = vmatprep.subr.mxu0 0.0
    %2141 = vmatpush1.msra.mxu0 0.0
    %2142 = vmatprep.subr.mxu0 0.0
    %2143 = vmatpush1.msra.mxu0 0.0
    %2144 = vmatprep.subr.mxu0 0.0
    %2145 = vmatpush1.msra.mxu0 0.0
    %2146 = vmatprep.subr.mxu0 0.0
    %2147 = vmatpush1.msra.mxu0 0.0
    %2148 = vmatprep.subr.mxu0 0.0
    %2149 = vmatpush1.msra.mxu0 0.0
    %2150 = vmatprep.subr.mxu0 0.0
    %2151 = vmatpush1.msra.mxu0 0.0
    %2152 = vmatprep.subr.mxu0 0.0
    %2153 = vmatpush1.msra.mxu0 0.0
    %2154 = vmatprep.subr.mxu0 0.0
    %2155 = vmatpush1.msra.mxu0 0.0
    %2156 = vmatprep.subr.mxu0 0.0
    %2157 = vmatpush1.msra.mxu0 0.0
    %2158 = vmatprep.mubr.f32.mxu0 0.0
    %2159 = vmatmul.mubr.f32.gmra.mrb[0].mxu0 %v2092
    %v2160 = vpop.f32.mrb[0].mxu0
    %v2161 = vadd.f32 %v2088, %v2160
    %v2162 = vpop.f32.mrb[0].mxu0
    %v2163 = vadd.f32 %v2089, %v2162
    %2164 = vdwg.mxu0
    %v2165 = vxor.u32 %v2161, 2147483648
    %v2166 = vxor.u32 %v2163, 2147483648
    %v2167 = vmul.f32 %v2165, 1.442695
    %v2168 = vpow.pop %v2167
    %v2169 = vmul.f32 %v2166, 1.442695
    %v2170 = vpow.pop %v2169
    %v2171 = vadd.f32 %v2168, 1.0
    %v2172 = vadd.f32 %v2170, 1.0
    %v2173 = vrcp.pop %v2171
    %v2174 = vmul.f32 1.0, %v2173
    %v2175 = vrcp.pop %v2172
    %v2176 = vmul.f32 1.0, %v2175
    %v2177 = vtanh.pop %v2163
    %v2178 = vmul.f32 %v2174, %v2074
    %v2179 = vmul.f32 %v2174, %v2177
    %2181 = vrot.lane.b32.xlu0 %v2179, 64
    %v2182 = vpop.permute.xlu0 %2181
    %v2184 = vadd.f32 %v2178, %v2182
    %v2185 = vtanh.pop %v2184
    %v2186 = vmul.f32 %v2176, %v2185
    %v2187 = vld [vmem:[%s913] sm:$0xf]
    %2189 = vrot.lane.b32.xlu0 %v2186, 64
    %v2190 = vpop.permute.xlu0 %2189
    %v2193 = vunpack.c.l.s4 1983009808
    %v2194 = vunpack.c.0.s8 %v2193
    %v2195 = vlaneseq
    %v2196 = vshrl.u32 %v2195, 7
    %v2197 = vsub.s32 %v2194, %v2196
    %v2198 = vrot.slane %v2187, %v2197
    %v2199 = vcombine.high %v2198, %v2198
    %v2202 = vsel %vm344, %v2190, 0
    %2204 = vmatprep.subr.mxu0 %v1627
    %2205 = vmatpush1.msra.mxu0 %v1626
    %2206 = vmatprep.subr.mxu0 %v1629
    %2207 = vmatpush1.msra.mxu0 %v1628
    %2208 = vmatprep.subr.mxu0 %v1631
    %2209 = vmatpush1.msra.mxu0 %v1630
    %2210 = vmatprep.subr.mxu0 %v1633
    %2211 = vmatpush1.msra.mxu0 %v1632
    %2212 = vmatprep.subr.mxu0 %v1635
    %2213 = vmatpush1.msra.mxu0 %v1634
    %2214 = vmatprep.subr.mxu0 %v1637
    %2215 = vmatpush1.msra.mxu0 %v1636
    %2216 = vmatprep.subr.mxu0 %v1639
    %2217 = vmatpush1.msra.mxu0 %v1638
    %2218 = vmatprep.subr.mxu0 %v1641
    %2219 = vmatpush1.msra.mxu0 %v1640
    %2220 = vmatprep.subr.mxu0 0.0
    %2221 = vmatpush1.msra.mxu0 0.0
    %2222 = vmatprep.subr.mxu0 0.0
    %2223 = vmatpush1.msra.mxu0 0.0
    %2224 = vmatprep.subr.mxu0 0.0
    %2225 = vmatpush1.msra.mxu0 0.0
    %2226 = vmatprep.subr.mxu0 0.0
    %2227 = vmatpush1.msra.mxu0 0.0
    %2228 = vmatprep.subr.mxu0 0.0
    %2229 = vmatpush1.msra.mxu0 0.0
    %2230 = vmatprep.subr.mxu0 0.0
    %2231 = vmatpush1.msra.mxu0 0.0
    %2232 = vmatprep.subr.mxu0 0.0
    %2233 = vmatpush1.msra.mxu0 0.0
    %2234 = vmatprep.subr.mxu0 0.0
    %2235 = vmatpush1.msra.mxu0 0.0
    %2236 = vmatprep.subr.mxu0 0.0
    %2237 = vmatpush1.msra.mxu0 0.0
    %2238 = vmatprep.subr.mxu0 0.0
    %2239 = vmatpush1.msra.mxu0 0.0
    %2240 = vmatprep.subr.mxu0 0.0
    %2241 = vmatpush1.msra.mxu0 0.0
    %2242 = vmatprep.subr.mxu0 0.0
    %2243 = vmatpush1.msra.mxu0 0.0
    %2244 = vmatprep.subr.mxu0 0.0
    %2245 = vmatpush1.msra.mxu0 0.0
    %2246 = vmatprep.subr.mxu0 0.0
    %2247 = vmatpush1.msra.mxu0 0.0
    %2248 = vmatprep.subr.mxu0 0.0
    %2249 = vmatpush1.msra.mxu0 0.0
    %2250 = vmatprep.subr.mxu0 0.0
    %2251 = vmatpush1.msra.mxu0 0.0
    %2252 = vmatprep.subr.mxu0 0.0
    %2253 = vmatpush1.msra.mxu0 0.0
    %2254 = vmatprep.subr.mxu0 0.0
    %2255 = vmatpush1.msra.mxu0 0.0
    %2256 = vmatprep.subr.mxu0 0.0
    %2257 = vmatpush1.msra.mxu0 0.0
    %2258 = vmatprep.subr.mxu0 0.0
    %2259 = vmatpush1.msra.mxu0 0.0
    %2260 = vmatprep.subr.mxu0 0.0
    %2261 = vmatpush1.msra.mxu0 0.0
    %2262 = vmatprep.subr.mxu0 0.0
    %2263 = vmatpush1.msra.mxu0 0.0
    %2264 = vmatprep.subr.mxu0 0.0
    %2265 = vmatpush1.msra.mxu0 0.0
    %2266 = vmatprep.subr.mxu0 0.0
    %2267 = vmatpush1.msra.mxu0 0.0
    %2268 = vmatprep.mubr.f32.mxu0 0.0
    %2269 = vmatmul.mubr.f32.gmra.mrb[0].mxu0 %v2202
    %v2270 = vpop.f32.mrb[0].mxu0
    %v2271 = vadd.f32 %v2198, %v2270
    %v2272 = vpop.f32.mrb[0].mxu0
    %v2273 = vadd.f32 %v2199, %v2272
    %2274 = vdwg.mxu0
    %v2275 = vxor.u32 %v2271, 2147483648
    %v2276 = vxor.u32 %v2273, 2147483648
    %v2277 = vmul.f32 %v2275, 1.442695
    %v2278 = vpow.pop %v2277
    %v2279 = vmul.f32 %v2276, 1.442695
    %v2280 = vpow.pop %v2279
    %v2281 = vadd.f32 %v2278, 1.0
    %v2282 = vadd.f32 %v2280, 1.0
    %v2283 = vrcp.pop %v2281
    %v2284 = vmul.f32 1.0, %v2283
    %v2285 = vrcp.pop %v2282
    %v2286 = vmul.f32 1.0, %v2285
    %v2287 = vtanh.pop %v2273
    %v2288 = vmul.f32 %v2284, %v2184
    %v2289 = vmul.f32 %v2284, %v2287
    %2291 = vrot.lane.b32.xlu0 %v2289, 64
    %v2292 = vpop.permute.xlu0 %2291
    %v2294 = vadd.f32 %v2288, %v2292
    %v2295 = vtanh.pop %v2294
    %v2296 = vmul.f32 %v2286, %v2295
    %v2297 = vld [vmem:[%s1029] sm:$0xf]
    %2299 = vrot.lane.b32.xlu0 %v2296, 64
    %v2300 = vpop.permute.xlu0 %2299
    %v2303 = vunpack.c.l.s4 1983009808
    %v2304 = vunpack.c.0.s8 %v2303
    %v2305 = vlaneseq
    %v2306 = vshrl.u32 %v2305, 7
    %v2307 = vsub.s32 %v2304, %v2306
    %v2308 = vrot.slane %v2297, %v2307
    %v2309 = vcombine.high %v2308, %v2308
    %v2312 = vsel %vm344, %v2300, 0
    %2314 = vmatprep.subr.mxu0 %v1627
    %2315 = vmatpush1.msra.mxu0 %v1626
    %2316 = vmatprep.subr.mxu0 %v1629
    %2317 = vmatpush1.msra.mxu0 %v1628
    %2318 = vmatprep.subr.mxu0 %v1631
    %2319 = vmatpush1.msra.mxu0 %v1630
    %2320 = vmatprep.subr.mxu0 %v1633
    %2321 = vmatpush1.msra.mxu0 %v1632
    %2322 = vmatprep.subr.mxu0 %v1635
    %2323 = vmatpush1.msra.mxu0 %v1634
    %2324 = vmatprep.subr.mxu0 %v1637
    %2325 = vmatpush1.msra.mxu0 %v1636
    %2326 = vmatprep.subr.mxu0 %v1639
    %2327 = vmatpush1.msra.mxu0 %v1638
    %2328 = vmatprep.subr.mxu0 %v1641
    %2329 = vmatpush1.msra.mxu0 %v1640
    %2330 = vmatprep.subr.mxu0 0.0
    %2331 = vmatpush1.msra.mxu0 0.0
    %2332 = vmatprep.subr.mxu0 0.0
    %2333 = vmatpush1.msra.mxu0 0.0
    %2334 = vmatprep.subr.mxu0 0.0
    %2335 = vmatpush1.msra.mxu0 0.0
    %2336 = vmatprep.subr.mxu0 0.0
    %2337 = vmatpush1.msra.mxu0 0.0
    %2338 = vmatprep.subr.mxu0 0.0
    %2339 = vmatpush1.msra.mxu0 0.0
    %2340 = vmatprep.subr.mxu0 0.0
    %2341 = vmatpush1.msra.mxu0 0.0
    %2342 = vmatprep.subr.mxu0 0.0
    %2343 = vmatpush1.msra.mxu0 0.0
    %2344 = vmatprep.subr.mxu0 0.0
    %2345 = vmatpush1.msra.mxu0 0.0
    %2346 = vmatprep.subr.mxu0 0.0
    %2347 = vmatpush1.msra.mxu0 0.0
    %2348 = vmatprep.subr.mxu0 0.0
    %2349 = vmatpush1.msra.mxu0 0.0
    %2350 = vmatprep.subr.mxu0 0.0
    %2351 = vmatpush1.msra.mxu0 0.0
    %2352 = vmatprep.subr.mxu0 0.0
    %2353 = vmatpush1.msra.mxu0 0.0
    %2354 = vmatprep.subr.mxu0 0.0
    %2355 = vmatpush1.msra.mxu0 0.0
    %2356 = vmatprep.subr.mxu0 0.0
    %2357 = vmatpush1.msra.mxu0 0.0
    %2358 = vmatprep.subr.mxu0 0.0
    %2359 = vmatpush1.msra.mxu0 0.0
    %2360 = vmatprep.subr.mxu0 0.0
    %2361 = vmatpush1.msra.mxu0 0.0
    %2362 = vmatprep.subr.mxu0 0.0
    %2363 = vmatpush1.msra.mxu0 0.0
    %2364 = vmatprep.subr.mxu0 0.0
    %2365 = vmatpush1.msra.mxu0 0.0
    %2366 = vmatprep.subr.mxu0 0.0
    %2367 = vmatpush1.msra.mxu0 0.0
    %2368 = vmatprep.subr.mxu0 0.0
    %2369 = vmatpush1.msra.mxu0 0.0
    %2370 = vmatprep.subr.mxu0 0.0
    %2371 = vmatpush1.msra.mxu0 0.0
    %2372 = vmatprep.subr.mxu0 0.0
    %2373 = vmatpush1.msra.mxu0 0.0
    %2374 = vmatprep.subr.mxu0 0.0
    %2375 = vmatpush1.msra.mxu0 0.0
    %2376 = vmatprep.subr.mxu0 0.0
    %2377 = vmatpush1.msra.mxu0 0.0
    %2378 = vmatprep.mubr.f32.mxu0 0.0
    %2379 = vmatmul.mubr.f32.gmra.mrb[0].mxu0 %v2312
    %v2380 = vpop.f32.mrb[0].mxu0
    %v2381 = vadd.f32 %v2308, %v2380
    %v2382 = vpop.f32.mrb[0].mxu0
    %v2383 = vadd.f32 %v2309, %v2382
    %2384 = vdwg.mxu0
    %v2385 = vxor.u32 %v2381, 2147483648
    %v2386 = vxor.u32 %v2383, 2147483648
    %v2387 = vmul.f32 %v2385, 1.442695
    %v2388 = vpow.pop %v2387
    %v2389 = vmul.f32 %v2386, 1.442695
    %v2390 = vpow.pop %v2389
    %v2391 = vadd.f32 %v2388, 1.0
    %v2392 = vadd.f32 %v2390, 1.0
    %v2393 = vrcp.pop %v2391
    %v2394 = vmul.f32 1.0, %v2393
    %v2395 = vrcp.pop %v2392
    %v2396 = vmul.f32 1.0, %v2395
    %v2397 = vtanh.pop %v2383
    %v2398 = vmul.f32 %v2394, %v2294
    %v2399 = vmul.f32 %v2394, %v2397
    %2401 = vrot.lane.b32.xlu0 %v2399, 64
    %v2402 = vpop.permute.xlu0 %2401
    %v2404 = vadd.f32 %v2398, %v2402
    %v2405 = vtanh.pop %v2404
    %v2406 = vmul.f32 %v2396, %v2405
    %v2407 = vld [vmem:[%s1145] sm:$0xf]
    %2409 = vrot.lane.b32.xlu0 %v2406, 64
    %v2410 = vpop.permute.xlu0 %2409
    %v2413 = vunpack.c.l.s4 1983009808
    %v2414 = vunpack.c.0.s8 %v2413
    %v2415 = vlaneseq
    %v2416 = vshrl.u32 %v2415, 7
    %v2417 = vsub.s32 %v2414, %v2416
    %v2418 = vrot.slane %v2407, %v2417
    %v2419 = vcombine.high %v2418, %v2418
    %v2422 = vsel %vm344, %v2410, 0
    %2424 = vmatprep.subr.mxu0 %v1627
    %2425 = vmatpush1.msra.mxu0 %v1626
    %2426 = vmatprep.subr.mxu0 %v1629
    %2427 = vmatpush1.msra.mxu0 %v1628
    %2428 = vmatprep.subr.mxu0 %v1631
    %2429 = vmatpush1.msra.mxu0 %v1630
    %2430 = vmatprep.subr.mxu0 %v1633
    %2431 = vmatpush1.msra.mxu0 %v1632
    %2432 = vmatprep.subr.mxu0 %v1635
    %2433 = vmatpush1.msra.mxu0 %v1634
    %2434 = vmatprep.subr.mxu0 %v1637
    %2435 = vmatpush1.msra.mxu0 %v1636
    %2436 = vmatprep.subr.mxu0 %v1639
    %2437 = vmatpush1.msra.mxu0 %v1638
    %2438 = vmatprep.subr.mxu0 %v1641
    %2439 = vmatpush1.msra.mxu0 %v1640
    %2440 = vmatprep.subr.mxu0 0.0
    %2441 = vmatpush1.msra.mxu0 0.0
    %2442 = vmatprep.subr.mxu0 0.0
    %2443 = vmatpush1.msra.mxu0 0.0
    %2444 = vmatprep.subr.mxu0 0.0
    %2445 = vmatpush1.msra.mxu0 0.0
    %2446 = vmatprep.subr.mxu0 0.0
    %2447 = vmatpush1.msra.mxu0 0.0
    %2448 = vmatprep.subr.mxu0 0.0
    %2449 = vmatpush1.msra.mxu0 0.0
    %2450 = vmatprep.subr.mxu0 0.0
    %2451 = vmatpush1.msra.mxu0 0.0
    %2452 = vmatprep.subr.mxu0 0.0
    %2453 = vmatpush1.msra.mxu0 0.0
    %2454 = vmatprep.subr.mxu0 0.0
    %2455 = vmatpush1.msra.mxu0 0.0
    %2456 = vmatprep.subr.mxu0 0.0
    %2457 = vmatpush1.msra.mxu0 0.0
    %2458 = vmatprep.subr.mxu0 0.0
    %2459 = vmatpush1.msra.mxu0 0.0
    %2460 = vmatprep.subr.mxu0 0.0
    %2461 = vmatpush1.msra.mxu0 0.0
    %2462 = vmatprep.subr.mxu0 0.0
    %2463 = vmatpush1.msra.mxu0 0.0
    %2464 = vmatprep.subr.mxu0 0.0
    %2465 = vmatpush1.msra.mxu0 0.0
    %2466 = vmatprep.subr.mxu0 0.0
    %2467 = vmatpush1.msra.mxu0 0.0
    %2468 = vmatprep.subr.mxu0 0.0
    %2469 = vmatpush1.msra.mxu0 0.0
    %2470 = vmatprep.subr.mxu0 0.0
    %2471 = vmatpush1.msra.mxu0 0.0
    %2472 = vmatprep.subr.mxu0 0.0
    %2473 = vmatpush1.msra.mxu0 0.0
    %2474 = vmatprep.subr.mxu0 0.0
    %2475 = vmatpush1.msra.mxu0 0.0
    %2476 = vmatprep.subr.mxu0 0.0
    %2477 = vmatpush1.msra.mxu0 0.0
    %2478 = vmatprep.subr.mxu0 0.0
    %2479 = vmatpush1.msra.mxu0 0.0
    %2480 = vmatprep.subr.mxu0 0.0
    %2481 = vmatpush1.msra.mxu0 0.0
    %2482 = vmatprep.subr.mxu0 0.0
    %2483 = vmatpush1.msra.mxu0 0.0
    %2484 = vmatprep.subr.mxu0 0.0
    %2485 = vmatpush1.msra.mxu0 0.0
    %2486 = vmatprep.subr.mxu0 0.0
    %2487 = vmatpush1.msra.mxu0 0.0
    %2488 = vmatprep.mubr.f32.mxu0 0.0
    %2489 = vmatmul.mubr.f32.gmra.mrb[0].mxu0 %v2422
    %v2490 = vpop.f32.mrb[0].mxu0
    %v2491 = vadd.f32 %v2418, %v2490
    %v2492 = vpop.f32.mrb[0].mxu0
    %v2493 = vadd.f32 %v2419, %v2492
    %2494 = vdwg.mxu0
    %v2495 = vxor.u32 %v2491, 2147483648
    %v2496 = vxor.u32 %v2493, 2147483648
    %v2497 = vmul.f32 %v2495, 1.442695
    %v2498 = vpow.pop %v2497
    %v2499 = vmul.f32 %v2496, 1.442695
    %v2500 = vpow.pop %v2499
    %v2501 = vadd.f32 %v2498, 1.0
    %v2502 = vadd.f32 %v2500, 1.0
    %v2503 = vrcp.pop %v2501
    %v2504 = vmul.f32 1.0, %v2503
    %v2505 = vrcp.pop %v2502
    %v2506 = vmul.f32 1.0, %v2505
    %v2507 = vtanh.pop %v2493
    %v2508 = vmul.f32 %v2504, %v2404
    %v2509 = vmul.f32 %v2504, %v2507
    %2511 = vrot.lane.b32.xlu0 %v2509, 64
    %v2512 = vpop.permute.xlu0 %2511
    %v2514 = vadd.f32 %v2508, %v2512
    %v2515 = vtanh.pop %v2514
    %v2516 = vmul.f32 %v2506, %v2515
    %v2517 = vld [vmem:[%s11] sm:$0x1]
    %v2518 = vadd.f32 %v2517, 1e-05
    %v2519 = vrsqrt.pop %v2518
    %v2520 = vld [vmem:[%s10] sm:$0x1]
    %v2522 = vlaneseq
    %v2523 = vshrl.u32 %v2522, 7
    %v2524 = vsub.s32 0, %v2523
    %v2525 = vrot.slane %v2520, %v2524
    %2526 = vrot.lane.b32.xlu0 %v2525, 64
    %v2527 = vpop.permute.xlu0 %2526
    %v2529 = vsub.f32 %v2516, %v2527
    %v2531 = vlaneseq
    %v2532 = vshrl.u32 %v2531, 7
    %v2533 = vsub.s32 0, %v2532
    %v2534 = vrot.slane %v2519, %v2533
    %2535 = vrot.lane.b32.xlu0 %v2534, 64
    %v2536 = vpop.permute.xlu0 %2535
    %v2538 = vmul.f32 %v2529, %v2536
    %v2539 = vld [vmem:[%s8] sm:$0x1]
    %v2541 = vlaneseq
    %v2542 = vshrl.u32 %v2541, 7
    %v2543 = vsub.s32 0, %v2542
    %v2544 = vrot.slane %v2539, %v2543
    %2545 = vrot.lane.b32.xlu0 %v2544, 64
    %v2546 = vpop.permute.xlu0 %2545
    %v2548 = vmul.f32 %v2538, %v2546
    %v2549 = vld [vmem:[%s9] sm:$0x1]
    %v2551 = vlaneseq
    %v2552 = vshrl.u32 %v2551, 7
    %v2553 = vsub.s32 0, %v2552
    %v2554 = vrot.slane %v2549, %v2553
    %2555 = vrot.lane.b32.xlu0 %v2554, 64
    %v2556 = vpop.permute.xlu0 %2555
    %v2558 = vadd.f32 %v2548, %v2556
    %v2559 = vld [vmem:[%s12] sm:$0xff]
    %v2560 = vld [vmem:[%s12 + $0x8] sm:$0xff]
    %v2561 = vld [vmem:[%s12 + $0x10] sm:$0xff]
    %v2562 = vld [vmem:[%s12 + $0x18] sm:$0xff]
    %v2563 = vld [vmem:[%s12 + $0x20] sm:$0xff]
    %v2564 = vld [vmem:[%s12 + $0x28] sm:$0xff]
    %v2565 = vld [vmem:[%s12 + $0x30] sm:$0xff]
    %v2566 = vld [vmem:[%s12 + $0x38] sm:$0xff]
    %v2567 = vld [vmem:[%s13] sm:$0x1]
    %v2569 = vlaneseq
    %v2570 = vshrl.u32 %v2569, 7
    %v2571 = vsub.s32 0, %v2570
    %v2572 = vrot.slane %v2567, %v2571
    %2575 = vrot.lane.b32.xlu0 %v2558, 64
    %v2576 = vpop.permute.xlu0 %2575
    %v2577 = vsel %vm344, %v2576, 0
    %2579 = vmatprep.subr.mxu0 0.0
    %2580 = vmatpush1.msra.mxu0 %v2559
    %2581 = vmatprep.subr.mxu0 0.0
    %2582 = vmatpush1.msra.mxu0 %v2560
    %2583 = vmatprep.subr.mxu0 0.0
    %2584 = vmatpush1.msra.mxu0 %v2561
    %2585 = vmatprep.subr.mxu0 0.0
    %2586 = vmatpush1.msra.mxu0 %v2562
    %2587 = vmatprep.subr.mxu0 0.0
    %2588 = vmatpush1.msra.mxu0 %v2563
    %2589 = vmatprep.subr.mxu0 0.0
    %2590 = vmatpush1.msra.mxu0 %v2564
    %2591 = vmatprep.subr.mxu0 0.0
    %2592 = vmatpush1.msra.mxu0 %v2565
    %2593 = vmatprep.subr.mxu0 0.0
    %2594 = vmatpush1.msra.mxu0 %v2566
    %2595 = vmatprep.subr.mxu0 0.0
    %2596 = vmatpush1.msra.mxu0 0.0
    %2597 = vmatprep.subr.mxu0 0.0
    %2598 = vmatpush1.msra.mxu0 0.0
    %2599 = vmatprep.subr.mxu0 0.0
    %2600 = vmatpush1.msra.mxu0 0.0
    %2601 = vmatprep.subr.mxu0 0.0
    %2602 = vmatpush1.msra.mxu0 0.0
    %2603 = vmatprep.subr.mxu0 0.0
    %2604 = vmatpush1.msra.mxu0 0.0
    %2605 = vmatprep.subr.mxu0 0.0
    %2606 = vmatpush1.msra.mxu0 0.0
    %2607 = vmatprep.subr.mxu0 0.0
    %2608 = vmatpush1.msra.mxu0 0.0
    %2609 = vmatprep.subr.mxu0 0.0
    %2610 = vmatpush1.msra.mxu0 0.0
    %2611 = vmatprep.subr.mxu0 0.0
    %2612 = vmatpush1.msra.mxu0 0.0
    %2613 = vmatprep.subr.mxu0 0.0
    %2614 = vmatpush1.msra.mxu0 0.0
    %2615 = vmatprep.subr.mxu0 0.0
    %2616 = vmatpush1.msra.mxu0 0.0
    %2617 = vmatprep.subr.mxu0 0.0
    %2618 = vmatpush1.msra.mxu0 0.0
    %2619 = vmatprep.subr.mxu0 0.0
    %2620 = vmatpush1.msra.mxu0 0.0
    %2621 = vmatprep.subr.mxu0 0.0
    %2622 = vmatpush1.msra.mxu0 0.0
    %2623 = vmatprep.subr.mxu0 0.0
    %2624 = vmatpush1.msra.mxu0 0.0
    %2625 = vmatprep.subr.mxu0 0.0
    %2626 = vmatpush1.msra.mxu0 0.0
    %2627 = vmatprep.subr.mxu0 0.0
    %2628 = vmatpush1.msra.mxu0 0.0
    %2629 = vmatprep.subr.mxu0 0.0
    %2630 = vmatpush1.msra.mxu0 0.0
    %2631 = vmatprep.subr.mxu0 0.0
    %2632 = vmatpush1.msra.mxu0 0.0
    %2633 = vmatprep.subr.mxu0 0.0
    %2634 = vmatpush1.msra.mxu0 0.0
    %2635 = vmatprep.subr.mxu0 0.0
    %2636 = vmatpush1.msra.mxu0 0.0
    %2637 = vmatprep.subr.mxu0 0.0
    %2638 = vmatpush1.msra.mxu0 0.0
    %2639 = vmatprep.subr.mxu0 0.0
    %2640 = vmatpush1.msra.mxu0 0.0
    %2641 = vmatprep.subr.mxu0 0.0
    %2642 = vmatpush1.msra.mxu0 0.0
    %2643 = vmatprep.mubr.f32.mxu0 0.0
    %2644 = vmatmul.mubr.f32.gmra.mrb[0].mxu0 %v2577
    %v2645 = vpop.f32.mrb[0].mxu0
    %v2646 = vadd.f32 %v2572, %v2645
    %v2647 = vpop.f32.mrb[0].mxu0
    %2648 = vdwg.mxu0
    %v2649 = vmax.f32 %v2646, 0.0
    %v2650 = vld [vmem:[%s14] sm:$0xff]
    %v2651 = vld [vmem:[%s14 + $0x8] sm:$0xff]
    %v2652 = vld [vmem:[%s14 + $0x10] sm:$0xff]
    %v2653 = vld [vmem:[%s14 + $0x18] sm:$0xff]
    %v2654 = vld [vmem:[#allocation5] sm:$0x1]
    %v2656 = vlaneseq
    %v2657 = vshrl.u32 %v2656, 7
    %v2658 = vsub.s32 0, %v2657
    %v2659 = vrot.slane %v2654, %v2658
    %vm2661 = vcmask 261120
    %v2663 = vsel %vm2661, %v2649, 0
    %2665 = vmatprep.subr.mxu0 0.0
    %2666 = vmatpush1.msra.mxu0 %v2650
    %2667 = vmatprep.subr.mxu0 0.0
    %2668 = vmatpush1.msra.mxu0 %v2651
    %2669 = vmatprep.subr.mxu0 0.0
    %2670 = vmatpush1.msra.mxu0 %v2652
    %2671 = vmatprep.subr.mxu0 0.0
    %2672 = vmatpush1.msra.mxu0 %v2653
    %2673 = vmatprep.subr.mxu0 0.0
    %2674 = vmatpush1.msra.mxu0 0.0
    %2675 = vmatprep.subr.mxu0 0.0
    %2676 = vmatpush1.msra.mxu0 0.0
    %2677 = vmatprep.subr.mxu0 0.0
    %2678 = vmatpush1.msra.mxu0 0.0
    %2679 = vmatprep.subr.mxu0 0.0
    %2680 = vmatpush1.msra.mxu0 0.0
    %2681 = vmatprep.subr.mxu0 0.0
    %2682 = vmatpush1.msra.mxu0 0.0
    %2683 = vmatprep.subr.mxu0 0.0
    %2684 = vmatpush1.msra.mxu0 0.0
    %2685 = vmatprep.subr.mxu0 0.0
    %2686 = vmatpush1.msra.mxu0 0.0
    %2687 = vmatprep.subr.mxu0 0.0
    %2688 = vmatpush1.msra.mxu0 0.0
    %2689 = vmatprep.subr.mxu0 0.0
    %2690 = vmatpush1.msra.mxu0 0.0
    %2691 = vmatprep.subr.mxu0 0.0
    %2692 = vmatpush1.msra.mxu0 0.0
    %2693 = vmatprep.subr.mxu0 0.0
    %2694 = vmatpush1.msra.mxu0 0.0
    %2695 = vmatprep.subr.mxu0 0.0
    %2696 = vmatpush1.msra.mxu0 0.0
    %2697 = vmatprep.subr.mxu0 0.0
    %2698 = vmatpush1.msra.mxu0 0.0
    %2699 = vmatprep.subr.mxu0 0.0
    %2700 = vmatpush1.msra.mxu0 0.0
    %2701 = vmatprep.subr.mxu0 0.0
    %2702 = vmatpush1.msra.mxu0 0.0
    %2703 = vmatprep.subr.mxu0 0.0
    %2704 = vmatpush1.msra.mxu0 0.0
    %2705 = vmatprep.subr.mxu0 0.0
    %2706 = vmatpush1.msra.mxu0 0.0
    %2707 = vmatprep.subr.mxu0 0.0
    %2708 = vmatpush1.msra.mxu0 0.0
    %2709 = vmatprep.subr.mxu0 0.0
    %2710 = vmatpush1.msra.mxu0 0.0
    %2711 = vmatprep.subr.mxu0 0.0
    %2712 = vmatpush1.msra.mxu0 0.0
    %2713 = vmatprep.subr.mxu0 0.0
    %2714 = vmatpush1.msra.mxu0 0.0
    %2715 = vmatprep.subr.mxu0 0.0
    %2716 = vmatpush1.msra.mxu0 0.0
    %2717 = vmatprep.subr.mxu0 0.0
    %2718 = vmatpush1.msra.mxu0 0.0
    %2719 = vmatprep.subr.mxu0 0.0
    %2720 = vmatpush1.msra.mxu0 0.0
    %2721 = vmatprep.subr.mxu0 0.0
    %2722 = vmatpush1.msra.mxu0 0.0
    %2723 = vmatprep.subr.mxu0 0.0
    %2724 = vmatpush1.msra.mxu0 0.0
    %2725 = vmatprep.subr.mxu0 0.0
    %2726 = vmatpush1.msra.mxu0 0.0
    %2727 = vmatprep.subr.mxu0 0.0
    %2728 = vmatpush1.msra.mxu0 0.0
    %2729 = vmatprep.mubr.f32.mxu0 0.0
    %2730 = vmatmul.mubr.f32.gmra.mrb[0].mxu0 %v2663
    %v2731 = vpop.f32.mrb[0].mxu0
    %v2732 = vadd.f32 %v2659, %v2731
    %v2733 = vpop.f32.mrb[0].mxu0
    %2734 = vdwg.mxu0
    %vm2735 = vcmask 1024
    %2736 = vst.msk [vmem:[%s16] sm:$0x3] %vm2735, %v2732
    // Predicated region
    $region82: #{tpu_custom_call.1} parent=1 // pred_check
      _
    $region83: #{tpu_custom_call.1} parent=1 // pred_check_branch
      %2738 = sbr.rel (0) target = $region85
    $region84: #{tpu_custom_call.1} parent=1 // pred_region
      _
    $region85: #{tpu_custom_call.1} parent=1 // pred_fallthru
      _
    // Predicated region
    $region86: #{tpu_custom_call.1} parent=1 // pred_check
      _
    $region87: #{tpu_custom_call.1} parent=1 // pred_check_branch
      %2740 = sbr.rel (0) target = $region89
    $region88: #{tpu_custom_call.1} parent=1 // pred_region
      _
    $region89: #{tpu_custom_call.1} parent=1 // pred_fallthru
      _
    %2741 = vsyncpa [#allocation7], 1
    %2742 = vsyncpa [#allocation9], 1
    %2743 = vsyncpa [#allocation12], 1

</llo_original>
